<compile_context>
chip_gen: v7x
topology: tpu7x:2x2x1
jax: 0.10.0
libtpu: 0.0.40
codegen_flags: <defaults>
</compile_context>

<pallas_src>
import functools

import jax
import jax.numpy as jnp
from jax.experimental import pallas as pl
from jax.experimental.pallas import tpu as pltpu

# Layer widths of the reference PyTorch Net.
DIMS = [10, 64, 128, 256, 512, 256, 128, 64, 32, 16, 2]
NUM_LAYERS = len(DIMS) - 1  # 10
# Lane-dense padded widths: every width below 128 is zero-padded up to 128.
PDIMS = [max(d, 128) for d in DIMS]


def _round_up(n, m):
    return ((n + m - 1) // m) * m


def _choose_tiling(batch, target_tb=1024, chunk_rows=256):
    """Pick (tile_rows, num_tiles, num_chunks, padded_batch)."""
    bp = _round_up(batch, 16)                      # bf16 sublane packing
    num_tiles = -(-bp // target_tb)
    # v7x megacore: ensure the "parallel" batch axis has an even number (>=2) of
    # grid steps whenever there is enough work; harmless on v5e/v6e.
    if num_tiles == 1 and bp > 2 * chunk_rows:
        num_tiles = 2
    if num_tiles > 1 and num_tiles % 2 == 1:
        num_tiles += 1
    tb = -(-bp // num_tiles)                       # balanced tiles -> minimal padding
    # Independent in-kernel row chunks (~chunk_rows each, >=2 whenever possible).
    num_chunks = -(-tb // chunk_rows)
    if tb >= 32:
        num_chunks = max(2, num_chunks)
    num_chunks = min(num_chunks, max(1, tb // 16))
    tb = _round_up(tb, 16 * num_chunks)            # each chunk 16-row aligned
    return tb, num_tiles, num_chunks, tb * num_tiles


def mlp_kernel(x_ref, *refs, num_chunks, chunk):
    # refs = (w1, b1, w2, b2, ..., w10, b10, out_ref)
    w_refs = refs[0:2 * NUM_LAYERS:2]
    b_refs = refs[1:2 * NUM_LAYERS:2]
    out_ref = refs[-1]

    # Independent row-chunk streams: the fully unrolled per-layer chains carry no
    # cross-chunk dependency, so the LLO scheduler overlaps chunk c's VPU epilogue
    # (bias + ReLU + bf16 cast) with chunk c+1's MXU matmul of the same layer.
    hs = [x_ref[c * chunk:(c + 1) * chunk, :] for c in range(num_chunks)]
    for li in range(NUM_LAYERS):
        w = w_refs[li][...]                        # bf16 (pfin, pfout), VMEM-resident
        b = b_refs[li][...]                        # f32 (1, pfout), broadcast add
        accs = [jnp.dot(h, w, preferred_element_type=jnp.float32) + b for h in hs]
        if li < NUM_LAYERS - 1:
            # ReLU in f32 (v5e has no bf16 VPU); bf16 only at the layer boundary.
            hs = [jnp.maximum(a, 0.0).astype(jnp.bfloat16) for a in accs]
        else:
            for c in range(num_chunks):
                out_ref[c * chunk:(c + 1) * chunk, :] = accs[c].astype(out_ref.dtype)


def init_params(key):
    """Deterministic Kaiming-uniform-ish init (PyTorch nn.Linear default style).

    Weights stored as [fan_in, fan_out] (== W_pt.T), biases as (1, fan_out),
    both f32 master copies at the *real* (unpadded) widths.
    """
    params = []
    for li in range(NUM_LAYERS):
        fan_in, fan_out = DIMS[li], DIMS[li + 1]
        key, kw, kb = jax.random.split(key, 3)
        bound = 1.0 / jnp.sqrt(jnp.float32(fan_in))
        w = jax.random.uniform(kw, (fan_in, fan_out), jnp.float32, -bound, bound)
        b = jax.random.uniform(kb, (1, fan_out), jnp.float32, -bound, bound)
        params.append((w, b))
    return params


def prepare_params(params):
    """Cast weights to bf16, keep biases f32, zero-pad every width to PDIMS."""
    kparams = []
    for li, (w, b) in enumerate(params):
        fin, fout = DIMS[li], DIMS[li + 1]
        pfin, pfout = PDIMS[li], PDIMS[li + 1]
        wk = jnp.pad(w.astype(jnp.bfloat16), ((0, pfin - fin), (0, pfout - fout)))
        bk = jnp.pad(b.astype(jnp.float32), ((0, 0), (0, pfout - fout)))
        kparams.append((wk, bk))
    return kparams


def net_forward(x, params, *, target_tb=1024, out_dtype=jnp.float32):
    """x: (B, 10) f32/bf16. Returns (B, 2) in out_dtype (default f32)."""
    B, F = x.shape
    assert F == DIMS[0], (B, F)

    tb, num_tiles, num_chunks, Bp = _choose_tiling(B, target_tb)
    chunk = tb // num_chunks
    p_in, p_out = PDIMS[0], PDIMS[-1]

    # Pad batch to Bp rows and features 10 -> 128 (lane-dense), cast to bf16.
    xp = jnp.pad(x.astype(jnp.bfloat16), ((0, Bp - B), (0, p_in - F)))

    kparams = prepare_params(params)
    flat = [a for wb in kparams for a in wb]

    in_specs = [pl.BlockSpec((tb, p_in), lambda i: (i, 0))]
    for w, b in kparams:
        # Constant index_map -> each weight/bias is DMA'd once and stays
        # VMEM-resident across all batch tiles.
        in_specs.append(pl.BlockSpec(w.shape, lambda i: (0, 0)))
        in_specs.append(pl.BlockSpec(b.shape, lambda i: (0, 0)))
    out_specs = pl.BlockSpec((tb, p_out), lambda i: (i, 0))

    flops = 2 * Bp * sum(PDIMS[i] * PDIMS[i + 1] for i in range(NUM_LAYERS))
    bytes_accessed = (
        xp.size * xp.dtype.itemsize
        + sum(a.size * a.dtype.itemsize for a in flat)
        + Bp * p_out * jnp.dtype(out_dtype).itemsize
    )

    kernel = functools.partial(mlp_kernel, num_chunks=num_chunks, chunk=chunk)

    out = pl.pallas_call(
        kernel,
        out_shape=jax.ShapeDtypeStruct((Bp, p_out), out_dtype),
        grid=(num_tiles,),
        in_specs=in_specs,
        out_specs=out_specs,
        compiler_params=pltpu.CompilerParams(
            dimension_semantics=("parallel",),
            vmem_limit_bytes=48 * 1024 * 1024,
        ),
        cost_estimate=pl.CostEstimate(
            flops=flops, transcendentals=0, bytes_accessed=bytes_accessed),
    )(xp, *flat)

    return out[:B, :DIMS[-1]]


def net_forward_ref(x, params):
    """Pure-JAX reference mimicking the kernel's bf16 compute / f32 accum."""
    h = x.astype(jnp.bfloat16)
    out = None
    for li, (w, b) in enumerate(params):
        acc = jnp.dot(h, w.astype(jnp.bfloat16),
                      preferred_element_type=jnp.float32) + b[0, :]
        if li < NUM_LAYERS - 1:
            h = jnp.maximum(acc, 0.0).astype(jnp.bfloat16)
        else:
            out = acc
    return out


if __name__ == "__main__":
    key = jax.random.PRNGKey(0)
    key, kx = jax.random.split(key)
    # Odd batch size: exercises batch padding/slicing and the two-chunk interleave.
    B = 37
    x = jax.random.normal(kx, (B, DIMS[0]), jnp.float32)

    params = init_params(jax.random.PRNGKey(1))

    out = jax.block_until_ready(net_forward(x, params))
    ref = net_forward_ref(x, params)

    assert out.shape == (B, DIMS[-1]), out.shape
    # bf16 weights/activations (f32 accumulation) -> bf16-level tolerance vs the
    # matched bf16 JAX reference; not an f32-faithful check of the PyTorch model.
    assert jnp.allclose(out, ref, atol=1e-2, rtol=1e-2), (
        float(jnp.max(jnp.abs(out - ref))))

    print("KERNEL_OK")
</pallas_src>

<mosaic_0001>
module attributes {stable_mosaic.version = 11 : i64} {
  func.func @mlp_kernel(%arg0: i32, %arg1: memref<64x128xbf16, #tpu.memory_space<vmem>>, %arg2: memref<128x128xbf16, #tpu.memory_space<vmem>>, %arg3: memref<1x128xf32, #tpu.memory_space<vmem>>, %arg4: memref<128x128xbf16, #tpu.memory_space<vmem>>, %arg5: memref<1x128xf32, #tpu.memory_space<vmem>>, %arg6: memref<128x256xbf16, #tpu.memory_space<vmem>>, %arg7: memref<1x256xf32, #tpu.memory_space<vmem>>, %arg8: memref<256x512xbf16, #tpu.memory_space<vmem>>, %arg9: memref<1x512xf32, #tpu.memory_space<vmem>>, %arg10: memref<512x256xbf16, #tpu.memory_space<vmem>>, %arg11: memref<1x256xf32, #tpu.memory_space<vmem>>, %arg12: memref<256x128xbf16, #tpu.memory_space<vmem>>, %arg13: memref<1x128xf32, #tpu.memory_space<vmem>>, %arg14: memref<128x128xbf16, #tpu.memory_space<vmem>>, %arg15: memref<1x128xf32, #tpu.memory_space<vmem>>, %arg16: memref<128x128xbf16, #tpu.memory_space<vmem>>, %arg17: memref<1x128xf32, #tpu.memory_space<vmem>>, %arg18: memref<128x128xbf16, #tpu.memory_space<vmem>>, %arg19: memref<1x128xf32, #tpu.memory_space<vmem>>, %arg20: memref<128x128xbf16, #tpu.memory_space<vmem>>, %arg21: memref<1x128xf32, #tpu.memory_space<vmem>>, %arg22: memref<64x128xf32, #tpu.memory_space<vmem>>) attributes {dimension_semantics = [#tpu.dimension_semantics<parallel>], iteration_bounds = array<i64: 1>, scalar_prefetch = 0 : i64, scratch_operands = 0 : i64, tpu.core_type = #tpu.core_type<tc>, window_params = [{transform_indices = @transform_0, window_bounds = array<i64: 64, 128>}, {pipeline_mode = #tpu.pipeline_mode<synchronous>, transform_indices = @transform_1, window_bounds = array<i64: 128, 128>}, {pipeline_mode = #tpu.pipeline_mode<synchronous>, transform_indices = @transform_2, window_bounds = array<i64: 1, 128>}, {pipeline_mode = #tpu.pipeline_mode<synchronous>, transform_indices = @transform_3, window_bounds = array<i64: 128, 128>}, {pipeline_mode = #tpu.pipeline_mode<synchronous>, transform_indices = @transform_4, window_bounds = array<i64: 1, 128>}, {pipeline_mode = #tpu.pipeline_mode<synchronous>, transform_indices = @transform_5, window_bounds = array<i64: 128, 256>}, {pipeline_mode = #tpu.pipeline_mode<synchronous>, transform_indices = @transform_6, window_bounds = array<i64: 1, 256>}, {pipeline_mode = #tpu.pipeline_mode<synchronous>, transform_indices = @transform_7, window_bounds = array<i64: 256, 512>}, {pipeline_mode = #tpu.pipeline_mode<synchronous>, transform_indices = @transform_8, window_bounds = array<i64: 1, 512>}, {pipeline_mode = #tpu.pipeline_mode<synchronous>, transform_indices = @transform_9, window_bounds = array<i64: 512, 256>}, {pipeline_mode = #tpu.pipeline_mode<synchronous>, transform_indices = @transform_10, window_bounds = array<i64: 1, 256>}, {pipeline_mode = #tpu.pipeline_mode<synchronous>, transform_indices = @transform_11, window_bounds = array<i64: 256, 128>}, {pipeline_mode = #tpu.pipeline_mode<synchronous>, transform_indices = @transform_12, window_bounds = array<i64: 1, 128>}, {pipeline_mode = #tpu.pipeline_mode<synchronous>, transform_indices = @transform_13, window_bounds = array<i64: 128, 128>}, {pipeline_mode = #tpu.pipeline_mode<synchronous>, transform_indices = @transform_14, window_bounds = array<i64: 1, 128>}, {pipeline_mode = #tpu.pipeline_mode<synchronous>, transform_indices = @transform_15, window_bounds = array<i64: 128, 128>}, {pipeline_mode = #tpu.pipeline_mode<synchronous>, transform_indices = @transform_16, window_bounds = array<i64: 1, 128>}, {pipeline_mode = #tpu.pipeline_mode<synchronous>, transform_indices = @transform_17, window_bounds = array<i64: 128, 128>}, {pipeline_mode = #tpu.pipeline_mode<synchronous>, transform_indices = @transform_18, window_bounds = array<i64: 1, 128>}, {pipeline_mode = #tpu.pipeline_mode<synchronous>, transform_indices = @transform_19, window_bounds = array<i64: 128, 128>}, {pipeline_mode = #tpu.pipeline_mode<synchronous>, transform_indices = @transform_20, window_bounds = array<i64: 1, 128>}, {transform_indices = @transform_21, window_bounds = array<i64: 64, 128>}]} {
    %c0 = arith.constant 0 : index
    %c0_0 = arith.constant 0 : index
    %0 = vector.load %arg1[%c0, %c0_0] : memref<64x128xbf16, #tpu.memory_space<vmem>>, vector<32x128xbf16>
    %c32 = arith.constant 32 : index
    %c0_1 = arith.constant 0 : index
    %1 = vector.load %arg1[%c32, %c0_1] : memref<64x128xbf16, #tpu.memory_space<vmem>>, vector<32x128xbf16>
    %c0_2 = arith.constant 0 : index
    %c0_3 = arith.constant 0 : index
    %2 = vector.load %arg2[%c0_2, %c0_3] : memref<128x128xbf16, #tpu.memory_space<vmem>>, vector<128x128xbf16>
    %c0_4 = arith.constant 0 : index
    %c0_5 = arith.constant 0 : index
    %3 = vector.load %arg3[%c0_4, %c0_5] : memref<1x128xf32, #tpu.memory_space<vmem>>, vector<1x128xf32>
    %cst = arith.constant dense<0.000000e+00> : vector<32x128xf32>
    %4 = tpu.matmul %0, %2, %cst {dimension_numbers = #tpu.dot_dimension_numbers<[1], [0], [0], [1], [0, 0, 1, 1], [], []>} : vector<32x128xbf16>, vector<128x128xbf16>, vector<32x128xf32> -> vector<32x128xf32>
    %5 = vector.broadcast %3 : vector<1x128xf32> to vector<32x128xf32>
    %6 = arith.addf %4, %5 : vector<32x128xf32>
    %cst_6 = arith.constant dense<0.000000e+00> : vector<32x128xf32>
    %7 = tpu.matmul %1, %2, %cst_6 {dimension_numbers = #tpu.dot_dimension_numbers<[1], [0], [0], [1], [0, 0, 1, 1], [], []>} : vector<32x128xbf16>, vector<128x128xbf16>, vector<32x128xf32> -> vector<32x128xf32>
    %8 = vector.broadcast %3 : vector<1x128xf32> to vector<32x128xf32>
    %9 = arith.addf %7, %8 : vector<32x128xf32>
    %cst_7 = arith.constant 0.000000e+00 : f32
    %10 = vector.broadcast %cst_7 : f32 to vector<32x128xf32>
    %11 = arith.maximumf %6, %10 : vector<32x128xf32>
    %12 = arith.truncf %11 : vector<32x128xf32> to vector<32x128xbf16>
    %cst_8 = arith.constant 0.000000e+00 : f32
    %13 = vector.broadcast %cst_8 : f32 to vector<32x128xf32>
    %14 = arith.maximumf %9, %13 : vector<32x128xf32>
    %15 = arith.truncf %14 : vector<32x128xf32> to vector<32x128xbf16>
    %c0_9 = arith.constant 0 : index
    %c0_10 = arith.constant 0 : index
    %16 = vector.load %arg4[%c0_9, %c0_10] : memref<128x128xbf16, #tpu.memory_space<vmem>>, vector<128x128xbf16>
    %c0_11 = arith.constant 0 : index
    %c0_12 = arith.constant 0 : index
    %17 = vector.load %arg5[%c0_11, %c0_12] : memref<1x128xf32, #tpu.memory_space<vmem>>, vector<1x128xf32>
    %cst_13 = arith.constant dense<0.000000e+00> : vector<32x128xf32>
    %18 = tpu.matmul %12, %16, %cst_13 {dimension_numbers = #tpu.dot_dimension_numbers<[1], [0], [0], [1], [0, 0, 1, 1], [], []>} : vector<32x128xbf16>, vector<128x128xbf16>, vector<32x128xf32> -> vector<32x128xf32>
    %19 = vector.broadcast %17 : vector<1x128xf32> to vector<32x128xf32>
    %20 = arith.addf %18, %19 : vector<32x128xf32>
    %cst_14 = arith.constant dense<0.000000e+00> : vector<32x128xf32>
    %21 = tpu.matmul %15, %16, %cst_14 {dimension_numbers = #tpu.dot_dimension_numbers<[1], [0], [0], [1], [0, 0, 1, 1], [], []>} : vector<32x128xbf16>, vector<128x128xbf16>, vector<32x128xf32> -> vector<32x128xf32>
    %22 = vector.broadcast %17 : vector<1x128xf32> to vector<32x128xf32>
    %23 = arith.addf %21, %22 : vector<32x128xf32>
    %cst_15 = arith.constant 0.000000e+00 : f32
    %24 = vector.broadcast %cst_15 : f32 to vector<32x128xf32>
    %25 = arith.maximumf %20, %24 : vector<32x128xf32>
    %26 = arith.truncf %25 : vector<32x128xf32> to vector<32x128xbf16>
    %cst_16 = arith.constant 0.000000e+00 : f32
    %27 = vector.broadcast %cst_16 : f32 to vector<32x128xf32>
    %28 = arith.maximumf %23, %27 : vector<32x128xf32>
    %29 = arith.truncf %28 : vector<32x128xf32> to vector<32x128xbf16>
    %c0_17 = arith.constant 0 : index
    %c0_18 = arith.constant 0 : index
    %30 = vector.load %arg6[%c0_17, %c0_18] : memref<128x256xbf16, #tpu.memory_space<vmem>>, vector<128x256xbf16>
    %c0_19 = arith.constant 0 : index
    %c0_20 = arith.constant 0 : index
    %31 = vector.load %arg7[%c0_19, %c0_20] : memref<1x256xf32, #tpu.memory_space<vmem>>, vector<1x256xf32>
    %cst_21 = arith.constant dense<0.000000e+00> : vector<32x256xf32>
    %32 = tpu.matmul %26, %30, %cst_21 {dimension_numbers = #tpu.dot_dimension_numbers<[1], [0], [0], [1], [0, 0, 1, 1], [], []>} : vector<32x128xbf16>, vector<128x256xbf16>, vector<32x256xf32> -> vector<32x256xf32>
    %33 = vector.broadcast %31 : vector<1x256xf32> to vector<32x256xf32>
    %34 = arith.addf %32, %33 : vector<32x256xf32>
    %cst_22 = arith.constant dense<0.000000e+00> : vector<32x256xf32>
    %35 = tpu.matmul %29, %30, %cst_22 {dimension_numbers = #tpu.dot_dimension_numbers<[1], [0], [0], [1], [0, 0, 1, 1], [], []>} : vector<32x128xbf16>, vector<128x256xbf16>, vector<32x256xf32> -> vector<32x256xf32>
    %36 = vector.broadcast %31 : vector<1x256xf32> to vector<32x256xf32>
    %37 = arith.addf %35, %36 : vector<32x256xf32>
    %cst_23 = arith.constant 0.000000e+00 : f32
    %38 = vector.broadcast %cst_23 : f32 to vector<32x256xf32>
    %39 = arith.maximumf %34, %38 : vector<32x256xf32>
    %40 = arith.truncf %39 : vector<32x256xf32> to vector<32x256xbf16>
    %cst_24 = arith.constant 0.000000e+00 : f32
    %41 = vector.broadcast %cst_24 : f32 to vector<32x256xf32>
    %42 = arith.maximumf %37, %41 : vector<32x256xf32>
    %43 = arith.truncf %42 : vector<32x256xf32> to vector<32x256xbf16>
    %c0_25 = arith.constant 0 : index
    %c0_26 = arith.constant 0 : index
    %44 = vector.load %arg8[%c0_25, %c0_26] : memref<256x512xbf16, #tpu.memory_space<vmem>>, vector<256x512xbf16>
    %c0_27 = arith.constant 0 : index
    %c0_28 = arith.constant 0 : index
    %45 = vector.load %arg9[%c0_27, %c0_28] : memref<1x512xf32, #tpu.memory_space<vmem>>, vector<1x512xf32>
    %cst_29 = arith.constant dense<0.000000e+00> : vector<32x512xf32>
    %46 = tpu.matmul %40, %44, %cst_29 {dimension_numbers = #tpu.dot_dimension_numbers<[1], [0], [0], [1], [0, 0, 1, 1], [], []>} : vector<32x256xbf16>, vector<256x512xbf16>, vector<32x512xf32> -> vector<32x512xf32>
    %47 = vector.broadcast %45 : vector<1x512xf32> to vector<32x512xf32>
    %48 = arith.addf %46, %47 : vector<32x512xf32>
    %cst_30 = arith.constant dense<0.000000e+00> : vector<32x512xf32>
    %49 = tpu.matmul %43, %44, %cst_30 {dimension_numbers = #tpu.dot_dimension_numbers<[1], [0], [0], [1], [0, 0, 1, 1], [], []>} : vector<32x256xbf16>, vector<256x512xbf16>, vector<32x512xf32> -> vector<32x512xf32>
    %50 = vector.broadcast %45 : vector<1x512xf32> to vector<32x512xf32>
    %51 = arith.addf %49, %50 : vector<32x512xf32>
    %cst_31 = arith.constant 0.000000e+00 : f32
    %52 = vector.broadcast %cst_31 : f32 to vector<32x512xf32>
    %53 = arith.maximumf %48, %52 : vector<32x512xf32>
    %54 = arith.truncf %53 : vector<32x512xf32> to vector<32x512xbf16>
    %cst_32 = arith.constant 0.000000e+00 : f32
    %55 = vector.broadcast %cst_32 : f32 to vector<32x512xf32>
    %56 = arith.maximumf %51, %55 : vector<32x512xf32>
    %57 = arith.truncf %56 : vector<32x512xf32> to vector<32x512xbf16>
    %c0_33 = arith.constant 0 : index
    %c0_34 = arith.constant 0 : index
    %58 = vector.load %arg10[%c0_33, %c0_34] : memref<512x256xbf16, #tpu.memory_space<vmem>>, vector<512x256xbf16>
    %c0_35 = arith.constant 0 : index
    %c0_36 = arith.constant 0 : index
    %59 = vector.load %arg11[%c0_35, %c0_36] : memref<1x256xf32, #tpu.memory_space<vmem>>, vector<1x256xf32>
    %cst_37 = arith.constant dense<0.000000e+00> : vector<32x256xf32>
    %60 = tpu.matmul %54, %58, %cst_37 {dimension_numbers = #tpu.dot_dimension_numbers<[1], [0], [0], [1], [0, 0, 1, 1], [], []>} : vector<32x512xbf16>, vector<512x256xbf16>, vector<32x256xf32> -> vector<32x256xf32>
    %61 = vector.broadcast %59 : vector<1x256xf32> to vector<32x256xf32>
    %62 = arith.addf %60, %61 : vector<32x256xf32>
    %cst_38 = arith.constant dense<0.000000e+00> : vector<32x256xf32>
    %63 = tpu.matmul %57, %58, %cst_38 {dimension_numbers = #tpu.dot_dimension_numbers<[1], [0], [0], [1], [0, 0, 1, 1], [], []>} : vector<32x512xbf16>, vector<512x256xbf16>, vector<32x256xf32> -> vector<32x256xf32>
    %64 = vector.broadcast %59 : vector<1x256xf32> to vector<32x256xf32>
    %65 = arith.addf %63, %64 : vector<32x256xf32>
    %cst_39 = arith.constant 0.000000e+00 : f32
    %66 = vector.broadcast %cst_39 : f32 to vector<32x256xf32>
    %67 = arith.maximumf %62, %66 : vector<32x256xf32>
    %68 = arith.truncf %67 : vector<32x256xf32> to vector<32x256xbf16>
    %cst_40 = arith.constant 0.000000e+00 : f32
    %69 = vector.broadcast %cst_40 : f32 to vector<32x256xf32>
    %70 = arith.maximumf %65, %69 : vector<32x256xf32>
    %71 = arith.truncf %70 : vector<32x256xf32> to vector<32x256xbf16>
    %c0_41 = arith.constant 0 : index
    %c0_42 = arith.constant 0 : index
    %72 = vector.load %arg12[%c0_41, %c0_42] : memref<256x128xbf16, #tpu.memory_space<vmem>>, vector<256x128xbf16>
    %c0_43 = arith.constant 0 : index
    %c0_44 = arith.constant 0 : index
    %73 = vector.load %arg13[%c0_43, %c0_44] : memref<1x128xf32, #tpu.memory_space<vmem>>, vector<1x128xf32>
    %cst_45 = arith.constant dense<0.000000e+00> : vector<32x128xf32>
    %74 = tpu.matmul %68, %72, %cst_45 {dimension_numbers = #tpu.dot_dimension_numbers<[1], [0], [0], [1], [0, 0, 1, 1], [], []>} : vector<32x256xbf16>, vector<256x128xbf16>, vector<32x128xf32> -> vector<32x128xf32>
    %75 = vector.broadcast %73 : vector<1x128xf32> to vector<32x128xf32>
    %76 = arith.addf %74, %75 : vector<32x128xf32>
    %cst_46 = arith.constant dense<0.000000e+00> : vector<32x128xf32>
    %77 = tpu.matmul %71, %72, %cst_46 {dimension_numbers = #tpu.dot_dimension_numbers<[1], [0], [0], [1], [0, 0, 1, 1], [], []>} : vector<32x256xbf16>, vector<256x128xbf16>, vector<32x128xf32> -> vector<32x128xf32>
    %78 = vector.broadcast %73 : vector<1x128xf32> to vector<32x128xf32>
    %79 = arith.addf %77, %78 : vector<32x128xf32>
    %cst_47 = arith.constant 0.000000e+00 : f32
    %80 = vector.broadcast %cst_47 : f32 to vector<32x128xf32>
    %81 = arith.maximumf %76, %80 : vector<32x128xf32>
    %82 = arith.truncf %81 : vector<32x128xf32> to vector<32x128xbf16>
    %cst_48 = arith.constant 0.000000e+00 : f32
    %83 = vector.broadcast %cst_48 : f32 to vector<32x128xf32>
    %84 = arith.maximumf %79, %83 : vector<32x128xf32>
    %85 = arith.truncf %84 : vector<32x128xf32> to vector<32x128xbf16>
    %c0_49 = arith.constant 0 : index
    %c0_50 = arith.constant 0 : index
    %86 = vector.load %arg14[%c0_49, %c0_50] : memref<128x128xbf16, #tpu.memory_space<vmem>>, vector<128x128xbf16>
    %c0_51 = arith.constant 0 : index
    %c0_52 = arith.constant 0 : index
    %87 = vector.load %arg15[%c0_51, %c0_52] : memref<1x128xf32, #tpu.memory_space<vmem>>, vector<1x128xf32>
    %cst_53 = arith.constant dense<0.000000e+00> : vector<32x128xf32>
    %88 = tpu.matmul %82, %86, %cst_53 {dimension_numbers = #tpu.dot_dimension_numbers<[1], [0], [0], [1], [0, 0, 1, 1], [], []>} : vector<32x128xbf16>, vector<128x128xbf16>, vector<32x128xf32> -> vector<32x128xf32>
    %89 = vector.broadcast %87 : vector<1x128xf32> to vector<32x128xf32>
    %90 = arith.addf %88, %89 : vector<32x128xf32>
    %cst_54 = arith.constant dense<0.000000e+00> : vector<32x128xf32>
    %91 = tpu.matmul %85, %86, %cst_54 {dimension_numbers = #tpu.dot_dimension_numbers<[1], [0], [0], [1], [0, 0, 1, 1], [], []>} : vector<32x128xbf16>, vector<128x128xbf16>, vector<32x128xf32> -> vector<32x128xf32>
    %92 = vector.broadcast %87 : vector<1x128xf32> to vector<32x128xf32>
    %93 = arith.addf %91, %92 : vector<32x128xf32>
    %cst_55 = arith.constant 0.000000e+00 : f32
    %94 = vector.broadcast %cst_55 : f32 to vector<32x128xf32>
    %95 = arith.maximumf %90, %94 : vector<32x128xf32>
    %96 = arith.truncf %95 : vector<32x128xf32> to vector<32x128xbf16>
    %cst_56 = arith.constant 0.000000e+00 : f32
    %97 = vector.broadcast %cst_56 : f32 to vector<32x128xf32>
    %98 = arith.maximumf %93, %97 : vector<32x128xf32>
    %99 = arith.truncf %98 : vector<32x128xf32> to vector<32x128xbf16>
    %c0_57 = arith.constant 0 : index
    %c0_58 = arith.constant 0 : index
    %100 = vector.load %arg16[%c0_57, %c0_58] : memref<128x128xbf16, #tpu.memory_space<vmem>>, vector<128x128xbf16>
    %c0_59 = arith.constant 0 : index
    %c0_60 = arith.constant 0 : index
    %101 = vector.load %arg17[%c0_59, %c0_60] : memref<1x128xf32, #tpu.memory_space<vmem>>, vector<1x128xf32>
    %cst_61 = arith.constant dense<0.000000e+00> : vector<32x128xf32>
    %102 = tpu.matmul %96, %100, %cst_61 {dimension_numbers = #tpu.dot_dimension_numbers<[1], [0], [0], [1], [0, 0, 1, 1], [], []>} : vector<32x128xbf16>, vector<128x128xbf16>, vector<32x128xf32> -> vector<32x128xf32>
    %103 = vector.broadcast %101 : vector<1x128xf32> to vector<32x128xf32>
    %104 = arith.addf %102, %103 : vector<32x128xf32>
    %cst_62 = arith.constant dense<0.000000e+00> : vector<32x128xf32>
    %105 = tpu.matmul %99, %100, %cst_62 {dimension_numbers = #tpu.dot_dimension_numbers<[1], [0], [0], [1], [0, 0, 1, 1], [], []>} : vector<32x128xbf16>, vector<128x128xbf16>, vector<32x128xf32> -> vector<32x128xf32>
    %106 = vector.broadcast %101 : vector<1x128xf32> to vector<32x128xf32>
    %107 = arith.addf %105, %106 : vector<32x128xf32>
    %cst_63 = arith.constant 0.000000e+00 : f32
    %108 = vector.broadcast %cst_63 : f32 to vector<32x128xf32>
    %109 = arith.maximumf %104, %108 : vector<32x128xf32>
    %110 = arith.truncf %109 : vector<32x128xf32> to vector<32x128xbf16>
    %cst_64 = arith.constant 0.000000e+00 : f32
    %111 = vector.broadcast %cst_64 : f32 to vector<32x128xf32>
    %112 = arith.maximumf %107, %111 : vector<32x128xf32>
    %113 = arith.truncf %112 : vector<32x128xf32> to vector<32x128xbf16>
    %c0_65 = arith.constant 0 : index
    %c0_66 = arith.constant 0 : index
    %114 = vector.load %arg18[%c0_65, %c0_66] : memref<128x128xbf16, #tpu.memory_space<vmem>>, vector<128x128xbf16>
    %c0_67 = arith.constant 0 : index
    %c0_68 = arith.constant 0 : index
    %115 = vector.load %arg19[%c0_67, %c0_68] : memref<1x128xf32, #tpu.memory_space<vmem>>, vector<1x128xf32>
    %cst_69 = arith.constant dense<0.000000e+00> : vector<32x128xf32>
    %116 = tpu.matmul %110, %114, %cst_69 {dimension_numbers = #tpu.dot_dimension_numbers<[1], [0], [0], [1], [0, 0, 1, 1], [], []>} : vector<32x128xbf16>, vector<128x128xbf16>, vector<32x128xf32> -> vector<32x128xf32>
    %117 = vector.broadcast %115 : vector<1x128xf32> to vector<32x128xf32>
    %118 = arith.addf %116, %117 : vector<32x128xf32>
    %cst_70 = arith.constant dense<0.000000e+00> : vector<32x128xf32>
    %119 = tpu.matmul %113, %114, %cst_70 {dimension_numbers = #tpu.dot_dimension_numbers<[1], [0], [0], [1], [0, 0, 1, 1], [], []>} : vector<32x128xbf16>, vector<128x128xbf16>, vector<32x128xf32> -> vector<32x128xf32>
    %120 = vector.broadcast %115 : vector<1x128xf32> to vector<32x128xf32>
    %121 = arith.addf %119, %120 : vector<32x128xf32>
    %cst_71 = arith.constant 0.000000e+00 : f32
    %122 = vector.broadcast %cst_71 : f32 to vector<32x128xf32>
    %123 = arith.maximumf %118, %122 : vector<32x128xf32>
    %124 = arith.truncf %123 : vector<32x128xf32> to vector<32x128xbf16>
    %cst_72 = arith.constant 0.000000e+00 : f32
    %125 = vector.broadcast %cst_72 : f32 to vector<32x128xf32>
    %126 = arith.maximumf %121, %125 : vector<32x128xf32>
    %127 = arith.truncf %126 : vector<32x128xf32> to vector<32x128xbf16>
    %c0_73 = arith.constant 0 : index
    %c0_74 = arith.constant 0 : index
    %128 = vector.load %arg20[%c0_73, %c0_74] : memref<128x128xbf16, #tpu.memory_space<vmem>>, vector<128x128xbf16>
    %c0_75 = arith.constant 0 : index
    %c0_76 = arith.constant 0 : index
    %129 = vector.load %arg21[%c0_75, %c0_76] : memref<1x128xf32, #tpu.memory_space<vmem>>, vector<1x128xf32>
    %cst_77 = arith.constant dense<0.000000e+00> : vector<32x128xf32>
    %130 = tpu.matmul %124, %128, %cst_77 {dimension_numbers = #tpu.dot_dimension_numbers<[1], [0], [0], [1], [0, 0, 1, 1], [], []>} : vector<32x128xbf16>, vector<128x128xbf16>, vector<32x128xf32> -> vector<32x128xf32>
    %131 = vector.broadcast %129 : vector<1x128xf32> to vector<32x128xf32>
    %132 = arith.addf %130, %131 : vector<32x128xf32>
    %cst_78 = arith.constant dense<0.000000e+00> : vector<32x128xf32>
    %133 = tpu.matmul %127, %128, %cst_78 {dimension_numbers = #tpu.dot_dimension_numbers<[1], [0], [0], [1], [0, 0, 1, 1], [], []>} : vector<32x128xbf16>, vector<128x128xbf16>, vector<32x128xf32> -> vector<32x128xf32>
    %134 = vector.broadcast %129 : vector<1x128xf32> to vector<32x128xf32>
    %135 = arith.addf %133, %134 : vector<32x128xf32>
    %c0_79 = arith.constant 0 : index
    %c0_80 = arith.constant 0 : index
    %136 = vector.load %arg22[%c0_79, %c0_80] : memref<64x128xf32, #tpu.memory_space<vmem>>, vector<32x128xf32>
    tpu.vector_store %arg22[%c0_79, %c0_80], %132 {strides = array<i32>} : memref<64x128xf32, #tpu.memory_space<vmem>>, vector<32x128xf32>,
    %c32_81 = arith.constant 32 : index
    %c0_82 = arith.constant 0 : index
    %137 = vector.load %arg22[%c32_81, %c0_82] : memref<64x128xf32, #tpu.memory_space<vmem>>, vector<32x128xf32>
    tpu.vector_store %arg22[%c32_81, %c0_82], %135 {strides = array<i32>} : memref<64x128xf32, #tpu.memory_space<vmem>>, vector<32x128xf32>,
    return
  }
  func.func @transform_0(%arg0: i32) -> (i32, i32) {
    %c0_i32 = arith.constant 0 : i32
    %c0_i32_0 = arith.constant 0 : i32
    return %arg0, %c0_i32 : i32, i32
  }
  func.func @transform_1(%arg0: i32) -> (i32, i32) {
    %c0_i32 = arith.constant 0 : i32
    %c0_i32_0 = arith.constant 0 : i32
    %c0_i32_1 = arith.constant 0 : i32
    return %c0_i32, %c0_i32_0 : i32, i32
  }
  func.func @transform_2(%arg0: i32) -> (i32, i32) {
    %c0_i32 = arith.constant 0 : i32
    %c0_i32_0 = arith.constant 0 : i32
    %c0_i32_1 = arith.constant 0 : i32
    return %c0_i32, %c0_i32_0 : i32, i32
  }
  func.func @transform_3(%arg0: i32) -> (i32, i32) {
    %c0_i32 = arith.constant 0 : i32
    %c0_i32_0 = arith.constant 0 : i32
    %c0_i32_1 = arith.constant 0 : i32
    return %c0_i32, %c0_i32_0 : i32, i32
  }
  func.func @transform_4(%arg0: i32) -> (i32, i32) {
    %c0_i32 = arith.constant 0 : i32
    %c0_i32_0 = arith.constant 0 : i32
    %c0_i32_1 = arith.constant 0 : i32
    return %c0_i32, %c0_i32_0 : i32, i32
  }
  func.func @transform_5(%arg0: i32) -> (i32, i32) {
    %c0_i32 = arith.constant 0 : i32
    %c0_i32_0 = arith.constant 0 : i32
    %c0_i32_1 = arith.constant 0 : i32
    return %c0_i32, %c0_i32_0 : i32, i32
  }
  func.func @transform_6(%arg0: i32) -> (i32, i32) {
    %c0_i32 = arith.constant 0 : i32
    %c0_i32_0 = arith.constant 0 : i32
    %c0_i32_1 = arith.constant 0 : i32
    return %c0_i32, %c0_i32_0 : i32, i32
  }
  func.func @transform_7(%arg0: i32) -> (i32, i32) {
    %c0_i32 = arith.constant 0 : i32
    %c0_i32_0 = arith.constant 0 : i32
    %c0_i32_1 = arith.constant 0 : i32
    return %c0_i32, %c0_i32_0 : i32, i32
  }
  func.func @transform_8(%arg0: i32) -> (i32, i32) {
    %c0_i32 = arith.constant 0 : i32
    %c0_i32_0 = arith.constant 0 : i32
    %c0_i32_1 = arith.constant 0 : i32
    return %c0_i32, %c0_i32_0 : i32, i32
  }
  func.func @transform_9(%arg0: i32) -> (i32, i32) {
    %c0_i32 = arith.constant 0 : i32
    %c0_i32_0 = arith.constant 0 : i32
    %c0_i32_1 = arith.constant 0 : i32
    return %c0_i32, %c0_i32_0 : i32, i32
  }
  func.func @transform_10(%arg0: i32) -> (i32, i32) {
    %c0_i32 = arith.constant 0 : i32
    %c0_i32_0 = arith.constant 0 : i32
    %c0_i32_1 = arith.constant 0 : i32
    return %c0_i32, %c0_i32_0 : i32, i32
  }
  func.func @transform_11(%arg0: i32) -> (i32, i32) {
    %c0_i32 = arith.constant 0 : i32
    %c0_i32_0 = arith.constant 0 : i32
    %c0_i32_1 = arith.constant 0 : i32
    return %c0_i32, %c0_i32_0 : i32, i32
  }
  func.func @transform_12(%arg0: i32) -> (i32, i32) {
    %c0_i32 = arith.constant 0 : i32
    %c0_i32_0 = arith.constant 0 : i32
    %c0_i32_1 = arith.constant 0 : i32
    return %c0_i32, %c0_i32_0 : i32, i32
  }
  func.func @transform_13(%arg0: i32) -> (i32, i32) {
    %c0_i32 = arith.constant 0 : i32
    %c0_i32_0 = arith.constant 0 : i32
    %c0_i32_1 = arith.constant 0 : i32
    return %c0_i32, %c0_i32_0 : i32, i32
  }
  func.func @transform_14(%arg0: i32) -> (i32, i32) {
    %c0_i32 = arith.constant 0 : i32
    %c0_i32_0 = arith.constant 0 : i32
    %c0_i32_1 = arith.constant 0 : i32
    return %c0_i32, %c0_i32_0 : i32, i32
  }
  func.func @transform_15(%arg0: i32) -> (i32, i32) {
    %c0_i32 = arith.constant 0 : i32
    %c0_i32_0 = arith.constant 0 : i32
    %c0_i32_1 = arith.constant 0 : i32
    return %c0_i32, %c0_i32_0 : i32, i32
  }
  func.func @transform_16(%arg0: i32) -> (i32, i32) {
    %c0_i32 = arith.constant 0 : i32
    %c0_i32_0 = arith.constant 0 : i32
    %c0_i32_1 = arith.constant 0 : i32
    return %c0_i32, %c0_i32_0 : i32, i32
  }
  func.func @transform_17(%arg0: i32) -> (i32, i32) {
    %c0_i32 = arith.constant 0 : i32
    %c0_i32_0 = arith.constant 0 : i32
    %c0_i32_1 = arith.constant 0 : i32
    return %c0_i32, %c0_i32_0 : i32, i32
  }
  func.func @transform_18(%arg0: i32) -> (i32, i32) {
    %c0_i32 = arith.constant 0 : i32
    %c0_i32_0 = arith.constant 0 : i32
    %c0_i32_1 = arith.constant 0 : i32
    return %c0_i32, %c0_i32_0 : i32, i32
  }
  func.func @transform_19(%arg0: i32) -> (i32, i32) {
    %c0_i32 = arith.constant 0 : i32
    %c0_i32_0 = arith.constant 0 : i32
    %c0_i32_1 = arith.constant 0 : i32
    return %c0_i32, %c0_i32_0 : i32, i32
  }
  func.func @transform_20(%arg0: i32) -> (i32, i32) {
    %c0_i32 = arith.constant 0 : i32
    %c0_i32_0 = arith.constant 0 : i32
    %c0_i32_1 = arith.constant 0 : i32
    return %c0_i32, %c0_i32_0 : i32, i32
  }
  func.func @transform_21(%arg0: i32) -> (i32, i32) {
    %c0_i32 = arith.constant 0 : i32
    %c0_i32_0 = arith.constant 0 : i32
    return %arg0, %c0_i32 : i32, i32
  }
}

</mosaic_0001>

<llo_original>
// kernel: tpu_custom_call.1
$region0: #{tpu_custom_call.1}
  #allocation0 [shape = 'u32[]', space=smem, size = 0x4, offset = 0x4, fixed_abs, tag = 'smem constant byte address 0x4 - core index']
  #allocation1 [shape = 'u32[144,128]{1,0:T(1,128)}', space=vmem, size = 0x12000, scoped, tag = 'internal scratch']
  %s0 = inlined_call_operand.hbm [shape: bf16[64,128], index: 0, kind: input, shape index: {}]
  %s1 = inlined_call_operand.hbm [shape: bf16[128,128], index: 1, kind: input, shape index: {}]
  %s2 = inlined_call_operand.hbm [shape: f32[1,128], index: 2, kind: input, shape index: {}]
  %s3 = inlined_call_operand.hbm [shape: bf16[128,128], index: 3, kind: input, shape index: {}]
  %s4 = inlined_call_operand.hbm [shape: f32[1,128], index: 4, kind: input, shape index: {}]
  %s5 = inlined_call_operand.hbm [shape: bf16[128,256], index: 5, kind: input, shape index: {}]
  %s6 = inlined_call_operand.hbm [shape: f32[1,256], index: 6, kind: input, shape index: {}]
  %s7 = inlined_call_operand.hbm [shape: bf16[256,512], index: 7, kind: input, shape index: {}]
  %s8 = inlined_call_operand.hbm [shape: f32[1,512], index: 8, kind: input, shape index: {}]
  %s9 = inlined_call_operand.hbm [shape: bf16[512,256], index: 9, kind: input, shape index: {}]
  %s10 = inlined_call_operand.hbm [shape: f32[1,256], index: 10, kind: input, shape index: {}]
  %s11 = inlined_call_operand.hbm [shape: bf16[256,128], index: 11, kind: input, shape index: {}]
  %s12 = inlined_call_operand.hbm [shape: f32[1,128], index: 12, kind: input, shape index: {}]
  %s13 = inlined_call_operand.hbm [shape: bf16[128,128], index: 13, kind: input, shape index: {}]
  %s14 = inlined_call_operand.hbm [shape: f32[1,128], index: 14, kind: input, shape index: {}]
  %s15 = inlined_call_operand.hbm [shape: bf16[128,128], index: 15, kind: input, shape index: {}]
  %s16 = inlined_call_operand.hbm [shape: f32[1,128], index: 16, kind: input, shape index: {}]
  %s17 = inlined_call_operand.vmem [shape: bf16[128,128], index: 17, kind: input, shape index: {}]
  %s18 = inlined_call_operand.vmem [shape: f32[1,128], index: 18, kind: input, shape index: {}]
  %s19 = inlined_call_operand.hbm [shape: bf16[128,128], index: 19, kind: input, shape index: {}]
  %s20 = inlined_call_operand.vmem [shape: f32[1,128], index: 20, kind: input, shape index: {}]
  %s21 = inlined_call_operand.hbm [shape: f32[64,128], index: 21, kind: output, shape index: {}]
  %s22 = sld [smem:[#allocation0]]
  $region166: #{tpu_custom_call.1} parent=0
    _
  %s24 = ssub.s32 1, %s22
  %s25 = scalar_select 0, %s24, %s22
  $region1: #{tpu_custom_call.1} parent=0
    #allocation2 [shape = 'u8[16384]{0}', space=vmem, size = 0x4000, scoped, tag = 'input window, operand 0, single buffered']
    #allocation3 [shape = 's32[1]{0}', space=sflag, size = 0x4, scoped, tag = 'scoped memory for tpu_custom_call.1']
    #allocation4 [shape = 's32[1]{0}', space=sflag, size = 0x4, scoped, tag = 'scoped memory for tpu_custom_call.1']
    #allocation5 [shape = 'u8[32768]{0}', space=vmem, size = 0x8000, scoped, tag = 'input window, operand 1, single buffered']
    #allocation6 [shape = 's32[1]{0}', space=sflag, size = 0x4, scoped, tag = 'scoped memory for tpu_custom_call.1']
    #allocation7 [shape = 'u8[512]{0}', space=vmem, size = 0x400, scoped, tag = 'input window, operand 2, single buffered']
    #allocation8 [shape = 'u8[32768]{0}', space=vmem, size = 0x8000, scoped, tag = 'input window, operand 3, single buffered']
    #allocation9 [shape = 's32[1]{0}', space=sflag, size = 0x4, scoped, tag = 'scoped memory for tpu_custom_call.1']
    #allocation10 [shape = 'u8[512]{0}', space=vmem, size = 0x400, scoped, tag = 'input window, operand 4, single buffered']
    #allocation11 [shape = 'u8[65536]{0}', space=vmem, size = 0x10000, scoped, tag = 'input window, operand 5, single buffered']
    #allocation12 [shape = 's32[1]{0}', space=sflag, size = 0x4, scoped, tag = 'scoped memory for tpu_custom_call.1']
    #allocation13 [shape = 'u8[1024]{0}', space=vmem, size = 0x400, scoped, tag = 'input window, operand 6, single buffered']
    #allocation14 [shape = 'u8[262144]{0}', space=vmem, size = 0x40000, scoped, tag = 'input window, operand 7, single buffered']
    #allocation15 [shape = 's32[1]{0}', space=sflag, size = 0x4, scoped, tag = 'scoped memory for tpu_custom_call.1']
    #allocation16 [shape = 'u8[2048]{0}', space=vmem, size = 0x800, scoped, tag = 'input window, operand 8, single buffered']
    #allocation17 [shape = 'u8[262144]{0}', space=vmem, size = 0x40000, scoped, tag = 'input window, operand 9, single buffered']
    #allocation18 [shape = 's32[1]{0}', space=sflag, size = 0x4, scoped, tag = 'scoped memory for tpu_custom_call.1']
    #allocation19 [shape = 'u8[1024]{0}', space=vmem, size = 0x400, scoped, tag = 'input window, operand 10, single buffered']
    #allocation20 [shape = 'u8[65536]{0}', space=vmem, size = 0x10000, scoped, tag = 'input window, operand 11, single buffered']
    #allocation21 [shape = 's32[1]{0}', space=sflag, size = 0x4, scoped, tag = 'scoped memory for tpu_custom_call.1']
    #allocation22 [shape = 'u8[512]{0}', space=vmem, size = 0x400, scoped, tag = 'input window, operand 12, single buffered']
    #allocation23 [shape = 'u8[32768]{0}', space=vmem, size = 0x8000, scoped, tag = 'input window, operand 13, single buffered']
    #allocation24 [shape = 's32[1]{0}', space=sflag, size = 0x4, scoped, tag = 'scoped memory for tpu_custom_call.1']
    #allocation25 [shape = 'u8[512]{0}', space=vmem, size = 0x400, scoped, tag = 'input window, operand 14, single buffered']
    #allocation26 [shape = 'u8[32768]{0}', space=vmem, size = 0x8000, scoped, tag = 'input window, operand 15, single buffered']
    #allocation27 [shape = 's32[1]{0}', space=sflag, size = 0x4, scoped, tag = 'scoped memory for tpu_custom_call.1']
    #allocation28 [shape = 'u8[512]{0}', space=vmem, size = 0x400, scoped, tag = 'input window, operand 16, single buffered']
    #allocation29 [shape = 'u8[32768]{0}', space=vmem, size = 0x8000, scoped, tag = 'input window, operand 19, single buffered']
    #allocation30 [shape = 's32[1]{0}', space=sflag, size = 0x4, scoped, tag = 'scoped memory for tpu_custom_call.1']
    #allocation31 [shape = 'u8[32768]{0}', space=vmem, size = 0x8000, scoped, tag = 'output window, operand 0, single buffered']
    %26 = vsyncpa [#allocation3], 0
    %27 = vsyncpa [#allocation6], 0
    %28 = vsyncpa [#allocation9], 0
    %29 = vsyncpa [#allocation12], 0
    %30 = vsyncpa [#allocation15], 0
    %31 = vsyncpa [#allocation18], 0
    %32 = vsyncpa [#allocation21], 0
    %33 = vsyncpa [#allocation24], 0
    %34 = vsyncpa [#allocation27], 0
    %35 = vsyncpa [#allocation30], 0
    %36 = vsyncpa [#allocation4], 0
    // Predicated region
    $region2: #{tpu_custom_call.1} parent=1 // pred_check
      _
    $region3: #{tpu_custom_call.1} parent=1 // pred_check_branch
      %38 = sbr.rel (0) target = $region5
    $region4: #{tpu_custom_call.1} parent=1 // pred_region
      %s40 = ssub.s32 512, 512
      %41 = vsyncadd [#allocation3], %s40
      %s42 = sshll.u32 [#allocation2], 4
      %s43 = int_to_ptr.vmem [resolvable:$true] %s42
      %48 = dma.hbm_to_vmem [thread:$0]  %s0, 512, %s43, [#allocation3], 64, 64, 4
    $region5: #{tpu_custom_call.1} parent=1 // pred_fallthru
      _
    // Predicated region
    $region6: #{tpu_custom_call.1} parent=1 // pred_check
      _
    $region7: #{tpu_custom_call.1} parent=1 // pred_check_branch
      %50 = sbr.rel (0) target = $region9
    $region8: #{tpu_custom_call.1} parent=1 // pred_region
      %s52 = ssub.s32 1024, 1024
      %53 = vsyncadd [#allocation6], %s52
      %s54 = sshll.u32 [#allocation5], 4
      %s55 = int_to_ptr.vmem [resolvable:$true] %s54
      %60 = dma.hbm_to_vmem [thread:$0]  %s1, 1024, %s55, [#allocation6], 64, 64, 4
    $region9: #{tpu_custom_call.1} parent=1 // pred_fallthru
      _
    // Predicated region
    $region10: #{tpu_custom_call.1} parent=1 // pred_check
      _
    $region11: #{tpu_custom_call.1} parent=1 // pred_check_branch
      %62 = sbr.rel (0) target = $region13
    $region12: #{tpu_custom_call.1} parent=1 // pred_region
      %s64 = ssub.s32 16, 16
      %65 = vsyncadd [#allocation6], %s64
      %s67 = sshll.u32 [#allocation7], 4
      %s68 = int_to_ptr.vmem [resolvable:$true] %s67
      %70 = dma.hbm_to_vmem [thread:$0]  %s2, 16, %s68, [#allocation6]
    $region13: #{tpu_custom_call.1} parent=1 // pred_fallthru
      _
    // Predicated region
    $region14: #{tpu_custom_call.1} parent=1 // pred_check
      _
    $region15: #{tpu_custom_call.1} parent=1 // pred_check_branch
      %72 = sbr.rel (0) target = $region17
    $region16: #{tpu_custom_call.1} parent=1 // pred_region
      %s74 = ssub.s32 1024, 1024
      %75 = vsyncadd [#allocation9], %s74
      %s76 = sshll.u32 [#allocation8], 4
      %s77 = int_to_ptr.vmem [resolvable:$true] %s76
      %82 = dma.hbm_to_vmem [thread:$0]  %s3, 1024, %s77, [#allocation9], 64, 64, 4
    $region17: #{tpu_custom_call.1} parent=1 // pred_fallthru
      _
    // Predicated region
    $region18: #{tpu_custom_call.1} parent=1 // pred_check
      _
    $region19: #{tpu_custom_call.1} parent=1 // pred_check_branch
      %84 = sbr.rel (0) target = $region21
    $region20: #{tpu_custom_call.1} parent=1 // pred_region
      %s86 = ssub.s32 16, 16
      %87 = vsyncadd [#allocation9], %s86
      %s89 = sshll.u32 [#allocation10], 4
      %s90 = int_to_ptr.vmem [resolvable:$true] %s89
      %92 = dma.hbm_to_vmem [thread:$0]  %s4, 16, %s90, [#allocation9]
    $region21: #{tpu_custom_call.1} parent=1 // pred_fallthru
      _
    // Predicated region
    $region22: #{tpu_custom_call.1} parent=1 // pred_check
      _
    $region23: #{tpu_custom_call.1} parent=1 // pred_check_branch
      %94 = sbr.rel (0) target = $region25
    $region24: #{tpu_custom_call.1} parent=1 // pred_region
      %s96 = ssub.s32 2048, 2048
      %97 = vsyncadd [#allocation12], %s96
      %s98 = sshll.u32 [#allocation11], 4
      %s99 = int_to_ptr.vmem [resolvable:$true] %s98
      %104 = dma.hbm_to_vmem [thread:$0]  %s5, 2048, %s99, [#allocation12], 128, 128, 8
    $region25: #{tpu_custom_call.1} parent=1 // pred_fallthru
      _
    // Predicated region
    $region26: #{tpu_custom_call.1} parent=1 // pred_check
      _
    $region27: #{tpu_custom_call.1} parent=1 // pred_check_branch
      %106 = sbr.rel (0) target = $region29
    $region28: #{tpu_custom_call.1} parent=1 // pred_region
      %s108 = ssub.s32 32, 32
      %109 = vsyncadd [#allocation12], %s108
      %s111 = sshll.u32 [#allocation13], 4
      %s112 = int_to_ptr.vmem [resolvable:$true] %s111
      %114 = dma.hbm_to_vmem [thread:$0]  %s6, 32, %s112, [#allocation12]
    $region29: #{tpu_custom_call.1} parent=1 // pred_fallthru
      _
    // Predicated region
    $region30: #{tpu_custom_call.1} parent=1 // pred_check
      _
    $region31: #{tpu_custom_call.1} parent=1 // pred_check_branch
      %116 = sbr.rel (0) target = $region33
    $region32: #{tpu_custom_call.1} parent=1 // pred_region
      %s118 = ssub.s32 8192, 8192
      %119 = vsyncadd [#allocation15], %s118
      %s120 = sshll.u32 [#allocation14], 4
      %s121 = int_to_ptr.vmem [resolvable:$true] %s120
      %126 = dma.hbm_to_vmem [thread:$0]  %s7, 8192, %s121, [#allocation15], 256, 256, 16
    $region33: #{tpu_custom_call.1} parent=1 // pred_fallthru
      _
    // Predicated region
    $region34: #{tpu_custom_call.1} parent=1 // pred_check
      _
    $region35: #{tpu_custom_call.1} parent=1 // pred_check_branch
      %128 = sbr.rel (0) target = $region37
    $region36: #{tpu_custom_call.1} parent=1 // pred_region
      %s130 = ssub.s32 64, 64
      %131 = vsyncadd [#allocation15], %s130
      %s133 = sshll.u32 [#allocation16], 4
      %s134 = int_to_ptr.vmem [resolvable:$true] %s133
      %136 = dma.hbm_to_vmem [thread:$0]  %s8, 64, %s134, [#allocation15]
    $region37: #{tpu_custom_call.1} parent=1 // pred_fallthru
      _
    // Predicated region
    $region38: #{tpu_custom_call.1} parent=1 // pred_check
      _
    $region39: #{tpu_custom_call.1} parent=1 // pred_check_branch
      %138 = sbr.rel (0) target = $region41
    $region40: #{tpu_custom_call.1} parent=1 // pred_region
      %s140 = ssub.s32 8192, 8192
      %141 = vsyncadd [#allocation18], %s140
      %s142 = sshll.u32 [#allocation17], 4
      %s143 = int_to_ptr.vmem [resolvable:$true] %s142
      %148 = dma.hbm_to_vmem [thread:$0]  %s9, 8192, %s143, [#allocation18], 128, 128, 8
    $region41: #{tpu_custom_call.1} parent=1 // pred_fallthru
      _
    // Predicated region
    $region42: #{tpu_custom_call.1} parent=1 // pred_check
      _
    $region43: #{tpu_custom_call.1} parent=1 // pred_check_branch
      %150 = sbr.rel (0) target = $region45
    $region44: #{tpu_custom_call.1} parent=1 // pred_region
      %s152 = ssub.s32 32, 32
      %153 = vsyncadd [#allocation18], %s152
      %s155 = sshll.u32 [#allocation19], 4
      %s156 = int_to_ptr.vmem [resolvable:$true] %s155
      %158 = dma.hbm_to_vmem [thread:$0]  %s10, 32, %s156, [#allocation18]
    $region45: #{tpu_custom_call.1} parent=1 // pred_fallthru
      _
    // Predicated region
    $region46: #{tpu_custom_call.1} parent=1 // pred_check
      _
    $region47: #{tpu_custom_call.1} parent=1 // pred_check_branch
      %160 = sbr.rel (0) target = $region49
    $region48: #{tpu_custom_call.1} parent=1 // pred_region
      %s162 = ssub.s32 2048, 2048
      %163 = vsyncadd [#allocation21], %s162
      %s164 = sshll.u32 [#allocation20], 4
      %s165 = int_to_ptr.vmem [resolvable:$true] %s164
      %170 = dma.hbm_to_vmem [thread:$0]  %s11, 2048, %s165, [#allocation21], 64, 64, 4
    $region49: #{tpu_custom_call.1} parent=1 // pred_fallthru
      _
    // Predicated region
    $region50: #{tpu_custom_call.1} parent=1 // pred_check
      _
    $region51: #{tpu_custom_call.1} parent=1 // pred_check_branch
      %172 = sbr.rel (0) target = $region53
    $region52: #{tpu_custom_call.1} parent=1 // pred_region
      %s174 = ssub.s32 16, 16
      %175 = vsyncadd [#allocation21], %s174
      %s177 = sshll.u32 [#allocation22], 4
      %s178 = int_to_ptr.vmem [resolvable:$true] %s177
      %180 = dma.hbm_to_vmem [thread:$0]  %s12, 16, %s178, [#allocation21]
    $region53: #{tpu_custom_call.1} parent=1 // pred_fallthru
      _
    // Predicated region
    $region54: #{tpu_custom_call.1} parent=1 // pred_check
      _
    $region55: #{tpu_custom_call.1} parent=1 // pred_check_branch
      %182 = sbr.rel (0) target = $region57
    $region56: #{tpu_custom_call.1} parent=1 // pred_region
      %s184 = ssub.s32 1024, 1024
      %185 = vsyncadd [#allocation24], %s184
      %s186 = sshll.u32 [#allocation23], 4
      %s187 = int_to_ptr.vmem [resolvable:$true] %s186
      %192 = dma.hbm_to_vmem [thread:$0]  %s13, 1024, %s187, [#allocation24], 64, 64, 4
    $region57: #{tpu_custom_call.1} parent=1 // pred_fallthru
      _
    // Predicated region
    $region58: #{tpu_custom_call.1} parent=1 // pred_check
      _
    $region59: #{tpu_custom_call.1} parent=1 // pred_check_branch
      %194 = sbr.rel (0) target = $region61
    $region60: #{tpu_custom_call.1} parent=1 // pred_region
      %s196 = ssub.s32 16, 16
      %197 = vsyncadd [#allocation24], %s196
      %s199 = sshll.u32 [#allocation25], 4
      %s200 = int_to_ptr.vmem [resolvable:$true] %s199
      %202 = dma.hbm_to_vmem [thread:$0]  %s14, 16, %s200, [#allocation24]
    $region61: #{tpu_custom_call.1} parent=1 // pred_fallthru
      _
    // Predicated region
    $region62: #{tpu_custom_call.1} parent=1 // pred_check
      _
    $region63: #{tpu_custom_call.1} parent=1 // pred_check_branch
      %204 = sbr.rel (0) target = $region65
    $region64: #{tpu_custom_call.1} parent=1 // pred_region
      %s206 = ssub.s32 1024, 1024
      %207 = vsyncadd [#allocation27], %s206
      %s208 = sshll.u32 [#allocation26], 4
      %s209 = int_to_ptr.vmem [resolvable:$true] %s208
      %214 = dma.hbm_to_vmem [thread:$0]  %s15, 1024, %s209, [#allocation27], 64, 64, 4
    $region65: #{tpu_custom_call.1} parent=1 // pred_fallthru
      _
    // Predicated region
    $region66: #{tpu_custom_call.1} parent=1 // pred_check
      _
    $region67: #{tpu_custom_call.1} parent=1 // pred_check_branch
      %216 = sbr.rel (0) target = $region69
    $region68: #{tpu_custom_call.1} parent=1 // pred_region
      %s218 = ssub.s32 16, 16
      %219 = vsyncadd [#allocation27], %s218
      %s221 = sshll.u32 [#allocation28], 4
      %s222 = int_to_ptr.vmem [resolvable:$true] %s221
      %224 = dma.hbm_to_vmem [thread:$0]  %s16, 16, %s222, [#allocation27]
    $region69: #{tpu_custom_call.1} parent=1 // pred_fallthru
      _
    // Predicated region
    $region70: #{tpu_custom_call.1} parent=1 // pred_check
      _
    $region71: #{tpu_custom_call.1} parent=1 // pred_check_branch
      %226 = sbr.rel (0) target = $region73
    $region72: #{tpu_custom_call.1} parent=1 // pred_region
      _
    $region73: #{tpu_custom_call.1} parent=1 // pred_fallthru
      _
    // Predicated region
    $region74: #{tpu_custom_call.1} parent=1 // pred_check
      _
    $region75: #{tpu_custom_call.1} parent=1 // pred_check_branch
      %228 = sbr.rel (0) target = $region77
    $region76: #{tpu_custom_call.1} parent=1 // pred_region
      _
    $region77: #{tpu_custom_call.1} parent=1 // pred_fallthru
      _
    // Predicated region
    $region78: #{tpu_custom_call.1} parent=1 // pred_check
      _
    $region79: #{tpu_custom_call.1} parent=1 // pred_check_branch
      %230 = sbr.rel (0) target = $region81
    $region80: #{tpu_custom_call.1} parent=1 // pred_region
      %s232 = ssub.s32 1024, 1024
      %233 = vsyncadd [#allocation30], %s232
      %s234 = sshll.u32 [#allocation29], 4
      %s235 = int_to_ptr.vmem [resolvable:$true] %s234
      %240 = dma.hbm_to_vmem [thread:$0]  %s19, 1024, %s235, [#allocation30], 64, 64, 4
    $region81: #{tpu_custom_call.1} parent=1 // pred_fallthru
      _
    // Predicated region
    $region82: #{tpu_custom_call.1} parent=1 // pred_check
      _
    $region83: #{tpu_custom_call.1} parent=1 // pred_check_branch
      %242 = sbr.rel (0) target = $region85
    $region84: #{tpu_custom_call.1} parent=1 // pred_region
      _
    $region85: #{tpu_custom_call.1} parent=1 // pred_fallthru
      _
    // Predicated region
    $region86: #{tpu_custom_call.1} parent=1 // pred_check
      _
    $region87: #{tpu_custom_call.1} parent=1 // pred_check_branch
      %244 = sbr.rel (0) target = $region89
    $region88: #{tpu_custom_call.1} parent=1 // pred_region
      %245 = dma.done [#allocation3], 512
    $region89: #{tpu_custom_call.1} parent=1 // pred_fallthru
      _
    // Predicated region
    $region90: #{tpu_custom_call.1} parent=1 // pred_check
      _
    $region91: #{tpu_custom_call.1} parent=1 // pred_check_branch
      %247 = sbr.rel (0) target = $region93
    $region92: #{tpu_custom_call.1} parent=1 // pred_region
      %248 = dma.done [#allocation6], 1024
    $region93: #{tpu_custom_call.1} parent=1 // pred_fallthru
      _
    // Predicated region
    $region94: #{tpu_custom_call.1} parent=1 // pred_check
      _
    $region95: #{tpu_custom_call.1} parent=1 // pred_check_branch
      %250 = sbr.rel (0) target = $region97
    $region96: #{tpu_custom_call.1} parent=1 // pred_region
      %251 = dma.done [#allocation6], 16
    $region97: #{tpu_custom_call.1} parent=1 // pred_fallthru
      _
    // Predicated region
    $region98: #{tpu_custom_call.1} parent=1 // pred_check
      _
    $region99: #{tpu_custom_call.1} parent=1 // pred_check_branch
      %253 = sbr.rel (0) target = $region101
    $region100: #{tpu_custom_call.1} parent=1 // pred_region
      %254 = dma.done [#allocation9], 1024
    $region101: #{tpu_custom_call.1} parent=1 // pred_fallthru
      _
    // Predicated region
    $region102: #{tpu_custom_call.1} parent=1 // pred_check
      _
    $region103: #{tpu_custom_call.1} parent=1 // pred_check_branch
      %256 = sbr.rel (0) target = $region105
    $region104: #{tpu_custom_call.1} parent=1 // pred_region
      %257 = dma.done [#allocation9], 16
    $region105: #{tpu_custom_call.1} parent=1 // pred_fallthru
      _
    // Predicated region
    $region106: #{tpu_custom_call.1} parent=1 // pred_check
      _
    $region107: #{tpu_custom_call.1} parent=1 // pred_check_branch
      %259 = sbr.rel (0) target = $region109
    $region108: #{tpu_custom_call.1} parent=1 // pred_region
      %260 = dma.done [#allocation12], 2048
    $region109: #{tpu_custom_call.1} parent=1 // pred_fallthru
      _
    // Predicated region
    $region110: #{tpu_custom_call.1} parent=1 // pred_check
      _
    $region111: #{tpu_custom_call.1} parent=1 // pred_check_branch
      %262 = sbr.rel (0) target = $region113
    $region112: #{tpu_custom_call.1} parent=1 // pred_region
      %263 = dma.done [#allocation12], 32
    $region113: #{tpu_custom_call.1} parent=1 // pred_fallthru
      _
    // Predicated region
    $region114: #{tpu_custom_call.1} parent=1 // pred_check
      _
    $region115: #{tpu_custom_call.1} parent=1 // pred_check_branch
      %265 = sbr.rel (0) target = $region117
    $region116: #{tpu_custom_call.1} parent=1 // pred_region
      %266 = dma.done [#allocation15], 8192
    $region117: #{tpu_custom_call.1} parent=1 // pred_fallthru
      _
    // Predicated region
    $region118: #{tpu_custom_call.1} parent=1 // pred_check
      _
    $region119: #{tpu_custom_call.1} parent=1 // pred_check_branch
      %268 = sbr.rel (0) target = $region121
    $region120: #{tpu_custom_call.1} parent=1 // pred_region
      %269 = dma.done [#allocation15], 64
    $region121: #{tpu_custom_call.1} parent=1 // pred_fallthru
      _
    // Predicated region
    $region122: #{tpu_custom_call.1} parent=1 // pred_check
      _
    $region123: #{tpu_custom_call.1} parent=1 // pred_check_branch
      %271 = sbr.rel (0) target = $region125
    $region124: #{tpu_custom_call.1} parent=1 // pred_region
      %272 = dma.done [#allocation18], 8192
    $region125: #{tpu_custom_call.1} parent=1 // pred_fallthru
      _
    // Predicated region
    $region126: #{tpu_custom_call.1} parent=1 // pred_check
      _
    $region127: #{tpu_custom_call.1} parent=1 // pred_check_branch
      %274 = sbr.rel (0) target = $region129
    $region128: #{tpu_custom_call.1} parent=1 // pred_region
      %275 = dma.done [#allocation18], 32
    $region129: #{tpu_custom_call.1} parent=1 // pred_fallthru
      _
    // Predicated region
    $region130: #{tpu_custom_call.1} parent=1 // pred_check
      _
    $region131: #{tpu_custom_call.1} parent=1 // pred_check_branch
      %277 = sbr.rel (0) target = $region133
    $region132: #{tpu_custom_call.1} parent=1 // pred_region
      %278 = dma.done [#allocation21], 2048
    $region133: #{tpu_custom_call.1} parent=1 // pred_fallthru
      _
    // Predicated region
    $region134: #{tpu_custom_call.1} parent=1 // pred_check
      _
    $region135: #{tpu_custom_call.1} parent=1 // pred_check_branch
      %280 = sbr.rel (0) target = $region137
    $region136: #{tpu_custom_call.1} parent=1 // pred_region
      %281 = dma.done [#allocation21], 16
    $region137: #{tpu_custom_call.1} parent=1 // pred_fallthru
      _
    // Predicated region
    $region138: #{tpu_custom_call.1} parent=1 // pred_check
      _
    $region139: #{tpu_custom_call.1} parent=1 // pred_check_branch
      %283 = sbr.rel (0) target = $region141
    $region140: #{tpu_custom_call.1} parent=1 // pred_region
      %284 = dma.done [#allocation24], 1024
    $region141: #{tpu_custom_call.1} parent=1 // pred_fallthru
      _
    // Predicated region
    $region142: #{tpu_custom_call.1} parent=1 // pred_check
      _
    $region143: #{tpu_custom_call.1} parent=1 // pred_check_branch
      %286 = sbr.rel (0) target = $region145
    $region144: #{tpu_custom_call.1} parent=1 // pred_region
      %287 = dma.done [#allocation24], 16
    $region145: #{tpu_custom_call.1} parent=1 // pred_fallthru
      _
    // Predicated region
    $region146: #{tpu_custom_call.1} parent=1 // pred_check
      _
    $region147: #{tpu_custom_call.1} parent=1 // pred_check_branch
      %289 = sbr.rel (0) target = $region149
    $region148: #{tpu_custom_call.1} parent=1 // pred_region
      %290 = dma.done [#allocation27], 1024
    $region149: #{tpu_custom_call.1} parent=1 // pred_fallthru
      _
    // Predicated region
    $region150: #{tpu_custom_call.1} parent=1 // pred_check
      _
    $region151: #{tpu_custom_call.1} parent=1 // pred_check_branch
      %292 = sbr.rel (0) target = $region153
    $region152: #{tpu_custom_call.1} parent=1 // pred_region
      %293 = dma.done [#allocation27], 16
    $region153: #{tpu_custom_call.1} parent=1 // pred_fallthru
      _
    // Predicated region
    $region154: #{tpu_custom_call.1} parent=1 // pred_check
      _
    $region155: #{tpu_custom_call.1} parent=1 // pred_check_branch
      %295 = sbr.rel (0) target = $region157
    $region156: #{tpu_custom_call.1} parent=1 // pred_region
      %296 = dma.done [#allocation30], 1024
    $region157: #{tpu_custom_call.1} parent=1 // pred_fallthru
      _
    %v298 = vld [vmem:[#allocation2] sm:$0xf]
    %v299 = vld [vmem:[#allocation2 + $0x4] sm:$0xf]
    %v300 = vld [vmem:[#allocation2 + $0x8] sm:$0xf]
    %v301 = vld [vmem:[#allocation2 + $0xc] sm:$0xf]
    %v302 = vld [vmem:[#allocation2 + $0x10] sm:$0xf]
    %v303 = vld [vmem:[#allocation2 + $0x14] sm:$0xf]
    %v304 = vld [vmem:[#allocation2 + $0x18] sm:$0xf]
    %v305 = vld [vmem:[#allocation2 + $0x1c] sm:$0xf]
    %v306 = vld [vmem:[#allocation5] sm:$0xf]
    %v307 = vld [vmem:[#allocation5 + $0x4] sm:$0xf]
    %v308 = vld [vmem:[#allocation5 + $0x8] sm:$0xf]
    %v309 = vld [vmem:[#allocation5 + $0xc] sm:$0xf]
    %v310 = vld [vmem:[#allocation5 + $0x10] sm:$0xf]
    %v311 = vld [vmem:[#allocation5 + $0x14] sm:$0xf]
    %v312 = vld [vmem:[#allocation5 + $0x18] sm:$0xf]
    %v313 = vld [vmem:[#allocation5 + $0x1c] sm:$0xf]
    %v314 = vld [vmem:[#allocation5 + $0x20] sm:$0xf]
    %v315 = vld [vmem:[#allocation5 + $0x24] sm:$0xf]
    %v316 = vld [vmem:[#allocation5 + $0x28] sm:$0xf]
    %v317 = vld [vmem:[#allocation5 + $0x2c] sm:$0xf]
    %v318 = vld [vmem:[#allocation5 + $0x30] sm:$0xf]
    %v319 = vld [vmem:[#allocation5 + $0x34] sm:$0xf]
    %v320 = vld [vmem:[#allocation5 + $0x38] sm:$0xf]
    %v321 = vld [vmem:[#allocation5 + $0x3c] sm:$0xf]
    %v322 = vld [vmem:[#allocation7] sm:$0x1]
    %v324 = vlaneseq
    %v325 = vshrl.u32 %v324, 7
    %v326 = vsub.s32 0, %v325
    %v327 = vrot.slane %v322, %v326
    %v333 = vunpack.c.l.b16 %v298
    %v334 = vunpack.c.l.b16 %v299
    %v335 = vunpack.c.l.b16 %v300
    %v336 = vunpack.c.l.b16 %v301
    %v337 = vpack.c.b16 %v334, %v333
    %v338 = vpack.c.b16 %v336, %v335
    %v357 = vunpack.c.l.b16 %v306
    %v358 = vunpack.c.l.b16 %v307
    %v359 = vunpack.c.l.b16 %v308
    %v360 = vunpack.c.l.b16 %v309
    %v361 = vunpack.c.l.b16 %v310
    %v362 = vunpack.c.l.b16 %v311
    %v363 = vunpack.c.l.b16 %v312
    %v364 = vunpack.c.l.b16 %v313
    %v365 = vunpack.c.l.b16 %v314
    %v366 = vunpack.c.l.b16 %v315
    %v367 = vunpack.c.l.b16 %v316
    %v368 = vunpack.c.l.b16 %v317
    %v369 = vunpack.c.l.b16 %v318
    %v370 = vunpack.c.l.b16 %v319
    %v371 = vunpack.c.l.b16 %v320
    %v372 = vunpack.c.l.b16 %v321
    %v373 = vpack.c.b16 %v358, %v357
    %v374 = vpack.c.b16 %v360, %v359
    %v375 = vpack.c.b16 %v362, %v361
    %v376 = vpack.c.b16 %v364, %v363
    %v377 = vpack.c.b16 %v366, %v365
    %v378 = vpack.c.b16 %v368, %v367
    %v379 = vpack.c.b16 %v370, %v369
    %v380 = vpack.c.b16 %v372, %v371
    %389 = vmatprep.subr.bf16.mxu0 0
    %390 = vmatpush1.bf16.msra.mxu0 %v373
    %391 = vmatprep.subr.bf16.mxu0 0
    %392 = vmatpush1.bf16.msra.mxu0 %v374
    %393 = vmatprep.subr.bf16.mxu0 0
    %394 = vmatpush1.bf16.msra.mxu0 %v375
    %395 = vmatprep.subr.bf16.mxu0 0
    %396 = vmatpush1.bf16.msra.mxu0 %v376
    %397 = vmatprep.subr.bf16.mxu0 0
    %398 = vmatpush1.bf16.msra.mxu0 %v377
    %399 = vmatprep.subr.bf16.mxu0 0
    %400 = vmatpush1.bf16.msra.mxu0 %v378
    %401 = vmatprep.subr.bf16.mxu0 0
    %402 = vmatpush1.bf16.msra.mxu0 %v379
    %403 = vmatprep.subr.bf16.mxu0 0
    %404 = vmatpush1.bf16.msra.mxu0 %v380
    %405 = vmatprep.subr.bf16.mxu0 0
    %406 = vmatpush1.bf16.msra.mxu0 0
    %407 = vmatprep.subr.bf16.mxu0 0
    %408 = vmatpush1.bf16.msra.mxu0 0
    %409 = vmatprep.subr.bf16.mxu0 0
    %410 = vmatpush1.bf16.msra.mxu0 0
    %411 = vmatprep.subr.bf16.mxu0 0
    %412 = vmatpush1.bf16.msra.mxu0 0
    %413 = vmatprep.subr.bf16.mxu0 0
    %414 = vmatpush1.bf16.msra.mxu0 0
    %415 = vmatprep.subr.bf16.mxu0 0
    %416 = vmatpush1.bf16.msra.mxu0 0
    %417 = vmatprep.subr.bf16.mxu0 0
    %418 = vmatpush1.bf16.msra.mxu0 0
    %419 = vmatprep.subr.bf16.mxu0 0
    %420 = vmatpush1.bf16.msra.mxu0 0
    %421 = vmatprep.mubr.bf16.mxu0 0
    %422 = vmatmul.mubr.bf16.gmra.mrb[0].mxu0 %v337
    %v423 = vpop.f32.mrb[0].mxu0
    %v424 = vadd.f32 %v327, %v423
    %v425 = vpop.f32.mrb[0].mxu0
    %v426 = vpop.f32.mrb[0].mxu0
    %v427 = vadd.f32 %v327, %v426
    %v428 = vpop.f32.mrb[0].mxu0
    %429 = vmatprep.mubr.bf16.mxu0 0
    %430 = vmatmul.mubr.bf16.gmra.mrb[0].mxu0 %v338
    %v431 = vpop.f32.mrb[0].mxu0
    %v432 = vadd.f32 %v327, %v431
    %v433 = vpop.f32.mrb[0].mxu0
    %v434 = vpop.f32.mrb[0].mxu0
    %v435 = vadd.f32 %v327, %v434
    %v436 = vpop.f32.mrb[0].mxu0
    %437 = vdwg.mxu0
    %v442 = vunpack.c.l.b16 %v302
    %v443 = vunpack.c.l.b16 %v303
    %v444 = vunpack.c.l.b16 %v304
    %v445 = vunpack.c.l.b16 %v305
    %v446 = vpack.c.b16 %v443, %v442
    %v447 = vpack.c.b16 %v445, %v444
    %450 = vmatprep.subr.bf16.mxu0 0
    %451 = vmatpush1.bf16.msra.mxu0 %v373
    %452 = vmatprep.subr.bf16.mxu0 0
    %453 = vmatpush1.bf16.msra.mxu0 %v374
    %454 = vmatprep.subr.bf16.mxu0 0
    %455 = vmatpush1.bf16.msra.mxu0 %v375
    %456 = vmatprep.subr.bf16.mxu0 0
    %457 = vmatpush1.bf16.msra.mxu0 %v376
    %458 = vmatprep.subr.bf16.mxu0 0
    %459 = vmatpush1.bf16.msra.mxu0 %v377
    %460 = vmatprep.subr.bf16.mxu0 0
    %461 = vmatpush1.bf16.msra.mxu0 %v378
    %462 = vmatprep.subr.bf16.mxu0 0
    %463 = vmatpush1.bf16.msra.mxu0 %v379
    %464 = vmatprep.subr.bf16.mxu0 0
    %465 = vmatpush1.bf16.msra.mxu0 %v380
    %466 = vmatprep.subr.bf16.mxu0 0
    %467 = vmatpush1.bf16.msra.mxu0 0
    %468 = vmatprep.subr.bf16.mxu0 0
    %469 = vmatpush1.bf16.msra.mxu0 0
    %470 = vmatprep.subr.bf16.mxu0 0
    %471 = vmatpush1.bf16.msra.mxu0 0
    %472 = vmatprep.subr.bf16.mxu0 0
    %473 = vmatpush1.bf16.msra.mxu0 0
    %474 = vmatprep.subr.bf16.mxu0 0
    %475 = vmatpush1.bf16.msra.mxu0 0
    %476 = vmatprep.subr.bf16.mxu0 0
    %477 = vmatpush1.bf16.msra.mxu0 0
    %478 = vmatprep.subr.bf16.mxu0 0
    %479 = vmatpush1.bf16.msra.mxu0 0
    %480 = vmatprep.subr.bf16.mxu0 0
    %481 = vmatpush1.bf16.msra.mxu0 0
    %482 = vmatprep.mubr.bf16.mxu0 0
    %483 = vmatmul.mubr.bf16.gmra.mrb[0].mxu0 %v446
    %v484 = vpop.f32.mrb[0].mxu0
    %v485 = vadd.f32 %v327, %v484
    %v486 = vpop.f32.mrb[0].mxu0
    %v487 = vpop.f32.mrb[0].mxu0
    %v488 = vadd.f32 %v327, %v487
    %v489 = vpop.f32.mrb[0].mxu0
    %490 = vmatprep.mubr.bf16.mxu0 0
    %491 = vmatmul.mubr.bf16.gmra.mrb[0].mxu0 %v447
    %v492 = vpop.f32.mrb[0].mxu0
    %v493 = vadd.f32 %v327, %v492
    %v494 = vpop.f32.mrb[0].mxu0
    %v495 = vpop.f32.mrb[0].mxu0
    %v496 = vadd.f32 %v327, %v495
    %v497 = vpop.f32.mrb[0].mxu0
    %498 = vdwg.mxu0
    %v499 = vmax.f32 %v424, 0.0
    %v500 = vmax.f32 %v427, 0.0
    %v501 = vmax.f32 %v432, 0.0
    %v502 = vmax.f32 %v435, 0.0
    %v503 = vpack.c.bf16 %v500, %v499
    %v504 = vpack.c.bf16 %v502, %v501
    %v505 = vmax.f32 %v485, 0.0
    %v506 = vmax.f32 %v488, 0.0
    %v507 = vmax.f32 %v493, 0.0
    %v508 = vmax.f32 %v496, 0.0
    %v509 = vpack.c.bf16 %v506, %v505
    %v510 = vpack.c.bf16 %v508, %v507
    %v511 = vld [vmem:[#allocation8] sm:$0xf]
    %v512 = vld [vmem:[#allocation8 + $0x4] sm:$0xf]
    %v513 = vld [vmem:[#allocation8 + $0x8] sm:$0xf]
    %v514 = vld [vmem:[#allocation8 + $0xc] sm:$0xf]
    %v515 = vld [vmem:[#allocation8 + $0x10] sm:$0xf]
    %v516 = vld [vmem:[#allocation8 + $0x14] sm:$0xf]
    %v517 = vld [vmem:[#allocation8 + $0x18] sm:$0xf]
    %v518 = vld [vmem:[#allocation8 + $0x1c] sm:$0xf]
    %v519 = vld [vmem:[#allocation8 + $0x20] sm:$0xf]
    %v520 = vld [vmem:[#allocation8 + $0x24] sm:$0xf]
    %v521 = vld [vmem:[#allocation8 + $0x28] sm:$0xf]
    %v522 = vld [vmem:[#allocation8 + $0x2c] sm:$0xf]
    %v523 = vld [vmem:[#allocation8 + $0x30] sm:$0xf]
    %v524 = vld [vmem:[#allocation8 + $0x34] sm:$0xf]
    %v525 = vld [vmem:[#allocation8 + $0x38] sm:$0xf]
    %v526 = vld [vmem:[#allocation8 + $0x3c] sm:$0xf]
    %v527 = vld [vmem:[#allocation10] sm:$0x1]
    %v529 = vlaneseq
    %v530 = vshrl.u32 %v529, 7
    %v531 = vsub.s32 0, %v530
    %v532 = vrot.slane %v527, %v531
    %v550 = vunpack.c.l.b16 %v511
    %v551 = vunpack.c.l.b16 %v512
    %v552 = vunpack.c.l.b16 %v513
    %v553 = vunpack.c.l.b16 %v514
    %v554 = vunpack.c.l.b16 %v515
    %v555 = vunpack.c.l.b16 %v516
    %v556 = vunpack.c.l.b16 %v517
    %v557 = vunpack.c.l.b16 %v518
    %v558 = vunpack.c.l.b16 %v519
    %v559 = vunpack.c.l.b16 %v520
    %v560 = vunpack.c.l.b16 %v521
    %v561 = vunpack.c.l.b16 %v522
    %v562 = vunpack.c.l.b16 %v523
    %v563 = vunpack.c.l.b16 %v524
    %v564 = vunpack.c.l.b16 %v525
    %v565 = vunpack.c.l.b16 %v526
    %v566 = vpack.c.b16 %v551, %v550
    %v567 = vpack.c.b16 %v553, %v552
    %v568 = vpack.c.b16 %v555, %v554
    %v569 = vpack.c.b16 %v557, %v556
    %v570 = vpack.c.b16 %v559, %v558
    %v571 = vpack.c.b16 %v561, %v560
    %v572 = vpack.c.b16 %v563, %v562
    %v573 = vpack.c.b16 %v565, %v564
    %582 = vmatprep.subr.bf16.mxu0 0
    %583 = vmatpush1.bf16.msra.mxu0 %v566
    %584 = vmatprep.subr.bf16.mxu0 0
    %585 = vmatpush1.bf16.msra.mxu0 %v567
    %586 = vmatprep.subr.bf16.mxu0 0
    %587 = vmatpush1.bf16.msra.mxu0 %v568
    %588 = vmatprep.subr.bf16.mxu0 0
    %589 = vmatpush1.bf16.msra.mxu0 %v569
    %590 = vmatprep.subr.bf16.mxu0 0
    %591 = vmatpush1.bf16.msra.mxu0 %v570
    %592 = vmatprep.subr.bf16.mxu0 0
    %593 = vmatpush1.bf16.msra.mxu0 %v571
    %594 = vmatprep.subr.bf16.mxu0 0
    %595 = vmatpush1.bf16.msra.mxu0 %v572
    %596 = vmatprep.subr.bf16.mxu0 0
    %597 = vmatpush1.bf16.msra.mxu0 %v573
    %598 = vmatprep.subr.bf16.mxu0 0
    %599 = vmatpush1.bf16.msra.mxu0 0
    %600 = vmatprep.subr.bf16.mxu0 0
    %601 = vmatpush1.bf16.msra.mxu0 0
    %602 = vmatprep.subr.bf16.mxu0 0
    %603 = vmatpush1.bf16.msra.mxu0 0
    %604 = vmatprep.subr.bf16.mxu0 0
    %605 = vmatpush1.bf16.msra.mxu0 0
    %606 = vmatprep.subr.bf16.mxu0 0
    %607 = vmatpush1.bf16.msra.mxu0 0
    %608 = vmatprep.subr.bf16.mxu0 0
    %609 = vmatpush1.bf16.msra.mxu0 0
    %610 = vmatprep.subr.bf16.mxu0 0
    %611 = vmatpush1.bf16.msra.mxu0 0
    %612 = vmatprep.subr.bf16.mxu0 0
    %613 = vmatpush1.bf16.msra.mxu0 0
    %614 = vmatprep.mubr.bf16.mxu0 0
    %615 = vmatmul.mubr.bf16.gmra.mrb[0].mxu0 %v503
    %v616 = vpop.f32.mrb[0].mxu0
    %v617 = vadd.f32 %v532, %v616
    %v618 = vpop.f32.mrb[0].mxu0
    %v619 = vpop.f32.mrb[0].mxu0
    %v620 = vadd.f32 %v532, %v619
    %v621 = vpop.f32.mrb[0].mxu0
    %622 = vmatprep.mubr.bf16.mxu0 0
    %623 = vmatmul.mubr.bf16.gmra.mrb[0].mxu0 %v504
    %v624 = vpop.f32.mrb[0].mxu0
    %v625 = vadd.f32 %v532, %v624
    %v626 = vpop.f32.mrb[0].mxu0
    %v627 = vpop.f32.mrb[0].mxu0
    %v628 = vadd.f32 %v532, %v627
    %v629 = vpop.f32.mrb[0].mxu0
    %630 = vdwg.mxu0
    %631 = vmatprep.subr.bf16.mxu0 0
    %632 = vmatpush1.bf16.msra.mxu0 %v566
    %633 = vmatprep.subr.bf16.mxu0 0
    %634 = vmatpush1.bf16.msra.mxu0 %v567
    %635 = vmatprep.subr.bf16.mxu0 0
    %636 = vmatpush1.bf16.msra.mxu0 %v568
    %637 = vmatprep.subr.bf16.mxu0 0
    %638 = vmatpush1.bf16.msra.mxu0 %v569
    %639 = vmatprep.subr.bf16.mxu0 0
    %640 = vmatpush1.bf16.msra.mxu0 %v570
    %641 = vmatprep.subr.bf16.mxu0 0
    %642 = vmatpush1.bf16.msra.mxu0 %v571
    %643 = vmatprep.subr.bf16.mxu0 0
    %644 = vmatpush1.bf16.msra.mxu0 %v572
    %645 = vmatprep.subr.bf16.mxu0 0
    %646 = vmatpush1.bf16.msra.mxu0 %v573
    %647 = vmatprep.subr.bf16.mxu0 0
    %648 = vmatpush1.bf16.msra.mxu0 0
    %649 = vmatprep.subr.bf16.mxu0 0
    %650 = vmatpush1.bf16.msra.mxu0 0
    %651 = vmatprep.subr.bf16.mxu0 0
    %652 = vmatpush1.bf16.msra.mxu0 0
    %653 = vmatprep.subr.bf16.mxu0 0
    %654 = vmatpush1.bf16.msra.mxu0 0
    %655 = vmatprep.subr.bf16.mxu0 0
    %656 = vmatpush1.bf16.msra.mxu0 0
    %657 = vmatprep.subr.bf16.mxu0 0
    %658 = vmatpush1.bf16.msra.mxu0 0
    %659 = vmatprep.subr.bf16.mxu0 0
    %660 = vmatpush1.bf16.msra.mxu0 0
    %661 = vmatprep.subr.bf16.mxu0 0
    %662 = vmatpush1.bf16.msra.mxu0 0
    %663 = vmatprep.mubr.bf16.mxu0 0
    %664 = vmatmul.mubr.bf16.gmra.mrb[0].mxu0 %v509
    %v665 = vpop.f32.mrb[0].mxu0
    %v666 = vadd.f32 %v532, %v665
    %v667 = vpop.f32.mrb[0].mxu0
    %v668 = vpop.f32.mrb[0].mxu0
    %v669 = vadd.f32 %v532, %v668
    %v670 = vpop.f32.mrb[0].mxu0
    %671 = vmatprep.mubr.bf16.mxu0 0
    %672 = vmatmul.mubr.bf16.gmra.mrb[0].mxu0 %v510
    %v673 = vpop.f32.mrb[0].mxu0
    %v674 = vadd.f32 %v532, %v673
    %v675 = vpop.f32.mrb[0].mxu0
    %v676 = vpop.f32.mrb[0].mxu0
    %v677 = vadd.f32 %v532, %v676
    %v678 = vpop.f32.mrb[0].mxu0
    %679 = vdwg.mxu0
    %v680 = vmax.f32 %v617, 0.0
    %v681 = vmax.f32 %v620, 0.0
    %v682 = vmax.f32 %v625, 0.0
    %v683 = vmax.f32 %v628, 0.0
    %v684 = vpack.c.bf16 %v681, %v680
    %v685 = vpack.c.bf16 %v683, %v682
    %v686 = vmax.f32 %v666, 0.0
    %v687 = vmax.f32 %v669, 0.0
    %v688 = vmax.f32 %v674, 0.0
    %v689 = vmax.f32 %v677, 0.0
    %v690 = vpack.c.bf16 %v687, %v686
    %v691 = vpack.c.bf16 %v689, %v688
    %v692 = vld [vmem:[#allocation11] sm:$0xff]
    %v693 = vld [vmem:[#allocation11 + $0x8] sm:$0xff]
    %v694 = vld [vmem:[#allocation11 + $0x10] sm:$0xff]
    %v695 = vld [vmem:[#allocation11 + $0x18] sm:$0xff]
    %v696 = vld [vmem:[#allocation11 + $0x20] sm:$0xff]
    %v697 = vld [vmem:[#allocation11 + $0x28] sm:$0xff]
    %v698 = vld [vmem:[#allocation11 + $0x30] sm:$0xff]
    %v699 = vld [vmem:[#allocation11 + $0x38] sm:$0xff]
    %v700 = vld [vmem:[#allocation11 + $0x40] sm:$0xff]
    %v701 = vld [vmem:[#allocation11 + $0x48] sm:$0xff]
    %v702 = vld [vmem:[#allocation11 + $0x50] sm:$0xff]
    %v703 = vld [vmem:[#allocation11 + $0x58] sm:$0xff]
    %v704 = vld [vmem:[#allocation11 + $0x60] sm:$0xff]
    %v705 = vld [vmem:[#allocation11 + $0x68] sm:$0xff]
    %v706 = vld [vmem:[#allocation11 + $0x70] sm:$0xff]
    %v707 = vld [vmem:[#allocation11 + $0x78] sm:$0xff]
    %v708 = vld [vmem:[#allocation13] sm:$0x3]
    %v710 = vlaneseq
    %v711 = vshrl.u32 %v710, 7
    %v712 = vsub.s32 0, %v711
    %v713 = vrot.slane %v708, %v712
    %v714 = vlaneseq
    %v715 = vshrl.u32 %v714, 7
    %v716 = vsub.s32 1, %v715
    %v717 = vrot.slane %v708, %v716
    %v736 = vunpack.c.l.b16 %v692
    %v737 = vunpack.c.h.b16 %v692
    %v738 = vunpack.c.l.b16 %v693
    %v739 = vunpack.c.h.b16 %v693
    %v740 = vunpack.c.l.b16 %v694
    %v741 = vunpack.c.h.b16 %v694
    %v742 = vunpack.c.l.b16 %v695
    %v743 = vunpack.c.h.b16 %v695
    %v744 = vunpack.c.l.b16 %v696
    %v745 = vunpack.c.h.b16 %v696
    %v746 = vunpack.c.l.b16 %v697
    %v747 = vunpack.c.h.b16 %v697
    %v748 = vunpack.c.l.b16 %v698
    %v749 = vunpack.c.h.b16 %v698
    %v750 = vunpack.c.l.b16 %v699
    %v751 = vunpack.c.h.b16 %v699
    %v752 = vunpack.c.l.b16 %v700
    %v753 = vunpack.c.h.b16 %v700
    %v754 = vunpack.c.l.b16 %v701
    %v755 = vunpack.c.h.b16 %v701
    %v756 = vunpack.c.l.b16 %v702
    %v757 = vunpack.c.h.b16 %v702
    %v758 = vunpack.c.l.b16 %v703
    %v759 = vunpack.c.h.b16 %v703
    %v760 = vunpack.c.l.b16 %v704
    %v761 = vunpack.c.h.b16 %v704
    %v762 = vunpack.c.l.b16 %v705
    %v763 = vunpack.c.h.b16 %v705
    %v764 = vunpack.c.l.b16 %v706
    %v765 = vunpack.c.h.b16 %v706
    %v766 = vunpack.c.l.b16 %v707
    %v767 = vunpack.c.h.b16 %v707
    %v768 = vpack.c.b16 %v738, %v736
    %v769 = vpack.c.b16 %v739, %v737
    %v770 = vpack.c.b16 %v742, %v740
    %v771 = vpack.c.b16 %v743, %v741
    %v772 = vpack.c.b16 %v746, %v744
    %v773 = vpack.c.b16 %v747, %v745
    %v774 = vpack.c.b16 %v750, %v748
    %v775 = vpack.c.b16 %v751, %v749
    %v776 = vpack.c.b16 %v754, %v752
    %v777 = vpack.c.b16 %v755, %v753
    %v778 = vpack.c.b16 %v758, %v756
    %v779 = vpack.c.b16 %v759, %v757
    %v780 = vpack.c.b16 %v762, %v760
    %v781 = vpack.c.b16 %v763, %v761
    %v782 = vpack.c.b16 %v766, %v764
    %v783 = vpack.c.b16 %v767, %v765
    %800 = vmatprep.subr.bf16.mxu0 %v769
    %801 = vmatpush1.bf16.msra.mxu0 %v768
    %802 = vmatprep.subr.bf16.mxu0 %v771
    %803 = vmatpush1.bf16.msra.mxu0 %v770
    %804 = vmatprep.subr.bf16.mxu0 %v773
    %805 = vmatpush1.bf16.msra.mxu0 %v772
    %806 = vmatprep.subr.bf16.mxu0 %v775
    %807 = vmatpush1.bf16.msra.mxu0 %v774
    %808 = vmatprep.subr.bf16.mxu0 %v777
    %809 = vmatpush1.bf16.msra.mxu0 %v776
    %810 = vmatprep.subr.bf16.mxu0 %v779
    %811 = vmatpush1.bf16.msra.mxu0 %v778
    %812 = vmatprep.subr.bf16.mxu0 %v781
    %813 = vmatpush1.bf16.msra.mxu0 %v780
    %814 = vmatprep.subr.bf16.mxu0 %v783
    %815 = vmatpush1.bf16.msra.mxu0 %v782
    %816 = vmatprep.subr.bf16.mxu0 0
    %817 = vmatpush1.bf16.msra.mxu0 0
    %818 = vmatprep.subr.bf16.mxu0 0
    %819 = vmatpush1.bf16.msra.mxu0 0
    %820 = vmatprep.subr.bf16.mxu0 0
    %821 = vmatpush1.bf16.msra.mxu0 0
    %822 = vmatprep.subr.bf16.mxu0 0
    %823 = vmatpush1.bf16.msra.mxu0 0
    %824 = vmatprep.subr.bf16.mxu0 0
    %825 = vmatpush1.bf16.msra.mxu0 0
    %826 = vmatprep.subr.bf16.mxu0 0
    %827 = vmatpush1.bf16.msra.mxu0 0
    %828 = vmatprep.subr.bf16.mxu0 0
    %829 = vmatpush1.bf16.msra.mxu0 0
    %830 = vmatprep.subr.bf16.mxu0 0
    %831 = vmatpush1.bf16.msra.mxu0 0
    %832 = vmatprep.mubr.bf16.mxu0 0
    %833 = vmatmul.mubr.bf16.gmra.mrb[0].mxu0 %v684
    %v834 = vpop.f32.mrb[0].mxu0
    %v835 = vadd.f32 %v713, %v834
    %v836 = vpop.f32.mrb[0].mxu0
    %v837 = vadd.f32 %v717, %v836
    %v838 = vpop.f32.mrb[0].mxu0
    %v839 = vadd.f32 %v713, %v838
    %v840 = vpop.f32.mrb[0].mxu0
    %v841 = vadd.f32 %v717, %v840
    %842 = vmatprep.mubr.bf16.mxu0 0
    %843 = vmatmul.mubr.bf16.gmra.mrb[0].mxu0 %v685
    %v844 = vpop.f32.mrb[0].mxu0
    %v845 = vadd.f32 %v713, %v844
    %v846 = vpop.f32.mrb[0].mxu0
    %v847 = vadd.f32 %v717, %v846
    %v848 = vpop.f32.mrb[0].mxu0
    %v849 = vadd.f32 %v713, %v848
    %v850 = vpop.f32.mrb[0].mxu0
    %v851 = vadd.f32 %v717, %v850
    %852 = vdwg.mxu0
    %853 = vmatprep.subr.bf16.mxu0 %v769
    %854 = vmatpush1.bf16.msra.mxu0 %v768
    %855 = vmatprep.subr.bf16.mxu0 %v771
    %856 = vmatpush1.bf16.msra.mxu0 %v770
    %857 = vmatprep.subr.bf16.mxu0 %v773
    %858 = vmatpush1.bf16.msra.mxu0 %v772
    %859 = vmatprep.subr.bf16.mxu0 %v775
    %860 = vmatpush1.bf16.msra.mxu0 %v774
    %861 = vmatprep.subr.bf16.mxu0 %v777
    %862 = vmatpush1.bf16.msra.mxu0 %v776
    %863 = vmatprep.subr.bf16.mxu0 %v779
    %864 = vmatpush1.bf16.msra.mxu0 %v778
    %865 = vmatprep.subr.bf16.mxu0 %v781
    %866 = vmatpush1.bf16.msra.mxu0 %v780
    %867 = vmatprep.subr.bf16.mxu0 %v783
    %868 = vmatpush1.bf16.msra.mxu0 %v782
    %869 = vmatprep.subr.bf16.mxu0 0
    %870 = vmatpush1.bf16.msra.mxu0 0
    %871 = vmatprep.subr.bf16.mxu0 0
    %872 = vmatpush1.bf16.msra.mxu0 0
    %873 = vmatprep.subr.bf16.mxu0 0
    %874 = vmatpush1.bf16.msra.mxu0 0
    %875 = vmatprep.subr.bf16.mxu0 0
    %876 = vmatpush1.bf16.msra.mxu0 0
    %877 = vmatprep.subr.bf16.mxu0 0
    %878 = vmatpush1.bf16.msra.mxu0 0
    %879 = vmatprep.subr.bf16.mxu0 0
    %880 = vmatpush1.bf16.msra.mxu0 0
    %881 = vmatprep.subr.bf16.mxu0 0
    %882 = vmatpush1.bf16.msra.mxu0 0
    %883 = vmatprep.subr.bf16.mxu0 0
    %884 = vmatpush1.bf16.msra.mxu0 0
    %885 = vmatprep.mubr.bf16.mxu0 0
    %886 = vmatmul.mubr.bf16.gmra.mrb[0].mxu0 %v690
    %v887 = vpop.f32.mrb[0].mxu0
    %v888 = vadd.f32 %v713, %v887
    %v889 = vpop.f32.mrb[0].mxu0
    %v890 = vadd.f32 %v717, %v889
    %v891 = vpop.f32.mrb[0].mxu0
    %v892 = vadd.f32 %v713, %v891
    %v893 = vpop.f32.mrb[0].mxu0
    %v894 = vadd.f32 %v717, %v893
    %895 = vmatprep.mubr.bf16.mxu0 0
    %896 = vmatmul.mubr.bf16.gmra.mrb[0].mxu0 %v691
    %v897 = vpop.f32.mrb[0].mxu0
    %v898 = vadd.f32 %v713, %v897
    %v899 = vpop.f32.mrb[0].mxu0
    %v900 = vadd.f32 %v717, %v899
    %v901 = vpop.f32.mrb[0].mxu0
    %v902 = vadd.f32 %v713, %v901
    %v903 = vpop.f32.mrb[0].mxu0
    %v904 = vadd.f32 %v717, %v903
    %905 = vdwg.mxu0
    %v906 = vmax.f32 %v835, 0.0
    %v907 = vmax.f32 %v837, 0.0
    %v908 = vmax.f32 %v839, 0.0
    %v909 = vmax.f32 %v841, 0.0
    %v910 = vmax.f32 %v845, 0.0
    %v911 = vmax.f32 %v847, 0.0
    %v912 = vmax.f32 %v849, 0.0
    %v913 = vmax.f32 %v851, 0.0
    %v914 = vpack.c.bf16 %v908, %v906
    %v915 = vpack.c.bf16 %v909, %v907
    %v916 = vpack.c.bf16 %v912, %v910
    %v917 = vpack.c.bf16 %v913, %v911
    %v918 = vmax.f32 %v888, 0.0
    %v919 = vmax.f32 %v890, 0.0
    %v920 = vmax.f32 %v892, 0.0
    %v921 = vmax.f32 %v894, 0.0
    %v922 = vmax.f32 %v898, 0.0
    %v923 = vmax.f32 %v900, 0.0
    %v924 = vmax.f32 %v902, 0.0
    %v925 = vmax.f32 %v904, 0.0
    %v926 = vpack.c.bf16 %v920, %v918
    %v927 = vpack.c.bf16 %v921, %v919
    %v928 = vpack.c.bf16 %v924, %v922
    %v929 = vpack.c.bf16 %v925, %v923
    %v930 = vld [vmem:[#allocation14] sm:$0xff]
    %v931 = vld [vmem:[#allocation14 + $0x8] sm:$0xff]
    %v932 = vld [vmem:[#allocation14 + $0x10] sm:$0xff]
    %v933 = vld [vmem:[#allocation14 + $0x18] sm:$0xff]
    %v934 = vld [vmem:[#allocation14 + $0x20] sm:$0xff]
    %v935 = vld [vmem:[#allocation14 + $0x28] sm:$0xff]
    %v936 = vld [vmem:[#allocation14 + $0x30] sm:$0xff]
    %v937 = vld [vmem:[#allocation14 + $0x38] sm:$0xff]
    %v938 = vld [vmem:[#allocation14 + $0x40] sm:$0xff]
    %v939 = vld [vmem:[#allocation14 + $0x48] sm:$0xff]
    %v940 = vld [vmem:[#allocation14 + $0x50] sm:$0xff]
    %v941 = vld [vmem:[#allocation14 + $0x58] sm:$0xff]
    %v942 = vld [vmem:[#allocation14 + $0x60] sm:$0xff]
    %v943 = vld [vmem:[#allocation14 + $0x68] sm:$0xff]
    %v944 = vld [vmem:[#allocation14 + $0x70] sm:$0xff]
    %v945 = vld [vmem:[#allocation14 + $0x78] sm:$0xff]
    %v946 = vld [vmem:[#allocation14 + $0x80] sm:$0xff]
    %v947 = vld [vmem:[#allocation14 + $0x88] sm:$0xff]
    %v948 = vld [vmem:[#allocation14 + $0x90] sm:$0xff]
    %v949 = vld [vmem:[#allocation14 + $0x98] sm:$0xff]
    %v950 = vld [vmem:[#allocation14 + $0xa0] sm:$0xff]
    %v951 = vld [vmem:[#allocation14 + $0xa8] sm:$0xff]
    %v952 = vld [vmem:[#allocation14 + $0xb0] sm:$0xff]
    %v953 = vld [vmem:[#allocation14 + $0xb8] sm:$0xff]
    %v954 = vld [vmem:[#allocation14 + $0xc0] sm:$0xff]
    %v955 = vld [vmem:[#allocation14 + $0xc8] sm:$0xff]
    %v956 = vld [vmem:[#allocation14 + $0xd0] sm:$0xff]
    %v957 = vld [vmem:[#allocation14 + $0xd8] sm:$0xff]
    %v958 = vld [vmem:[#allocation14 + $0xe0] sm:$0xff]
    %v959 = vld [vmem:[#allocation14 + $0xe8] sm:$0xff]
    %v960 = vld [vmem:[#allocation14 + $0xf0] sm:$0xff]
    %v961 = vld [vmem:[#allocation14 + $0xf8] sm:$0xff]
    %v962 = vld [vmem:[#allocation14 + $0x100] sm:$0xff]
    %v963 = vld [vmem:[#allocation14 + $0x108] sm:$0xff]
    %v964 = vld [vmem:[#allocation14 + $0x110] sm:$0xff]
    %v965 = vld [vmem:[#allocation14 + $0x118] sm:$0xff]
    %v966 = vld [vmem:[#allocation14 + $0x120] sm:$0xff]
    %v967 = vld [vmem:[#allocation14 + $0x128] sm:$0xff]
    %v968 = vld [vmem:[#allocation14 + $0x130] sm:$0xff]
    %v969 = vld [vmem:[#allocation14 + $0x138] sm:$0xff]
    %v970 = vld [vmem:[#allocation14 + $0x140] sm:$0xff]
    %v971 = vld [vmem:[#allocation14 + $0x148] sm:$0xff]
    %v972 = vld [vmem:[#allocation14 + $0x150] sm:$0xff]
    %v973 = vld [vmem:[#allocation14 + $0x158] sm:$0xff]
    %v974 = vld [vmem:[#allocation14 + $0x160] sm:$0xff]
    %v975 = vld [vmem:[#allocation14 + $0x168] sm:$0xff]
    %v976 = vld [vmem:[#allocation14 + $0x170] sm:$0xff]
    %v977 = vld [vmem:[#allocation14 + $0x178] sm:$0xff]
    %v978 = vld [vmem:[#allocation14 + $0x180] sm:$0xff]
    %v979 = vld [vmem:[#allocation14 + $0x188] sm:$0xff]
    %v980 = vld [vmem:[#allocation14 + $0x190] sm:$0xff]
    %v981 = vld [vmem:[#allocation14 + $0x198] sm:$0xff]
    %v982 = vld [vmem:[#allocation14 + $0x1a0] sm:$0xff]
    %v983 = vld [vmem:[#allocation14 + $0x1a8] sm:$0xff]
    %v984 = vld [vmem:[#allocation14 + $0x1b0] sm:$0xff]
    %v985 = vld [vmem:[#allocation14 + $0x1b8] sm:$0xff]
    %v986 = vld [vmem:[#allocation14 + $0x1c0] sm:$0xff]
    %v987 = vld [vmem:[#allocation14 + $0x1c8] sm:$0xff]
    %v988 = vld [vmem:[#allocation14 + $0x1d0] sm:$0xff]
    %v989 = vld [vmem:[#allocation14 + $0x1d8] sm:$0xff]
    %v990 = vld [vmem:[#allocation14 + $0x1e0] sm:$0xff]
    %v991 = vld [vmem:[#allocation14 + $0x1e8] sm:$0xff]
    %v992 = vld [vmem:[#allocation14 + $0x1f0] sm:$0xff]
    %v993 = vld [vmem:[#allocation14 + $0x1f8] sm:$0xff]
    %v994 = vld [vmem:[#allocation16] sm:$0xf]
    %v996 = vlaneseq
    %v997 = vshrl.u32 %v996, 7
    %v998 = vsub.s32 0, %v997
    %v999 = vrot.slane %v994, %v998
    %v1000 = vlaneseq
    %v1001 = vshrl.u32 %v1000, 7
    %v1002 = vsub.s32 1, %v1001
    %v1003 = vrot.slane %v994, %v1002
    %v1004 = vlaneseq
    %v1005 = vshrl.u32 %v1004, 7
    %v1006 = vsub.s32 2, %v1005
    %v1007 = vrot.slane %v994, %v1006
    %v1008 = vlaneseq
    %v1009 = vshrl.u32 %v1008, 7
    %v1010 = vsub.s32 3, %v1009
    %v1011 = vrot.slane %v994, %v1010
    %v1080 = vunpack.c.l.b16 %v930
    %v1081 = vunpack.c.h.b16 %v930
    %v1082 = vunpack.c.l.b16 %v931
    %v1083 = vunpack.c.h.b16 %v931
    %v1084 = vunpack.c.l.b16 %v932
    %v1085 = vunpack.c.h.b16 %v932
    %v1086 = vunpack.c.l.b16 %v933
    %v1087 = vunpack.c.h.b16 %v933
    %v1088 = vunpack.c.l.b16 %v934
    %v1089 = vunpack.c.h.b16 %v934
    %v1090 = vunpack.c.l.b16 %v935
    %v1091 = vunpack.c.h.b16 %v935
    %v1092 = vunpack.c.l.b16 %v936
    %v1093 = vunpack.c.h.b16 %v936
    %v1094 = vunpack.c.l.b16 %v937
    %v1095 = vunpack.c.h.b16 %v937
    %v1096 = vunpack.c.l.b16 %v938
    %v1097 = vunpack.c.h.b16 %v938
    %v1098 = vunpack.c.l.b16 %v939
    %v1099 = vunpack.c.h.b16 %v939
    %v1100 = vunpack.c.l.b16 %v940
    %v1101 = vunpack.c.h.b16 %v940
    %v1102 = vunpack.c.l.b16 %v941
    %v1103 = vunpack.c.h.b16 %v941
    %v1104 = vunpack.c.l.b16 %v942
    %v1105 = vunpack.c.h.b16 %v942
    %v1106 = vunpack.c.l.b16 %v943
    %v1107 = vunpack.c.h.b16 %v943
    %v1108 = vunpack.c.l.b16 %v944
    %v1109 = vunpack.c.h.b16 %v944
    %v1110 = vunpack.c.l.b16 %v945
    %v1111 = vunpack.c.h.b16 %v945
    %v1112 = vunpack.c.l.b16 %v946
    %v1113 = vunpack.c.h.b16 %v946
    %v1114 = vunpack.c.l.b16 %v947
    %v1115 = vunpack.c.h.b16 %v947
    %v1116 = vunpack.c.l.b16 %v948
    %v1117 = vunpack.c.h.b16 %v948
    %v1118 = vunpack.c.l.b16 %v949
    %v1119 = vunpack.c.h.b16 %v949
    %v1120 = vunpack.c.l.b16 %v950
    %v1121 = vunpack.c.h.b16 %v950
    %v1122 = vunpack.c.l.b16 %v951
    %v1123 = vunpack.c.h.b16 %v951
    %v1124 = vunpack.c.l.b16 %v952
    %v1125 = vunpack.c.h.b16 %v952
    %v1126 = vunpack.c.l.b16 %v953
    %v1127 = vunpack.c.h.b16 %v953
    %v1128 = vunpack.c.l.b16 %v954
    %v1129 = vunpack.c.h.b16 %v954
    %v1130 = vunpack.c.l.b16 %v955
    %v1131 = vunpack.c.h.b16 %v955
    %v1132 = vunpack.c.l.b16 %v956
    %v1133 = vunpack.c.h.b16 %v956
    %v1134 = vunpack.c.l.b16 %v957
    %v1135 = vunpack.c.h.b16 %v957
    %v1136 = vunpack.c.l.b16 %v958
    %v1137 = vunpack.c.h.b16 %v958
    %v1138 = vunpack.c.l.b16 %v959
    %v1139 = vunpack.c.h.b16 %v959
    %v1140 = vunpack.c.l.b16 %v960
    %v1141 = vunpack.c.h.b16 %v960
    %v1142 = vunpack.c.l.b16 %v961
    %v1143 = vunpack.c.h.b16 %v961
    %v1144 = vunpack.c.l.b16 %v962
    %v1145 = vunpack.c.h.b16 %v962
    %v1146 = vunpack.c.l.b16 %v963
    %v1147 = vunpack.c.h.b16 %v963
    %v1148 = vunpack.c.l.b16 %v964
    %v1149 = vunpack.c.h.b16 %v964
    %v1150 = vunpack.c.l.b16 %v965
    %v1151 = vunpack.c.h.b16 %v965
    %v1152 = vunpack.c.l.b16 %v966
    %v1153 = vunpack.c.h.b16 %v966
    %v1154 = vunpack.c.l.b16 %v967
    %v1155 = vunpack.c.h.b16 %v967
    %v1156 = vunpack.c.l.b16 %v968
    %v1157 = vunpack.c.h.b16 %v968
    %v1158 = vunpack.c.l.b16 %v969
    %v1159 = vunpack.c.h.b16 %v969
    %v1160 = vunpack.c.l.b16 %v970
    %v1161 = vunpack.c.h.b16 %v970
    %v1162 = vunpack.c.l.b16 %v971
    %v1163 = vunpack.c.h.b16 %v971
    %v1164 = vunpack.c.l.b16 %v972
    %v1165 = vunpack.c.h.b16 %v972
    %v1166 = vunpack.c.l.b16 %v973
    %v1167 = vunpack.c.h.b16 %v973
    %v1168 = vunpack.c.l.b16 %v974
    %v1169 = vunpack.c.h.b16 %v974
    %v1170 = vunpack.c.l.b16 %v975
    %v1171 = vunpack.c.h.b16 %v975
    %v1172 = vunpack.c.l.b16 %v976
    %v1173 = vunpack.c.h.b16 %v976
    %v1174 = vunpack.c.l.b16 %v977
    %v1175 = vunpack.c.h.b16 %v977
    %v1176 = vunpack.c.l.b16 %v978
    %v1177 = vunpack.c.h.b16 %v978
    %v1178 = vunpack.c.l.b16 %v979
    %v1179 = vunpack.c.h.b16 %v979
    %v1180 = vunpack.c.l.b16 %v980
    %v1181 = vunpack.c.h.b16 %v980
    %v1182 = vunpack.c.l.b16 %v981
    %v1183 = vunpack.c.h.b16 %v981
    %v1184 = vunpack.c.l.b16 %v982
    %v1185 = vunpack.c.h.b16 %v982
    %v1186 = vunpack.c.l.b16 %v983
    %v1187 = vunpack.c.h.b16 %v983
    %v1188 = vunpack.c.l.b16 %v984
    %v1189 = vunpack.c.h.b16 %v984
    %v1190 = vunpack.c.l.b16 %v985
    %v1191 = vunpack.c.h.b16 %v985
    %v1192 = vunpack.c.l.b16 %v986
    %v1193 = vunpack.c.h.b16 %v986
    %v1194 = vunpack.c.l.b16 %v987
    %v1195 = vunpack.c.h.b16 %v987
    %v1196 = vunpack.c.l.b16 %v988
    %v1197 = vunpack.c.h.b16 %v988
    %v1198 = vunpack.c.l.b16 %v989
    %v1199 = vunpack.c.h.b16 %v989
    %v1200 = vunpack.c.l.b16 %v990
    %v1201 = vunpack.c.h.b16 %v990
    %v1202 = vunpack.c.l.b16 %v991
    %v1203 = vunpack.c.h.b16 %v991
    %v1204 = vunpack.c.l.b16 %v992
    %v1205 = vunpack.c.h.b16 %v992
    %v1206 = vunpack.c.l.b16 %v993
    %v1207 = vunpack.c.h.b16 %v993
    %v1208 = vpack.c.b16 %v1084, %v1080
    %v1209 = vpack.c.b16 %v1085, %v1081
    %v1210 = vpack.c.b16 %v1086, %v1082
    %v1211 = vpack.c.b16 %v1087, %v1083
    %v1212 = vpack.c.b16 %v1092, %v1088
    %v1213 = vpack.c.b16 %v1093, %v1089
    %v1214 = vpack.c.b16 %v1094, %v1090
    %v1215 = vpack.c.b16 %v1095, %v1091
    %v1216 = vpack.c.b16 %v1100, %v1096
    %v1217 = vpack.c.b16 %v1101, %v1097
    %v1218 = vpack.c.b16 %v1102, %v1098
    %v1219 = vpack.c.b16 %v1103, %v1099
    %v1220 = vpack.c.b16 %v1108, %v1104
    %v1221 = vpack.c.b16 %v1109, %v1105
    %v1222 = vpack.c.b16 %v1110, %v1106
    %v1223 = vpack.c.b16 %v1111, %v1107
    %v1224 = vpack.c.b16 %v1116, %v1112
    %v1225 = vpack.c.b16 %v1117, %v1113
    %v1226 = vpack.c.b16 %v1118, %v1114
    %v1227 = vpack.c.b16 %v1119, %v1115
    %v1228 = vpack.c.b16 %v1124, %v1120
    %v1229 = vpack.c.b16 %v1125, %v1121
    %v1230 = vpack.c.b16 %v1126, %v1122
    %v1231 = vpack.c.b16 %v1127, %v1123
    %v1232 = vpack.c.b16 %v1132, %v1128
    %v1233 = vpack.c.b16 %v1133, %v1129
    %v1234 = vpack.c.b16 %v1134, %v1130
    %v1235 = vpack.c.b16 %v1135, %v1131
    %v1236 = vpack.c.b16 %v1140, %v1136
    %v1237 = vpack.c.b16 %v1141, %v1137
    %v1238 = vpack.c.b16 %v1142, %v1138
    %v1239 = vpack.c.b16 %v1143, %v1139
    %v1240 = vpack.c.b16 %v1148, %v1144
    %v1241 = vpack.c.b16 %v1149, %v1145
    %v1242 = vpack.c.b16 %v1150, %v1146
    %v1243 = vpack.c.b16 %v1151, %v1147
    %v1244 = vpack.c.b16 %v1156, %v1152
    %v1245 = vpack.c.b16 %v1157, %v1153
    %v1246 = vpack.c.b16 %v1158, %v1154
    %v1247 = vpack.c.b16 %v1159, %v1155
    %v1248 = vpack.c.b16 %v1164, %v1160
    %v1249 = vpack.c.b16 %v1165, %v1161
    %v1250 = vpack.c.b16 %v1166, %v1162
    %v1251 = vpack.c.b16 %v1167, %v1163
    %v1252 = vpack.c.b16 %v1172, %v1168
    %v1253 = vpack.c.b16 %v1173, %v1169
    %v1254 = vpack.c.b16 %v1174, %v1170
    %v1255 = vpack.c.b16 %v1175, %v1171
    %v1256 = vpack.c.b16 %v1180, %v1176
    %v1257 = vpack.c.b16 %v1181, %v1177
    %v1258 = vpack.c.b16 %v1182, %v1178
    %v1259 = vpack.c.b16 %v1183, %v1179
    %v1260 = vpack.c.b16 %v1188, %v1184
    %v1261 = vpack.c.b16 %v1189, %v1185
    %v1262 = vpack.c.b16 %v1190, %v1186
    %v1263 = vpack.c.b16 %v1191, %v1187
    %v1264 = vpack.c.b16 %v1196, %v1192
    %v1265 = vpack.c.b16 %v1197, %v1193
    %v1266 = vpack.c.b16 %v1198, %v1194
    %v1267 = vpack.c.b16 %v1199, %v1195
    %v1268 = vpack.c.b16 %v1204, %v1200
    %v1269 = vpack.c.b16 %v1205, %v1201
    %v1270 = vpack.c.b16 %v1206, %v1202
    %v1271 = vpack.c.b16 %v1207, %v1203
    %1336 = vmatprep.subr.bf16.mxu0 %v1209
    %1337 = vmatpush1.bf16.msra.mxu0 %v1208
    %1338 = vmatprep.subr.bf16.mxu0 %v1213
    %1339 = vmatpush1.bf16.msra.mxu0 %v1212
    %1340 = vmatprep.subr.bf16.mxu0 %v1217
    %1341 = vmatpush1.bf16.msra.mxu0 %v1216
    %1342 = vmatprep.subr.bf16.mxu0 %v1221
    %1343 = vmatpush1.bf16.msra.mxu0 %v1220
    %1344 = vmatprep.subr.bf16.mxu0 %v1225
    %1345 = vmatpush1.bf16.msra.mxu0 %v1224
    %1346 = vmatprep.subr.bf16.mxu0 %v1229
    %1347 = vmatpush1.bf16.msra.mxu0 %v1228
    %1348 = vmatprep.subr.bf16.mxu0 %v1233
    %1349 = vmatpush1.bf16.msra.mxu0 %v1232
    %1350 = vmatprep.subr.bf16.mxu0 %v1237
    %1351 = vmatpush1.bf16.msra.mxu0 %v1236
    %1352 = vmatprep.subr.bf16.mxu0 %v1241
    %1353 = vmatpush1.bf16.msra.mxu0 %v1240
    %1354 = vmatprep.subr.bf16.mxu0 %v1245
    %1355 = vmatpush1.bf16.msra.mxu0 %v1244
    %1356 = vmatprep.subr.bf16.mxu0 %v1249
    %1357 = vmatpush1.bf16.msra.mxu0 %v1248
    %1358 = vmatprep.subr.bf16.mxu0 %v1253
    %1359 = vmatpush1.bf16.msra.mxu0 %v1252
    %1360 = vmatprep.subr.bf16.mxu0 %v1257
    %1361 = vmatpush1.bf16.msra.mxu0 %v1256
    %1362 = vmatprep.subr.bf16.mxu0 %v1261
    %1363 = vmatpush1.bf16.msra.mxu0 %v1260
    %1364 = vmatprep.subr.bf16.mxu0 %v1265
    %1365 = vmatpush1.bf16.msra.mxu0 %v1264
    %1366 = vmatprep.subr.bf16.mxu0 %v1269
    %1367 = vmatpush1.bf16.msra.mxu0 %v1268
    %1368 = vmatprep.mubr.bf16.mxu0 %v915
    %1369 = vmatmul.mubr.bf16.gmra.mrb[0].mxu0 %v914
    %v1370 = vpop.f32.mrb[0].mxu0
    %v1371 = vadd.f32 %v999, %v1370
    %v1372 = vpop.f32.mrb[0].mxu0
    %v1373 = vadd.f32 %v1003, %v1372
    %v1374 = vpop.f32.mrb[0].mxu0
    %v1375 = vadd.f32 %v999, %v1374
    %v1376 = vpop.f32.mrb[0].mxu0
    %v1377 = vadd.f32 %v1003, %v1376
    %1378 = vmatprep.mubr.bf16.mxu0 %v917
    %1379 = vmatmul.mubr.bf16.gmra.mrb[0].mxu0 %v916
    %v1380 = vpop.f32.mrb[0].mxu0
    %v1381 = vadd.f32 %v999, %v1380
    %v1382 = vpop.f32.mrb[0].mxu0
    %v1383 = vadd.f32 %v1003, %v1382
    %v1384 = vpop.f32.mrb[0].mxu0
    %v1385 = vadd.f32 %v999, %v1384
    %v1386 = vpop.f32.mrb[0].mxu0
    %v1387 = vadd.f32 %v1003, %v1386
    %1388 = vdwg.mxu0
    %1389 = vmatprep.subr.bf16.mxu0 %v1211
    %1390 = vmatpush1.bf16.msra.mxu0 %v1210
    %1391 = vmatprep.subr.bf16.mxu0 %v1215
    %1392 = vmatpush1.bf16.msra.mxu0 %v1214
    %1393 = vmatprep.subr.bf16.mxu0 %v1219
    %1394 = vmatpush1.bf16.msra.mxu0 %v1218
    %1395 = vmatprep.subr.bf16.mxu0 %v1223
    %1396 = vmatpush1.bf16.msra.mxu0 %v1222
    %1397 = vmatprep.subr.bf16.mxu0 %v1227
    %1398 = vmatpush1.bf16.msra.mxu0 %v1226
    %1399 = vmatprep.subr.bf16.mxu0 %v1231
    %1400 = vmatpush1.bf16.msra.mxu0 %v1230
    %1401 = vmatprep.subr.bf16.mxu0 %v1235
    %1402 = vmatpush1.bf16.msra.mxu0 %v1234
    %1403 = vmatprep.subr.bf16.mxu0 %v1239
    %1404 = vmatpush1.bf16.msra.mxu0 %v1238
    %1405 = vmatprep.subr.bf16.mxu0 %v1243
    %1406 = vmatpush1.bf16.msra.mxu0 %v1242
    %1407 = vmatprep.subr.bf16.mxu0 %v1247
    %1408 = vmatpush1.bf16.msra.mxu0 %v1246
    %1409 = vmatprep.subr.bf16.mxu0 %v1251
    %1410 = vmatpush1.bf16.msra.mxu0 %v1250
    %1411 = vmatprep.subr.bf16.mxu0 %v1255
    %1412 = vmatpush1.bf16.msra.mxu0 %v1254
    %1413 = vmatprep.subr.bf16.mxu0 %v1259
    %1414 = vmatpush1.bf16.msra.mxu0 %v1258
    %1415 = vmatprep.subr.bf16.mxu0 %v1263
    %1416 = vmatpush1.bf16.msra.mxu0 %v1262
    %1417 = vmatprep.subr.bf16.mxu0 %v1267
    %1418 = vmatpush1.bf16.msra.mxu0 %v1266
    %1419 = vmatprep.subr.bf16.mxu0 %v1271
    %1420 = vmatpush1.bf16.msra.mxu0 %v1270
    %1421 = vmatprep.mubr.bf16.mxu0 %v915
    %1422 = vmatmul.mubr.bf16.gmra.mrb[0].mxu0 %v914
    %v1423 = vpop.f32.mrb[0].mxu0
    %v1424 = vadd.f32 %v1007, %v1423
    %v1425 = vpop.f32.mrb[0].mxu0
    %v1426 = vadd.f32 %v1011, %v1425
    %v1427 = vpop.f32.mrb[0].mxu0
    %v1428 = vadd.f32 %v1007, %v1427
    %v1429 = vpop.f32.mrb[0].mxu0
    %v1430 = vadd.f32 %v1011, %v1429
    %1431 = vmatprep.mubr.bf16.mxu0 %v917
    %1432 = vmatmul.mubr.bf16.gmra.mrb[0].mxu0 %v916
    %v1433 = vpop.f32.mrb[0].mxu0
    %v1434 = vadd.f32 %v1007, %v1433
    %v1435 = vpop.f32.mrb[0].mxu0
    %v1436 = vadd.f32 %v1011, %v1435
    %v1437 = vpop.f32.mrb[0].mxu0
    %v1438 = vadd.f32 %v1007, %v1437
    %v1439 = vpop.f32.mrb[0].mxu0
    %v1440 = vadd.f32 %v1011, %v1439
    %1441 = vdwg.mxu0
    %1442 = vmatprep.subr.bf16.mxu0 %v1209
    %1443 = vmatpush1.bf16.msra.mxu0 %v1208
    %1444 = vmatprep.subr.bf16.mxu0 %v1213
    %1445 = vmatpush1.bf16.msra.mxu0 %v1212
    %1446 = vmatprep.subr.bf16.mxu0 %v1217
    %1447 = vmatpush1.bf16.msra.mxu0 %v1216
    %1448 = vmatprep.subr.bf16.mxu0 %v1221
    %1449 = vmatpush1.bf16.msra.mxu0 %v1220
    %1450 = vmatprep.subr.bf16.mxu0 %v1225
    %1451 = vmatpush1.bf16.msra.mxu0 %v1224
    %1452 = vmatprep.subr.bf16.mxu0 %v1229
    %1453 = vmatpush1.bf16.msra.mxu0 %v1228
    %1454 = vmatprep.subr.bf16.mxu0 %v1233
    %1455 = vmatpush1.bf16.msra.mxu0 %v1232
    %1456 = vmatprep.subr.bf16.mxu0 %v1237
    %1457 = vmatpush1.bf16.msra.mxu0 %v1236
    %1458 = vmatprep.subr.bf16.mxu0 %v1241
    %1459 = vmatpush1.bf16.msra.mxu0 %v1240
    %1460 = vmatprep.subr.bf16.mxu0 %v1245
    %1461 = vmatpush1.bf16.msra.mxu0 %v1244
    %1462 = vmatprep.subr.bf16.mxu0 %v1249
    %1463 = vmatpush1.bf16.msra.mxu0 %v1248
    %1464 = vmatprep.subr.bf16.mxu0 %v1253
    %1465 = vmatpush1.bf16.msra.mxu0 %v1252
    %1466 = vmatprep.subr.bf16.mxu0 %v1257
    %1467 = vmatpush1.bf16.msra.mxu0 %v1256
    %1468 = vmatprep.subr.bf16.mxu0 %v1261
    %1469 = vmatpush1.bf16.msra.mxu0 %v1260
    %1470 = vmatprep.subr.bf16.mxu0 %v1265
    %1471 = vmatpush1.bf16.msra.mxu0 %v1264
    %1472 = vmatprep.subr.bf16.mxu0 %v1269
    %1473 = vmatpush1.bf16.msra.mxu0 %v1268
    %1474 = vmatprep.mubr.bf16.mxu0 %v927
    %1475 = vmatmul.mubr.bf16.gmra.mrb[0].mxu0 %v926
    %v1476 = vpop.f32.mrb[0].mxu0
    %v1477 = vadd.f32 %v999, %v1476
    %v1478 = vpop.f32.mrb[0].mxu0
    %v1479 = vadd.f32 %v1003, %v1478
    %v1480 = vpop.f32.mrb[0].mxu0
    %v1481 = vadd.f32 %v999, %v1480
    %v1482 = vpop.f32.mrb[0].mxu0
    %v1483 = vadd.f32 %v1003, %v1482
    %1484 = vmatprep.mubr.bf16.mxu0 %v929
    %1485 = vmatmul.mubr.bf16.gmra.mrb[0].mxu0 %v928
    %v1486 = vpop.f32.mrb[0].mxu0
    %v1487 = vadd.f32 %v999, %v1486
    %v1488 = vpop.f32.mrb[0].mxu0
    %v1489 = vadd.f32 %v1003, %v1488
    %v1490 = vpop.f32.mrb[0].mxu0
    %v1491 = vadd.f32 %v999, %v1490
    %v1492 = vpop.f32.mrb[0].mxu0
    %v1493 = vadd.f32 %v1003, %v1492
    %1494 = vdwg.mxu0
    %1495 = vmatprep.subr.bf16.mxu0 %v1211
    %1496 = vmatpush1.bf16.msra.mxu0 %v1210
    %1497 = vmatprep.subr.bf16.mxu0 %v1215
    %1498 = vmatpush1.bf16.msra.mxu0 %v1214
    %1499 = vmatprep.subr.bf16.mxu0 %v1219
    %1500 = vmatpush1.bf16.msra.mxu0 %v1218
    %1501 = vmatprep.subr.bf16.mxu0 %v1223
    %1502 = vmatpush1.bf16.msra.mxu0 %v1222
    %1503 = vmatprep.subr.bf16.mxu0 %v1227
    %1504 = vmatpush1.bf16.msra.mxu0 %v1226
    %1505 = vmatprep.subr.bf16.mxu0 %v1231
    %1506 = vmatpush1.bf16.msra.mxu0 %v1230
    %1507 = vmatprep.subr.bf16.mxu0 %v1235
    %1508 = vmatpush1.bf16.msra.mxu0 %v1234
    %1509 = vmatprep.subr.bf16.mxu0 %v1239
    %1510 = vmatpush1.bf16.msra.mxu0 %v1238
    %1511 = vmatprep.subr.bf16.mxu0 %v1243
    %1512 = vmatpush1.bf16.msra.mxu0 %v1242
    %1513 = vmatprep.subr.bf16.mxu0 %v1247
    %1514 = vmatpush1.bf16.msra.mxu0 %v1246
    %1515 = vmatprep.subr.bf16.mxu0 %v1251
    %1516 = vmatpush1.bf16.msra.mxu0 %v1250
    %1517 = vmatprep.subr.bf16.mxu0 %v1255
    %1518 = vmatpush1.bf16.msra.mxu0 %v1254
    %1519 = vmatprep.subr.bf16.mxu0 %v1259
    %1520 = vmatpush1.bf16.msra.mxu0 %v1258
    %1521 = vmatprep.subr.bf16.mxu0 %v1263
    %1522 = vmatpush1.bf16.msra.mxu0 %v1262
    %1523 = vmatprep.subr.bf16.mxu0 %v1267
    %1524 = vmatpush1.bf16.msra.mxu0 %v1266
    %1525 = vmatprep.subr.bf16.mxu0 %v1271
    %1526 = vmatpush1.bf16.msra.mxu0 %v1270
    %1527 = vmatprep.mubr.bf16.mxu0 %v927
    %1528 = vmatmul.mubr.bf16.gmra.mrb[0].mxu0 %v926
    %v1529 = vpop.f32.mrb[0].mxu0
    %v1530 = vadd.f32 %v1007, %v1529
    %v1531 = vpop.f32.mrb[0].mxu0
    %v1532 = vadd.f32 %v1011, %v1531
    %v1533 = vpop.f32.mrb[0].mxu0
    %v1534 = vadd.f32 %v1007, %v1533
    %v1535 = vpop.f32.mrb[0].mxu0
    %v1536 = vadd.f32 %v1011, %v1535
    %1537 = vmatprep.mubr.bf16.mxu0 %v929
    %1538 = vmatmul.mubr.bf16.gmra.mrb[0].mxu0 %v928
    %v1539 = vpop.f32.mrb[0].mxu0
    %v1540 = vadd.f32 %v1007, %v1539
    %v1541 = vpop.f32.mrb[0].mxu0
    %v1542 = vadd.f32 %v1011, %v1541
    %v1543 = vpop.f32.mrb[0].mxu0
    %v1544 = vadd.f32 %v1007, %v1543
    %v1545 = vpop.f32.mrb[0].mxu0
    %v1546 = vadd.f32 %v1011, %v1545
    %1547 = vdwg.mxu0
    %v1548 = vmax.f32 %v1371, 0.0
    %v1549 = vmax.f32 %v1373, 0.0
    %v1550 = vmax.f32 %v1424, 0.0
    %v1551 = vmax.f32 %v1426, 0.0
    %v1552 = vmax.f32 %v1375, 0.0
    %v1553 = vmax.f32 %v1377, 0.0
    %v1554 = vmax.f32 %v1428, 0.0
    %v1555 = vmax.f32 %v1430, 0.0
    %v1556 = vmax.f32 %v1381, 0.0
    %v1557 = vmax.f32 %v1383, 0.0
    %v1558 = vmax.f32 %v1434, 0.0
    %v1559 = vmax.f32 %v1436, 0.0
    %v1560 = vmax.f32 %v1385, 0.0
    %v1561 = vmax.f32 %v1387, 0.0
    %v1562 = vmax.f32 %v1438, 0.0
    %v1563 = vmax.f32 %v1440, 0.0
    %v1564 = vpack.c.bf16 %v1552, %v1548
    %v1565 = vpack.c.bf16 %v1553, %v1549
    %v1566 = vpack.c.bf16 %v1554, %v1550
    %v1567 = vpack.c.bf16 %v1555, %v1551
    %v1568 = vpack.c.bf16 %v1560, %v1556
    %v1569 = vpack.c.bf16 %v1561, %v1557
    %v1570 = vpack.c.bf16 %v1562, %v1558
    %v1571 = vpack.c.bf16 %v1563, %v1559
    %v1572 = vmax.f32 %v1477, 0.0
    %v1573 = vmax.f32 %v1479, 0.0
    %v1574 = vmax.f32 %v1530, 0.0
    %v1575 = vmax.f32 %v1532, 0.0
    %v1576 = vmax.f32 %v1481, 0.0
    %v1577 = vmax.f32 %v1483, 0.0
    %v1578 = vmax.f32 %v1534, 0.0
    %v1579 = vmax.f32 %v1536, 0.0
    %v1580 = vmax.f32 %v1487, 0.0
    %v1581 = vmax.f32 %v1489, 0.0
    %v1582 = vmax.f32 %v1540, 0.0
    %v1583 = vmax.f32 %v1542, 0.0
    %v1584 = vmax.f32 %v1491, 0.0
    %v1585 = vmax.f32 %v1493, 0.0
    %v1586 = vmax.f32 %v1544, 0.0
    %v1587 = vmax.f32 %v1546, 0.0
    %v1588 = vpack.c.bf16 %v1576, %v1572
    %v1589 = vpack.c.bf16 %v1577, %v1573
    %v1590 = vpack.c.bf16 %v1578, %v1574
    %v1591 = vpack.c.bf16 %v1579, %v1575
    %v1592 = vpack.c.bf16 %v1584, %v1580
    %v1593 = vpack.c.bf16 %v1585, %v1581
    %v1594 = vpack.c.bf16 %v1586, %v1582
    %v1595 = vpack.c.bf16 %v1587, %v1583
    %v1596 = vld [vmem:[#allocation17] sm:$0xff]
    %v1597 = vld [vmem:[#allocation17 + $0x8] sm:$0xff]
    %v1598 = vld [vmem:[#allocation17 + $0x10] sm:$0xff]
    %v1599 = vld [vmem:[#allocation17 + $0x18] sm:$0xff]
    %v1600 = vld [vmem:[#allocation17 + $0x20] sm:$0xff]
    %v1601 = vld [vmem:[#allocation17 + $0x28] sm:$0xff]
    %v1602 = vld [vmem:[#allocation17 + $0x30] sm:$0xff]
    %v1603 = vld [vmem:[#allocation17 + $0x38] sm:$0xff]
    %v1604 = vld [vmem:[#allocation17 + $0x40] sm:$0xff]
    %v1605 = vld [vmem:[#allocation17 + $0x48] sm:$0xff]
    %v1606 = vld [vmem:[#allocation17 + $0x50] sm:$0xff]
    %v1607 = vld [vmem:[#allocation17 + $0x58] sm:$0xff]
    %v1608 = vld [vmem:[#allocation17 + $0x60] sm:$0xff]
    %v1609 = vld [vmem:[#allocation17 + $0x68] sm:$0xff]
    %v1610 = vld [vmem:[#allocation17 + $0x70] sm:$0xff]
    %v1611 = vld [vmem:[#allocation17 + $0x78] sm:$0xff]
    %v1612 = vld [vmem:[#allocation17 + $0x80] sm:$0xff]
    %v1613 = vld [vmem:[#allocation17 + $0x88] sm:$0xff]
    %v1614 = vld [vmem:[#allocation17 + $0x90] sm:$0xff]
    %v1615 = vld [vmem:[#allocation17 + $0x98] sm:$0xff]
    %v1616 = vld [vmem:[#allocation17 + $0xa0] sm:$0xff]
    %v1617 = vld [vmem:[#allocation17 + $0xa8] sm:$0xff]
    %v1618 = vld [vmem:[#allocation17 + $0xb0] sm:$0xff]
    %v1619 = vld [vmem:[#allocation17 + $0xb8] sm:$0xff]
    %v1620 = vld [vmem:[#allocation17 + $0xc0] sm:$0xff]
    %v1621 = vld [vmem:[#allocation17 + $0xc8] sm:$0xff]
    %v1622 = vld [vmem:[#allocation17 + $0xd0] sm:$0xff]
    %v1623 = vld [vmem:[#allocation17 + $0xd8] sm:$0xff]
    %v1624 = vld [vmem:[#allocation17 + $0xe0] sm:$0xff]
    %v1625 = vld [vmem:[#allocation17 + $0xe8] sm:$0xff]
    %v1626 = vld [vmem:[#allocation17 + $0xf0] sm:$0xff]
    %v1627 = vld [vmem:[#allocation17 + $0xf8] sm:$0xff]
    %v1628 = vld [vmem:[#allocation17 + $0x100] sm:$0xff]
    %v1629 = vld [vmem:[#allocation17 + $0x108] sm:$0xff]
    %v1630 = vld [vmem:[#allocation17 + $0x110] sm:$0xff]
    %v1631 = vld [vmem:[#allocation17 + $0x118] sm:$0xff]
    %v1632 = vld [vmem:[#allocation17 + $0x120] sm:$0xff]
    %v1633 = vld [vmem:[#allocation17 + $0x128] sm:$0xff]
    %v1634 = vld [vmem:[#allocation17 + $0x130] sm:$0xff]
    %v1635 = vld [vmem:[#allocation17 + $0x138] sm:$0xff]
    %v1636 = vld [vmem:[#allocation17 + $0x140] sm:$0xff]
    %v1637 = vld [vmem:[#allocation17 + $0x148] sm:$0xff]
    %v1638 = vld [vmem:[#allocation17 + $0x150] sm:$0xff]
    %v1639 = vld [vmem:[#allocation17 + $0x158] sm:$0xff]
    %v1640 = vld [vmem:[#allocation17 + $0x160] sm:$0xff]
    %v1641 = vld [vmem:[#allocation17 + $0x168] sm:$0xff]
    %v1642 = vld [vmem:[#allocation17 + $0x170] sm:$0xff]
    %v1643 = vld [vmem:[#allocation17 + $0x178] sm:$0xff]
    %v1644 = vld [vmem:[#allocation17 + $0x180] sm:$0xff]
    %v1645 = vld [vmem:[#allocation17 + $0x188] sm:$0xff]
    %v1646 = vld [vmem:[#allocation17 + $0x190] sm:$0xff]
    %v1647 = vld [vmem:[#allocation17 + $0x198] sm:$0xff]
    %v1648 = vld [vmem:[#allocation17 + $0x1a0] sm:$0xff]
    %v1649 = vld [vmem:[#allocation17 + $0x1a8] sm:$0xff]
    %v1650 = vld [vmem:[#allocation17 + $0x1b0] sm:$0xff]
    %v1651 = vld [vmem:[#allocation17 + $0x1b8] sm:$0xff]
    %v1652 = vld [vmem:[#allocation17 + $0x1c0] sm:$0xff]
    %v1653 = vld [vmem:[#allocation17 + $0x1c8] sm:$0xff]
    %v1654 = vld [vmem:[#allocation17 + $0x1d0] sm:$0xff]
    %v1655 = vld [vmem:[#allocation17 + $0x1d8] sm:$0xff]
    %v1656 = vld [vmem:[#allocation17 + $0x1e0] sm:$0xff]
    %v1657 = vld [vmem:[#allocation17 + $0x1e8] sm:$0xff]
    %v1658 = vld [vmem:[#allocation17 + $0x1f0] sm:$0xff]
    %v1659 = vld [vmem:[#allocation17 + $0x1f8] sm:$0xff]
    %v1660 = vld [vmem:[#allocation19] sm:$0x3]
    %v1662 = vlaneseq
    %v1663 = vshrl.u32 %v1662, 7
    %v1664 = vsub.s32 0, %v1663
    %v1665 = vrot.slane %v1660, %v1664
    %v1666 = vlaneseq
    %v1667 = vshrl.u32 %v1666, 7
    %v1668 = vsub.s32 1, %v1667
    %v1669 = vrot.slane %v1660, %v1668
    %v1736 = vunpack.c.l.b16 %v1596
    %v1737 = vunpack.c.h.b16 %v1596
    %v1738 = vunpack.c.l.b16 %v1597
    %v1739 = vunpack.c.h.b16 %v1597
    %v1740 = vunpack.c.l.b16 %v1598
    %v1741 = vunpack.c.h.b16 %v1598
    %v1742 = vunpack.c.l.b16 %v1599
    %v1743 = vunpack.c.h.b16 %v1599
    %v1744 = vunpack.c.l.b16 %v1600
    %v1745 = vunpack.c.h.b16 %v1600
    %v1746 = vunpack.c.l.b16 %v1601
    %v1747 = vunpack.c.h.b16 %v1601
    %v1748 = vunpack.c.l.b16 %v1602
    %v1749 = vunpack.c.h.b16 %v1602
    %v1750 = vunpack.c.l.b16 %v1603
    %v1751 = vunpack.c.h.b16 %v1603
    %v1752 = vunpack.c.l.b16 %v1604
    %v1753 = vunpack.c.h.b16 %v1604
    %v1754 = vunpack.c.l.b16 %v1605
    %v1755 = vunpack.c.h.b16 %v1605
    %v1756 = vunpack.c.l.b16 %v1606
    %v1757 = vunpack.c.h.b16 %v1606
    %v1758 = vunpack.c.l.b16 %v1607
    %v1759 = vunpack.c.h.b16 %v1607
    %v1760 = vunpack.c.l.b16 %v1608
    %v1761 = vunpack.c.h.b16 %v1608
    %v1762 = vunpack.c.l.b16 %v1609
    %v1763 = vunpack.c.h.b16 %v1609
    %v1764 = vunpack.c.l.b16 %v1610
    %v1765 = vunpack.c.h.b16 %v1610
    %v1766 = vunpack.c.l.b16 %v1611
    %v1767 = vunpack.c.h.b16 %v1611
    %v1768 = vunpack.c.l.b16 %v1612
    %v1769 = vunpack.c.h.b16 %v1612
    %v1770 = vunpack.c.l.b16 %v1613
    %v1771 = vunpack.c.h.b16 %v1613
    %v1772 = vunpack.c.l.b16 %v1614
    %v1773 = vunpack.c.h.b16 %v1614
    %v1774 = vunpack.c.l.b16 %v1615
    %v1775 = vunpack.c.h.b16 %v1615
    %v1776 = vunpack.c.l.b16 %v1616
    %v1777 = vunpack.c.h.b16 %v1616
    %v1778 = vunpack.c.l.b16 %v1617
    %v1779 = vunpack.c.h.b16 %v1617
    %v1780 = vunpack.c.l.b16 %v1618
    %v1781 = vunpack.c.h.b16 %v1618
    %v1782 = vunpack.c.l.b16 %v1619
    %v1783 = vunpack.c.h.b16 %v1619
    %v1784 = vunpack.c.l.b16 %v1620
    %v1785 = vunpack.c.h.b16 %v1620
    %v1786 = vunpack.c.l.b16 %v1621
    %v1787 = vunpack.c.h.b16 %v1621
    %v1788 = vunpack.c.l.b16 %v1622
    %v1789 = vunpack.c.h.b16 %v1622
    %v1790 = vunpack.c.l.b16 %v1623
    %v1791 = vunpack.c.h.b16 %v1623
    %v1792 = vunpack.c.l.b16 %v1624
    %v1793 = vunpack.c.h.b16 %v1624
    %v1794 = vunpack.c.l.b16 %v1625
    %v1795 = vunpack.c.h.b16 %v1625
    %v1796 = vunpack.c.l.b16 %v1626
    %v1797 = vunpack.c.h.b16 %v1626
    %v1798 = vunpack.c.l.b16 %v1627
    %v1799 = vunpack.c.h.b16 %v1627
    %v1800 = vunpack.c.l.b16 %v1628
    %v1801 = vunpack.c.h.b16 %v1628
    %v1802 = vunpack.c.l.b16 %v1629
    %v1803 = vunpack.c.h.b16 %v1629
    %v1804 = vunpack.c.l.b16 %v1630
    %v1805 = vunpack.c.h.b16 %v1630
    %v1806 = vunpack.c.l.b16 %v1631
    %v1807 = vunpack.c.h.b16 %v1631
    %v1808 = vunpack.c.l.b16 %v1632
    %v1809 = vunpack.c.h.b16 %v1632
    %v1810 = vunpack.c.l.b16 %v1633
    %v1811 = vunpack.c.h.b16 %v1633
    %v1812 = vunpack.c.l.b16 %v1634
    %v1813 = vunpack.c.h.b16 %v1634
    %v1814 = vunpack.c.l.b16 %v1635
    %v1815 = vunpack.c.h.b16 %v1635
    %v1816 = vunpack.c.l.b16 %v1636
    %v1817 = vunpack.c.h.b16 %v1636
    %v1818 = vunpack.c.l.b16 %v1637
    %v1819 = vunpack.c.h.b16 %v1637
    %v1820 = vunpack.c.l.b16 %v1638
    %v1821 = vunpack.c.h.b16 %v1638
    %v1822 = vunpack.c.l.b16 %v1639
    %v1823 = vunpack.c.h.b16 %v1639
    %v1824 = vunpack.c.l.b16 %v1640
    %v1825 = vunpack.c.h.b16 %v1640
    %v1826 = vunpack.c.l.b16 %v1641
    %v1827 = vunpack.c.h.b16 %v1641
    %v1828 = vunpack.c.l.b16 %v1642
    %v1829 = vunpack.c.h.b16 %v1642
    %v1830 = vunpack.c.l.b16 %v1643
    %v1831 = vunpack.c.h.b16 %v1643
    %v1832 = vunpack.c.l.b16 %v1644
    %v1833 = vunpack.c.h.b16 %v1644
    %v1834 = vunpack.c.l.b16 %v1645
    %v1835 = vunpack.c.h.b16 %v1645
    %v1836 = vunpack.c.l.b16 %v1646
    %v1837 = vunpack.c.h.b16 %v1646
    %v1838 = vunpack.c.l.b16 %v1647
    %v1839 = vunpack.c.h.b16 %v1647
    %v1840 = vunpack.c.l.b16 %v1648
    %v1841 = vunpack.c.h.b16 %v1648
    %v1842 = vunpack.c.l.b16 %v1649
    %v1843 = vunpack.c.h.b16 %v1649
    %v1844 = vunpack.c.l.b16 %v1650
    %v1845 = vunpack.c.h.b16 %v1650
    %v1846 = vunpack.c.l.b16 %v1651
    %v1847 = vunpack.c.h.b16 %v1651
    %v1848 = vunpack.c.l.b16 %v1652
    %v1849 = vunpack.c.h.b16 %v1652
    %v1850 = vunpack.c.l.b16 %v1653
    %v1851 = vunpack.c.h.b16 %v1653
    %v1852 = vunpack.c.l.b16 %v1654
    %v1853 = vunpack.c.h.b16 %v1654
    %v1854 = vunpack.c.l.b16 %v1655
    %v1855 = vunpack.c.h.b16 %v1655
    %v1856 = vunpack.c.l.b16 %v1656
    %v1857 = vunpack.c.h.b16 %v1656
    %v1858 = vunpack.c.l.b16 %v1657
    %v1859 = vunpack.c.h.b16 %v1657
    %v1860 = vunpack.c.l.b16 %v1658
    %v1861 = vunpack.c.h.b16 %v1658
    %v1862 = vunpack.c.l.b16 %v1659
    %v1863 = vunpack.c.h.b16 %v1659
    %v1864 = vpack.c.b16 %v1738, %v1736
    %v1865 = vpack.c.b16 %v1739, %v1737
    %v1866 = vpack.c.b16 %v1742, %v1740
    %v1867 = vpack.c.b16 %v1743, %v1741
    %v1868 = vpack.c.b16 %v1746, %v1744
    %v1869 = vpack.c.b16 %v1747, %v1745
    %v1870 = vpack.c.b16 %v1750, %v1748
    %v1871 = vpack.c.b16 %v1751, %v1749
    %v1872 = vpack.c.b16 %v1754, %v1752
    %v1873 = vpack.c.b16 %v1755, %v1753
    %v1874 = vpack.c.b16 %v1758, %v1756
    %v1875 = vpack.c.b16 %v1759, %v1757
    %v1876 = vpack.c.b16 %v1762, %v1760
    %v1877 = vpack.c.b16 %v1763, %v1761
    %v1878 = vpack.c.b16 %v1766, %v1764
    %v1879 = vpack.c.b16 %v1767, %v1765
    %v1880 = vpack.c.b16 %v1770, %v1768
    %v1881 = vpack.c.b16 %v1771, %v1769
    %v1882 = vpack.c.b16 %v1774, %v1772
    %v1883 = vpack.c.b16 %v1775, %v1773
    %v1884 = vpack.c.b16 %v1778, %v1776
    %v1885 = vpack.c.b16 %v1779, %v1777
    %v1886 = vpack.c.b16 %v1782, %v1780
    %v1887 = vpack.c.b16 %v1783, %v1781
    %v1888 = vpack.c.b16 %v1786, %v1784
    %v1889 = vpack.c.b16 %v1787, %v1785
    %v1890 = vpack.c.b16 %v1790, %v1788
    %v1891 = vpack.c.b16 %v1791, %v1789
    %v1892 = vpack.c.b16 %v1794, %v1792
    %v1893 = vpack.c.b16 %v1795, %v1793
    %v1894 = vpack.c.b16 %v1798, %v1796
    %v1895 = vpack.c.b16 %v1799, %v1797
    %v1896 = vpack.c.b16 %v1802, %v1800
    %v1897 = vpack.c.b16 %v1803, %v1801
    %v1898 = vpack.c.b16 %v1806, %v1804
    %v1899 = vpack.c.b16 %v1807, %v1805
    %v1900 = vpack.c.b16 %v1810, %v1808
    %v1901 = vpack.c.b16 %v1811, %v1809
    %v1902 = vpack.c.b16 %v1814, %v1812
    %v1903 = vpack.c.b16 %v1815, %v1813
    %v1904 = vpack.c.b16 %v1818, %v1816
    %v1905 = vpack.c.b16 %v1819, %v1817
    %v1906 = vpack.c.b16 %v1822, %v1820
    %v1907 = vpack.c.b16 %v1823, %v1821
    %v1908 = vpack.c.b16 %v1826, %v1824
    %v1909 = vpack.c.b16 %v1827, %v1825
    %v1910 = vpack.c.b16 %v1830, %v1828
    %v1911 = vpack.c.b16 %v1831, %v1829
    %v1912 = vpack.c.b16 %v1834, %v1832
    %v1913 = vpack.c.b16 %v1835, %v1833
    %v1914 = vpack.c.b16 %v1838, %v1836
    %v1915 = vpack.c.b16 %v1839, %v1837
    %v1916 = vpack.c.b16 %v1842, %v1840
    %v1917 = vpack.c.b16 %v1843, %v1841
    %v1918 = vpack.c.b16 %v1846, %v1844
    %v1919 = vpack.c.b16 %v1847, %v1845
    %v1920 = vpack.c.b16 %v1850, %v1848
    %v1921 = vpack.c.b16 %v1851, %v1849
    %v1922 = vpack.c.b16 %v1854, %v1852
    %v1923 = vpack.c.b16 %v1855, %v1853
    %v1924 = vpack.c.b16 %v1858, %v1856
    %v1925 = vpack.c.b16 %v1859, %v1857
    %v1926 = vpack.c.b16 %v1862, %v1860
    %v1927 = vpack.c.b16 %v1863, %v1861
    %1992 = vmatprep.subr.bf16.mxu0 %v1865
    %1993 = vmatpush1.bf16.msra.mxu0 %v1864
    %1994 = vmatprep.subr.bf16.mxu0 %v1867
    %1995 = vmatpush1.bf16.msra.mxu0 %v1866
    %1996 = vmatprep.subr.bf16.mxu0 %v1869
    %1997 = vmatpush1.bf16.msra.mxu0 %v1868
    %1998 = vmatprep.subr.bf16.mxu0 %v1871
    %1999 = vmatpush1.bf16.msra.mxu0 %v1870
    %2000 = vmatprep.subr.bf16.mxu0 %v1873
    %2001 = vmatpush1.bf16.msra.mxu0 %v1872
    %2002 = vmatprep.subr.bf16.mxu0 %v1875
    %2003 = vmatpush1.bf16.msra.mxu0 %v1874
    %2004 = vmatprep.subr.bf16.mxu0 %v1877
    %2005 = vmatpush1.bf16.msra.mxu0 %v1876
    %2006 = vmatprep.subr.bf16.mxu0 %v1879
    %2007 = vmatpush1.bf16.msra.mxu0 %v1878
    %2008 = vmatprep.subr.bf16.mxu0 %v1881
    %2009 = vmatpush1.bf16.msra.mxu0 %v1880
    %2010 = vmatprep.subr.bf16.mxu0 %v1883
    %2011 = vmatpush1.bf16.msra.mxu0 %v1882
    %2012 = vmatprep.subr.bf16.mxu0 %v1885
    %2013 = vmatpush1.bf16.msra.mxu0 %v1884
    %2014 = vmatprep.subr.bf16.mxu0 %v1887
    %2015 = vmatpush1.bf16.msra.mxu0 %v1886
    %2016 = vmatprep.subr.bf16.mxu0 %v1889
    %2017 = vmatpush1.bf16.msra.mxu0 %v1888
    %2018 = vmatprep.subr.bf16.mxu0 %v1891
    %2019 = vmatpush1.bf16.msra.mxu0 %v1890
    %2020 = vmatprep.subr.bf16.mxu0 %v1893
    %2021 = vmatpush1.bf16.msra.mxu0 %v1892
    %2022 = vmatprep.subr.bf16.mxu0 %v1895
    %2023 = vmatpush1.bf16.msra.mxu0 %v1894
    %2024 = vmatprep.mubr.bf16.mxu0 %v1565
    %2025 = vmatmul.mubr.bf16.gmra.mrb[0].mxu0 %v1564
    %v2026 = vpop.f32.mrb[0].mxu0
    %v2027 = vadd.f32 %v1665, %v2026
    %v2028 = vpop.f32.mrb[0].mxu0
    %v2029 = vadd.f32 %v1669, %v2028
    %v2030 = vpop.f32.mrb[0].mxu0
    %v2031 = vadd.f32 %v1665, %v2030
    %v2032 = vpop.f32.mrb[0].mxu0
    %v2033 = vadd.f32 %v1669, %v2032
    %2034 = vmatprep.mubr.bf16.mxu0 %v1569
    %2035 = vmatmul.mubr.bf16.gmra.mrb[0].mxu0 %v1568
    %v2036 = vpop.f32.mrb[0].mxu0
    %v2037 = vadd.f32 %v1665, %v2036
    %v2038 = vpop.f32.mrb[0].mxu0
    %v2039 = vadd.f32 %v1669, %v2038
    %v2040 = vpop.f32.mrb[0].mxu0
    %v2041 = vadd.f32 %v1665, %v2040
    %v2042 = vpop.f32.mrb[0].mxu0
    %v2043 = vadd.f32 %v1669, %v2042
    %2044 = vdwg.mxu0
    %2045 = vmatprep.subr.bf16.mxu0 %v1897
    %2046 = vmatpush1.bf16.msra.mxu0 %v1896
    %2047 = vmatprep.subr.bf16.mxu0 %v1899
    %2048 = vmatpush1.bf16.msra.mxu0 %v1898
    %2049 = vmatprep.subr.bf16.mxu0 %v1901
    %2050 = vmatpush1.bf16.msra.mxu0 %v1900
    %2051 = vmatprep.subr.bf16.mxu0 %v1903
    %2052 = vmatpush1.bf16.msra.mxu0 %v1902
    %2053 = vmatprep.subr.bf16.mxu0 %v1905
    %2054 = vmatpush1.bf16.msra.mxu0 %v1904
    %2055 = vmatprep.subr.bf16.mxu0 %v1907
    %2056 = vmatpush1.bf16.msra.mxu0 %v1906
    %2057 = vmatprep.subr.bf16.mxu0 %v1909
    %2058 = vmatpush1.bf16.msra.mxu0 %v1908
    %2059 = vmatprep.subr.bf16.mxu0 %v1911
    %2060 = vmatpush1.bf16.msra.mxu0 %v1910
    %2061 = vmatprep.subr.bf16.mxu0 %v1913
    %2062 = vmatpush1.bf16.msra.mxu0 %v1912
    %2063 = vmatprep.subr.bf16.mxu0 %v1915
    %2064 = vmatpush1.bf16.msra.mxu0 %v1914
    %2065 = vmatprep.subr.bf16.mxu0 %v1917
    %2066 = vmatpush1.bf16.msra.mxu0 %v1916
    %2067 = vmatprep.subr.bf16.mxu0 %v1919
    %2068 = vmatpush1.bf16.msra.mxu0 %v1918
    %2069 = vmatprep.subr.bf16.mxu0 %v1921
    %2070 = vmatpush1.bf16.msra.mxu0 %v1920
    %2071 = vmatprep.subr.bf16.mxu0 %v1923
    %2072 = vmatpush1.bf16.msra.mxu0 %v1922
    %2073 = vmatprep.subr.bf16.mxu0 %v1925
    %2074 = vmatpush1.bf16.msra.mxu0 %v1924
    %2075 = vmatprep.subr.bf16.mxu0 %v1927
    %2076 = vmatpush1.bf16.msra.mxu0 %v1926
    %2077 = vmatprep.mubr.bf16.mxu0 %v1567
    %2078 = vmatmul.mubr.bf16.gmra.mrb[0].mxu0 %v1566
    %v2079 = vpop.f32.mrb[0].mxu0
    %v2080 = vadd.f32 %v2027, %v2079
    %v2081 = vpop.f32.mrb[0].mxu0
    %v2082 = vadd.f32 %v2029, %v2081
    %v2083 = vpop.f32.mrb[0].mxu0
    %v2084 = vadd.f32 %v2031, %v2083
    %v2085 = vpop.f32.mrb[0].mxu0
    %v2086 = vadd.f32 %v2033, %v2085
    %2087 = vmatprep.mubr.bf16.mxu0 %v1571
    %2088 = vmatmul.mubr.bf16.gmra.mrb[0].mxu0 %v1570
    %v2089 = vpop.f32.mrb[0].mxu0
    %v2090 = vadd.f32 %v2037, %v2089
    %v2091 = vpop.f32.mrb[0].mxu0
    %v2092 = vadd.f32 %v2039, %v2091
    %v2093 = vpop.f32.mrb[0].mxu0
    %v2094 = vadd.f32 %v2041, %v2093
    %v2095 = vpop.f32.mrb[0].mxu0
    %v2096 = vadd.f32 %v2043, %v2095
    %2097 = vdwg.mxu0
    %2098 = vmatprep.subr.bf16.mxu0 %v1865
    %2099 = vmatpush1.bf16.msra.mxu0 %v1864
    %2100 = vmatprep.subr.bf16.mxu0 %v1867
    %2101 = vmatpush1.bf16.msra.mxu0 %v1866
    %2102 = vmatprep.subr.bf16.mxu0 %v1869
    %2103 = vmatpush1.bf16.msra.mxu0 %v1868
    %2104 = vmatprep.subr.bf16.mxu0 %v1871
    %2105 = vmatpush1.bf16.msra.mxu0 %v1870
    %2106 = vmatprep.subr.bf16.mxu0 %v1873
    %2107 = vmatpush1.bf16.msra.mxu0 %v1872
    %2108 = vmatprep.subr.bf16.mxu0 %v1875
    %2109 = vmatpush1.bf16.msra.mxu0 %v1874
    %2110 = vmatprep.subr.bf16.mxu0 %v1877
    %2111 = vmatpush1.bf16.msra.mxu0 %v1876
    %2112 = vmatprep.subr.bf16.mxu0 %v1879
    %2113 = vmatpush1.bf16.msra.mxu0 %v1878
    %2114 = vmatprep.subr.bf16.mxu0 %v1881
    %2115 = vmatpush1.bf16.msra.mxu0 %v1880
    %2116 = vmatprep.subr.bf16.mxu0 %v1883
    %2117 = vmatpush1.bf16.msra.mxu0 %v1882
    %2118 = vmatprep.subr.bf16.mxu0 %v1885
    %2119 = vmatpush1.bf16.msra.mxu0 %v1884
    %2120 = vmatprep.subr.bf16.mxu0 %v1887
    %2121 = vmatpush1.bf16.msra.mxu0 %v1886
    %2122 = vmatprep.subr.bf16.mxu0 %v1889
    %2123 = vmatpush1.bf16.msra.mxu0 %v1888
    %2124 = vmatprep.subr.bf16.mxu0 %v1891
    %2125 = vmatpush1.bf16.msra.mxu0 %v1890
    %2126 = vmatprep.subr.bf16.mxu0 %v1893
    %2127 = vmatpush1.bf16.msra.mxu0 %v1892
    %2128 = vmatprep.subr.bf16.mxu0 %v1895
    %2129 = vmatpush1.bf16.msra.mxu0 %v1894
    %2130 = vmatprep.mubr.bf16.mxu0 %v1589
    %2131 = vmatmul.mubr.bf16.gmra.mrb[0].mxu0 %v1588
    %v2132 = vpop.f32.mrb[0].mxu0
    %v2133 = vadd.f32 %v1665, %v2132
    %v2134 = vpop.f32.mrb[0].mxu0
    %v2135 = vadd.f32 %v1669, %v2134
    %v2136 = vpop.f32.mrb[0].mxu0
    %v2137 = vadd.f32 %v1665, %v2136
    %v2138 = vpop.f32.mrb[0].mxu0
    %v2139 = vadd.f32 %v1669, %v2138
    %2140 = vmatprep.mubr.bf16.mxu0 %v1593
    %2141 = vmatmul.mubr.bf16.gmra.mrb[0].mxu0 %v1592
    %v2142 = vpop.f32.mrb[0].mxu0
    %v2143 = vadd.f32 %v1665, %v2142
    %v2144 = vpop.f32.mrb[0].mxu0
    %v2145 = vadd.f32 %v1669, %v2144
    %v2146 = vpop.f32.mrb[0].mxu0
    %v2147 = vadd.f32 %v1665, %v2146
    %v2148 = vpop.f32.mrb[0].mxu0
    %v2149 = vadd.f32 %v1669, %v2148
    %2150 = vdwg.mxu0
    %2151 = vmatprep.subr.bf16.mxu0 %v1897
    %2152 = vmatpush1.bf16.msra.mxu0 %v1896
    %2153 = vmatprep.subr.bf16.mxu0 %v1899
    %2154 = vmatpush1.bf16.msra.mxu0 %v1898
    %2155 = vmatprep.subr.bf16.mxu0 %v1901
    %2156 = vmatpush1.bf16.msra.mxu0 %v1900
    %2157 = vmatprep.subr.bf16.mxu0 %v1903
    %2158 = vmatpush1.bf16.msra.mxu0 %v1902
    %2159 = vmatprep.subr.bf16.mxu0 %v1905
    %2160 = vmatpush1.bf16.msra.mxu0 %v1904
    %2161 = vmatprep.subr.bf16.mxu0 %v1907
    %2162 = vmatpush1.bf16.msra.mxu0 %v1906
    %2163 = vmatprep.subr.bf16.mxu0 %v1909
    %2164 = vmatpush1.bf16.msra.mxu0 %v1908
    %2165 = vmatprep.subr.bf16.mxu0 %v1911
    %2166 = vmatpush1.bf16.msra.mxu0 %v1910
    %2167 = vmatprep.subr.bf16.mxu0 %v1913
    %2168 = vmatpush1.bf16.msra.mxu0 %v1912
    %2169 = vmatprep.subr.bf16.mxu0 %v1915
    %2170 = vmatpush1.bf16.msra.mxu0 %v1914
    %2171 = vmatprep.subr.bf16.mxu0 %v1917
    %2172 = vmatpush1.bf16.msra.mxu0 %v1916
    %2173 = vmatprep.subr.bf16.mxu0 %v1919
    %2174 = vmatpush1.bf16.msra.mxu0 %v1918
    %2175 = vmatprep.subr.bf16.mxu0 %v1921
    %2176 = vmatpush1.bf16.msra.mxu0 %v1920
    %2177 = vmatprep.subr.bf16.mxu0 %v1923
    %2178 = vmatpush1.bf16.msra.mxu0 %v1922
    %2179 = vmatprep.subr.bf16.mxu0 %v1925
    %2180 = vmatpush1.bf16.msra.mxu0 %v1924
    %2181 = vmatprep.subr.bf16.mxu0 %v1927
    %2182 = vmatpush1.bf16.msra.mxu0 %v1926
    %2183 = vmatprep.mubr.bf16.mxu0 %v1591
    %2184 = vmatmul.mubr.bf16.gmra.mrb[0].mxu0 %v1590
    %v2185 = vpop.f32.mrb[0].mxu0
    %v2186 = vadd.f32 %v2133, %v2185
    %v2187 = vpop.f32.mrb[0].mxu0
    %v2188 = vadd.f32 %v2135, %v2187
    %v2189 = vpop.f32.mrb[0].mxu0
    %v2190 = vadd.f32 %v2137, %v2189
    %v2191 = vpop.f32.mrb[0].mxu0
    %v2192 = vadd.f32 %v2139, %v2191
    %2193 = vmatprep.mubr.bf16.mxu0 %v1595
    %2194 = vmatmul.mubr.bf16.gmra.mrb[0].mxu0 %v1594
    %v2195 = vpop.f32.mrb[0].mxu0
    %v2196 = vadd.f32 %v2143, %v2195
    %v2197 = vpop.f32.mrb[0].mxu0
    %v2198 = vadd.f32 %v2145, %v2197
    %v2199 = vpop.f32.mrb[0].mxu0
    %v2200 = vadd.f32 %v2147, %v2199
    %v2201 = vpop.f32.mrb[0].mxu0
    %v2202 = vadd.f32 %v2149, %v2201
    %2203 = vdwg.mxu0
    %v2204 = vmax.f32 %v2080, 0.0
    %v2205 = vmax.f32 %v2082, 0.0
    %v2206 = vmax.f32 %v2084, 0.0
    %v2207 = vmax.f32 %v2086, 0.0
    %v2208 = vmax.f32 %v2090, 0.0
    %v2209 = vmax.f32 %v2092, 0.0
    %v2210 = vmax.f32 %v2094, 0.0
    %v2211 = vmax.f32 %v2096, 0.0
    %v2212 = vpack.c.bf16 %v2206, %v2204
    %v2213 = vpack.c.bf16 %v2207, %v2205
    %v2214 = vpack.c.bf16 %v2210, %v2208
    %v2215 = vpack.c.bf16 %v2211, %v2209
    %v2216 = vmax.f32 %v2186, 0.0
    %v2217 = vmax.f32 %v2188, 0.0
    %v2218 = vmax.f32 %v2190, 0.0
    %v2219 = vmax.f32 %v2192, 0.0
    %v2220 = vmax.f32 %v2196, 0.0
    %v2221 = vmax.f32 %v2198, 0.0
    %v2222 = vmax.f32 %v2200, 0.0
    %v2223 = vmax.f32 %v2202, 0.0
    %v2224 = vpack.c.bf16 %v2218, %v2216
    %v2225 = vpack.c.bf16 %v2219, %v2217
    %v2226 = vpack.c.bf16 %v2222, %v2220
    %v2227 = vpack.c.bf16 %v2223, %v2221
    %v2228 = vld [vmem:[#allocation20] sm:$0xf]
    %v2229 = vld [vmem:[#allocation20 + $0x4] sm:$0xf]
    %v2230 = vld [vmem:[#allocation20 + $0x8] sm:$0xf]
    %v2231 = vld [vmem:[#allocation20 + $0xc] sm:$0xf]
    %v2232 = vld [vmem:[#allocation20 + $0x10] sm:$0xf]
    %v2233 = vld [vmem:[#allocation20 + $0x14] sm:$0xf]
    %v2234 = vld [vmem:[#allocation20 + $0x18] sm:$0xf]
    %v2235 = vld [vmem:[#allocation20 + $0x1c] sm:$0xf]
    %v2236 = vld [vmem:[#allocation20 + $0x20] sm:$0xf]
    %v2237 = vld [vmem:[#allocation20 + $0x24] sm:$0xf]
    %v2238 = vld [vmem:[#allocation20 + $0x28] sm:$0xf]
    %v2239 = vld [vmem:[#allocation20 + $0x2c] sm:$0xf]
    %v2240 = vld [vmem:[#allocation20 + $0x30] sm:$0xf]
    %v2241 = vld [vmem:[#allocation20 + $0x34] sm:$0xf]
    %v2242 = vld [vmem:[#allocation20 + $0x38] sm:$0xf]
    %v2243 = vld [vmem:[#allocation20 + $0x3c] sm:$0xf]
    %v2244 = vld [vmem:[#allocation20 + $0x40] sm:$0xf]
    %v2245 = vld [vmem:[#allocation20 + $0x44] sm:$0xf]
    %v2246 = vld [vmem:[#allocation20 + $0x48] sm:$0xf]
    %v2247 = vld [vmem:[#allocation20 + $0x4c] sm:$0xf]
    %v2248 = vld [vmem:[#allocation20 + $0x50] sm:$0xf]
    %v2249 = vld [vmem:[#allocation20 + $0x54] sm:$0xf]
    %v2250 = vld [vmem:[#allocation20 + $0x58] sm:$0xf]
    %v2251 = vld [vmem:[#allocation20 + $0x5c] sm:$0xf]
    %v2252 = vld [vmem:[#allocation20 + $0x60] sm:$0xf]
    %v2253 = vld [vmem:[#allocation20 + $0x64] sm:$0xf]
    %v2254 = vld [vmem:[#allocation20 + $0x68] sm:$0xf]
    %v2255 = vld [vmem:[#allocation20 + $0x6c] sm:$0xf]
    %v2256 = vld [vmem:[#allocation20 + $0x70] sm:$0xf]
    %v2257 = vld [vmem:[#allocation20 + $0x74] sm:$0xf]
    %v2258 = vld [vmem:[#allocation20 + $0x78] sm:$0xf]
    %v2259 = vld [vmem:[#allocation20 + $0x7c] sm:$0xf]
    %v2260 = vld [vmem:[#allocation22] sm:$0x1]
    %v2262 = vlaneseq
    %v2263 = vshrl.u32 %v2262, 7
    %v2264 = vsub.s32 0, %v2263
    %v2265 = vrot.slane %v2260, %v2264
    %v2299 = vunpack.c.l.b16 %v2228
    %v2300 = vunpack.c.l.b16 %v2229
    %v2301 = vunpack.c.l.b16 %v2230
    %v2302 = vunpack.c.l.b16 %v2231
    %v2303 = vunpack.c.l.b16 %v2232
    %v2304 = vunpack.c.l.b16 %v2233
    %v2305 = vunpack.c.l.b16 %v2234
    %v2306 = vunpack.c.l.b16 %v2235
    %v2307 = vunpack.c.l.b16 %v2236
    %v2308 = vunpack.c.l.b16 %v2237
    %v2309 = vunpack.c.l.b16 %v2238
    %v2310 = vunpack.c.l.b16 %v2239
    %v2311 = vunpack.c.l.b16 %v2240
    %v2312 = vunpack.c.l.b16 %v2241
    %v2313 = vunpack.c.l.b16 %v2242
    %v2314 = vunpack.c.l.b16 %v2243
    %v2315 = vunpack.c.l.b16 %v2244
    %v2316 = vunpack.c.l.b16 %v2245
    %v2317 = vunpack.c.l.b16 %v2246
    %v2318 = vunpack.c.l.b16 %v2247
    %v2319 = vunpack.c.l.b16 %v2248
    %v2320 = vunpack.c.l.b16 %v2249
    %v2321 = vunpack.c.l.b16 %v2250
    %v2322 = vunpack.c.l.b16 %v2251
    %v2323 = vunpack.c.l.b16 %v2252
    %v2324 = vunpack.c.l.b16 %v2253
    %v2325 = vunpack.c.l.b16 %v2254
    %v2326 = vunpack.c.l.b16 %v2255
    %v2327 = vunpack.c.l.b16 %v2256
    %v2328 = vunpack.c.l.b16 %v2257
    %v2329 = vunpack.c.l.b16 %v2258
    %v2330 = vunpack.c.l.b16 %v2259
    %v2331 = vpack.c.b16 %v2300, %v2299
    %v2332 = vpack.c.b16 %v2302, %v2301
    %v2333 = vpack.c.b16 %v2304, %v2303
    %v2334 = vpack.c.b16 %v2306, %v2305
    %v2335 = vpack.c.b16 %v2308, %v2307
    %v2336 = vpack.c.b16 %v2310, %v2309
    %v2337 = vpack.c.b16 %v2312, %v2311
    %v2338 = vpack.c.b16 %v2314, %v2313
    %v2339 = vpack.c.b16 %v2316, %v2315
    %v2340 = vpack.c.b16 %v2318, %v2317
    %v2341 = vpack.c.b16 %v2320, %v2319
    %v2342 = vpack.c.b16 %v2322, %v2321
    %v2343 = vpack.c.b16 %v2324, %v2323
    %v2344 = vpack.c.b16 %v2326, %v2325
    %v2345 = vpack.c.b16 %v2328, %v2327
    %v2346 = vpack.c.b16 %v2330, %v2329
    %2363 = vmatprep.subr.bf16.mxu0 0
    %2364 = vmatpush1.bf16.msra.mxu0 %v2331
    %2365 = vmatprep.subr.bf16.mxu0 0
    %2366 = vmatpush1.bf16.msra.mxu0 %v2332
    %2367 = vmatprep.subr.bf16.mxu0 0
    %2368 = vmatpush1.bf16.msra.mxu0 %v2333
    %2369 = vmatprep.subr.bf16.mxu0 0
    %2370 = vmatpush1.bf16.msra.mxu0 %v2334
    %2371 = vmatprep.subr.bf16.mxu0 0
    %2372 = vmatpush1.bf16.msra.mxu0 %v2335
    %2373 = vmatprep.subr.bf16.mxu0 0
    %2374 = vmatpush1.bf16.msra.mxu0 %v2336
    %2375 = vmatprep.subr.bf16.mxu0 0
    %2376 = vmatpush1.bf16.msra.mxu0 %v2337
    %2377 = vmatprep.subr.bf16.mxu0 0
    %2378 = vmatpush1.bf16.msra.mxu0 %v2338
    %2379 = vmatprep.subr.bf16.mxu0 0
    %2380 = vmatpush1.bf16.msra.mxu0 %v2339
    %2381 = vmatprep.subr.bf16.mxu0 0
    %2382 = vmatpush1.bf16.msra.mxu0 %v2340
    %2383 = vmatprep.subr.bf16.mxu0 0
    %2384 = vmatpush1.bf16.msra.mxu0 %v2341
    %2385 = vmatprep.subr.bf16.mxu0 0
    %2386 = vmatpush1.bf16.msra.mxu0 %v2342
    %2387 = vmatprep.subr.bf16.mxu0 0
    %2388 = vmatpush1.bf16.msra.mxu0 %v2343
    %2389 = vmatprep.subr.bf16.mxu0 0
    %2390 = vmatpush1.bf16.msra.mxu0 %v2344
    %2391 = vmatprep.subr.bf16.mxu0 0
    %2392 = vmatpush1.bf16.msra.mxu0 %v2345
    %2393 = vmatprep.subr.bf16.mxu0 0
    %2394 = vmatpush1.bf16.msra.mxu0 %v2346
    %2395 = vmatprep.mubr.bf16.mxu0 %v2213
    %2396 = vmatmul.mubr.bf16.gmra.mrb[0].mxu0 %v2212
    %v2397 = vpop.f32.mrb[0].mxu0
    %v2398 = vadd.f32 %v2265, %v2397
    %v2399 = vpop.f32.mrb[0].mxu0
    %v2400 = vpop.f32.mrb[0].mxu0
    %v2401 = vadd.f32 %v2265, %v2400
    %v2402 = vpop.f32.mrb[0].mxu0
    %2403 = vmatprep.mubr.bf16.mxu0 %v2215
    %2404 = vmatmul.mubr.bf16.gmra.mrb[0].mxu0 %v2214
    %v2405 = vpop.f32.mrb[0].mxu0
    %v2406 = vadd.f32 %v2265, %v2405
    %v2407 = vpop.f32.mrb[0].mxu0
    %v2408 = vpop.f32.mrb[0].mxu0
    %v2409 = vadd.f32 %v2265, %v2408
    %v2410 = vpop.f32.mrb[0].mxu0
    %2411 = vdwg.mxu0
    %2412 = vmatprep.subr.bf16.mxu0 0
    %2413 = vmatpush1.bf16.msra.mxu0 %v2331
    %2414 = vmatprep.subr.bf16.mxu0 0
    %2415 = vmatpush1.bf16.msra.mxu0 %v2332
    %2416 = vmatprep.subr.bf16.mxu0 0
    %2417 = vmatpush1.bf16.msra.mxu0 %v2333
    %2418 = vmatprep.subr.bf16.mxu0 0
    %2419 = vmatpush1.bf16.msra.mxu0 %v2334
    %2420 = vmatprep.subr.bf16.mxu0 0
    %2421 = vmatpush1.bf16.msra.mxu0 %v2335
    %2422 = vmatprep.subr.bf16.mxu0 0
    %2423 = vmatpush1.bf16.msra.mxu0 %v2336
    %2424 = vmatprep.subr.bf16.mxu0 0
    %2425 = vmatpush1.bf16.msra.mxu0 %v2337
    %2426 = vmatprep.subr.bf16.mxu0 0
    %2427 = vmatpush1.bf16.msra.mxu0 %v2338
    %2428 = vmatprep.subr.bf16.mxu0 0
    %2429 = vmatpush1.bf16.msra.mxu0 %v2339
    %2430 = vmatprep.subr.bf16.mxu0 0
    %2431 = vmatpush1.bf16.msra.mxu0 %v2340
    %2432 = vmatprep.subr.bf16.mxu0 0
    %2433 = vmatpush1.bf16.msra.mxu0 %v2341
    %2434 = vmatprep.subr.bf16.mxu0 0
    %2435 = vmatpush1.bf16.msra.mxu0 %v2342
    %2436 = vmatprep.subr.bf16.mxu0 0
    %2437 = vmatpush1.bf16.msra.mxu0 %v2343
    %2438 = vmatprep.subr.bf16.mxu0 0
    %2439 = vmatpush1.bf16.msra.mxu0 %v2344
    %2440 = vmatprep.subr.bf16.mxu0 0
    %2441 = vmatpush1.bf16.msra.mxu0 %v2345
    %2442 = vmatprep.subr.bf16.mxu0 0
    %2443 = vmatpush1.bf16.msra.mxu0 %v2346
    %2444 = vmatprep.mubr.bf16.mxu0 %v2225
    %2445 = vmatmul.mubr.bf16.gmra.mrb[0].mxu0 %v2224
    %v2446 = vpop.f32.mrb[0].mxu0
    %v2447 = vadd.f32 %v2265, %v2446
    %v2448 = vpop.f32.mrb[0].mxu0
    %v2449 = vpop.f32.mrb[0].mxu0
    %v2450 = vadd.f32 %v2265, %v2449
    %v2451 = vpop.f32.mrb[0].mxu0
    %2452 = vmatprep.mubr.bf16.mxu0 %v2227
    %2453 = vmatmul.mubr.bf16.gmra.mrb[0].mxu0 %v2226
    %v2454 = vpop.f32.mrb[0].mxu0
    %v2455 = vadd.f32 %v2265, %v2454
    %v2456 = vpop.f32.mrb[0].mxu0
    %v2457 = vpop.f32.mrb[0].mxu0
    %v2458 = vadd.f32 %v2265, %v2457
    %v2459 = vpop.f32.mrb[0].mxu0
    %2460 = vdwg.mxu0
    %v2461 = vmax.f32 %v2398, 0.0
    %v2462 = vmax.f32 %v2401, 0.0
    %v2463 = vmax.f32 %v2406, 0.0
    %v2464 = vmax.f32 %v2409, 0.0
    %v2465 = vpack.c.bf16 %v2462, %v2461
    %v2466 = vpack.c.bf16 %v2464, %v2463
    %v2467 = vmax.f32 %v2447, 0.0
    %v2468 = vmax.f32 %v2450, 0.0
    %v2469 = vmax.f32 %v2455, 0.0
    %v2470 = vmax.f32 %v2458, 0.0
    %v2471 = vpack.c.bf16 %v2468, %v2467
    %v2472 = vpack.c.bf16 %v2470, %v2469
    %v2473 = vld [vmem:[#allocation23] sm:$0xf]
    %v2474 = vld [vmem:[#allocation23 + $0x4] sm:$0xf]
    %v2475 = vld [vmem:[#allocation23 + $0x8] sm:$0xf]
    %v2476 = vld [vmem:[#allocation23 + $0xc] sm:$0xf]
    %v2477 = vld [vmem:[#allocation23 + $0x10] sm:$0xf]
    %v2478 = vld [vmem:[#allocation23 + $0x14] sm:$0xf]
    %v2479 = vld [vmem:[#allocation23 + $0x18] sm:$0xf]
    %v2480 = vld [vmem:[#allocation23 + $0x1c] sm:$0xf]
    %v2481 = vld [vmem:[#allocation23 + $0x20] sm:$0xf]
    %v2482 = vld [vmem:[#allocation23 + $0x24] sm:$0xf]
    %v2483 = vld [vmem:[#allocation23 + $0x28] sm:$0xf]
    %v2484 = vld [vmem:[#allocation23 + $0x2c] sm:$0xf]
    %v2485 = vld [vmem:[#allocation23 + $0x30] sm:$0xf]
    %v2486 = vld [vmem:[#allocation23 + $0x34] sm:$0xf]
    %v2487 = vld [vmem:[#allocation23 + $0x38] sm:$0xf]
    %v2488 = vld [vmem:[#allocation23 + $0x3c] sm:$0xf]
    %v2489 = vld [vmem:[#allocation25] sm:$0x1]
    %v2491 = vlaneseq
    %v2492 = vshrl.u32 %v2491, 7
    %v2493 = vsub.s32 0, %v2492
    %v2494 = vrot.slane %v2489, %v2493
    %v2512 = vunpack.c.l.b16 %v2473
    %v2513 = vunpack.c.l.b16 %v2474
    %v2514 = vunpack.c.l.b16 %v2475
    %v2515 = vunpack.c.l.b16 %v2476
    %v2516 = vunpack.c.l.b16 %v2477
    %v2517 = vunpack.c.l.b16 %v2478
    %v2518 = vunpack.c.l.b16 %v2479
    %v2519 = vunpack.c.l.b16 %v2480
    %v2520 = vunpack.c.l.b16 %v2481
    %v2521 = vunpack.c.l.b16 %v2482
    %v2522 = vunpack.c.l.b16 %v2483
    %v2523 = vunpack.c.l.b16 %v2484
    %v2524 = vunpack.c.l.b16 %v2485
    %v2525 = vunpack.c.l.b16 %v2486
    %v2526 = vunpack.c.l.b16 %v2487
    %v2527 = vunpack.c.l.b16 %v2488
    %v2528 = vpack.c.b16 %v2513, %v2512
    %v2529 = vpack.c.b16 %v2515, %v2514
    %v2530 = vpack.c.b16 %v2517, %v2516
    %v2531 = vpack.c.b16 %v2519, %v2518
    %v2532 = vpack.c.b16 %v2521, %v2520
    %v2533 = vpack.c.b16 %v2523, %v2522
    %v2534 = vpack.c.b16 %v2525, %v2524
    %v2535 = vpack.c.b16 %v2527, %v2526
    %2544 = vmatprep.subr.bf16.mxu0 0
    %2545 = vmatpush1.bf16.msra.mxu0 %v2528
    %2546 = vmatprep.subr.bf16.mxu0 0
    %2547 = vmatpush1.bf16.msra.mxu0 %v2529
    %2548 = vmatprep.subr.bf16.mxu0 0
    %2549 = vmatpush1.bf16.msra.mxu0 %v2530
    %2550 = vmatprep.subr.bf16.mxu0 0
    %2551 = vmatpush1.bf16.msra.mxu0 %v2531
    %2552 = vmatprep.subr.bf16.mxu0 0
    %2553 = vmatpush1.bf16.msra.mxu0 %v2532
    %2554 = vmatprep.subr.bf16.mxu0 0
    %2555 = vmatpush1.bf16.msra.mxu0 %v2533
    %2556 = vmatprep.subr.bf16.mxu0 0
    %2557 = vmatpush1.bf16.msra.mxu0 %v2534
    %2558 = vmatprep.subr.bf16.mxu0 0
    %2559 = vmatpush1.bf16.msra.mxu0 %v2535
    %2560 = vmatprep.subr.bf16.mxu0 0
    %2561 = vmatpush1.bf16.msra.mxu0 0
    %2562 = vmatprep.subr.bf16.mxu0 0
    %2563 = vmatpush1.bf16.msra.mxu0 0
    %2564 = vmatprep.subr.bf16.mxu0 0
    %2565 = vmatpush1.bf16.msra.mxu0 0
    %2566 = vmatprep.subr.bf16.mxu0 0
    %2567 = vmatpush1.bf16.msra.mxu0 0
    %2568 = vmatprep.subr.bf16.mxu0 0
    %2569 = vmatpush1.bf16.msra.mxu0 0
    %2570 = vmatprep.subr.bf16.mxu0 0
    %2571 = vmatpush1.bf16.msra.mxu0 0
    %2572 = vmatprep.subr.bf16.mxu0 0
    %2573 = vmatpush1.bf16.msra.mxu0 0
    %2574 = vmatprep.subr.bf16.mxu0 0
    %2575 = vmatpush1.bf16.msra.mxu0 0
    %2576 = vmatprep.mubr.bf16.mxu0 0
    %2577 = vmatmul.mubr.bf16.gmra.mrb[0].mxu0 %v2465
    %v2578 = vpop.f32.mrb[0].mxu0
    %v2579 = vadd.f32 %v2494, %v2578
    %v2580 = vpop.f32.mrb[0].mxu0
    %v2581 = vpop.f32.mrb[0].mxu0
    %v2582 = vadd.f32 %v2494, %v2581
    %v2583 = vpop.f32.mrb[0].mxu0
    %2584 = vmatprep.mubr.bf16.mxu0 0
    %2585 = vmatmul.mubr.bf16.gmra.mrb[0].mxu0 %v2466
    %v2586 = vpop.f32.mrb[0].mxu0
    %v2587 = vadd.f32 %v2494, %v2586
    %v2588 = vpop.f32.mrb[0].mxu0
    %v2589 = vpop.f32.mrb[0].mxu0
    %v2590 = vadd.f32 %v2494, %v2589
    %v2591 = vpop.f32.mrb[0].mxu0
    %2592 = vdwg.mxu0
    %2593 = vmatprep.subr.bf16.mxu0 0
    %2594 = vmatpush1.bf16.msra.mxu0 %v2528
    %2595 = vmatprep.subr.bf16.mxu0 0
    %2596 = vmatpush1.bf16.msra.mxu0 %v2529
    %2597 = vmatprep.subr.bf16.mxu0 0
    %2598 = vmatpush1.bf16.msra.mxu0 %v2530
    %2599 = vmatprep.subr.bf16.mxu0 0
    %2600 = vmatpush1.bf16.msra.mxu0 %v2531
    %2601 = vmatprep.subr.bf16.mxu0 0
    %2602 = vmatpush1.bf16.msra.mxu0 %v2532
    %2603 = vmatprep.subr.bf16.mxu0 0
    %2604 = vmatpush1.bf16.msra.mxu0 %v2533
    %2605 = vmatprep.subr.bf16.mxu0 0
    %2606 = vmatpush1.bf16.msra.mxu0 %v2534
    %2607 = vmatprep.subr.bf16.mxu0 0
    %2608 = vmatpush1.bf16.msra.mxu0 %v2535
    %2609 = vmatprep.subr.bf16.mxu0 0
    %2610 = vmatpush1.bf16.msra.mxu0 0
    %2611 = vmatprep.subr.bf16.mxu0 0
    %2612 = vmatpush1.bf16.msra.mxu0 0
    %2613 = vmatprep.subr.bf16.mxu0 0
    %2614 = vmatpush1.bf16.msra.mxu0 0
    %2615 = vmatprep.subr.bf16.mxu0 0
    %2616 = vmatpush1.bf16.msra.mxu0 0
    %2617 = vmatprep.subr.bf16.mxu0 0
    %2618 = vmatpush1.bf16.msra.mxu0 0
    %2619 = vmatprep.subr.bf16.mxu0 0
    %2620 = vmatpush1.bf16.msra.mxu0 0
    %2621 = vmatprep.subr.bf16.mxu0 0
    %2622 = vmatpush1.bf16.msra.mxu0 0
    %2623 = vmatprep.subr.bf16.mxu0 0
    %2624 = vmatpush1.bf16.msra.mxu0 0
    %2625 = vmatprep.mubr.bf16.mxu0 0
    %2626 = vmatmul.mubr.bf16.gmra.mrb[0].mxu0 %v2471
    %v2627 = vpop.f32.mrb[0].mxu0
    %v2628 = vadd.f32 %v2494, %v2627
    %v2629 = vpop.f32.mrb[0].mxu0
    %v2630 = vpop.f32.mrb[0].mxu0
    %v2631 = vadd.f32 %v2494, %v2630
    %v2632 = vpop.f32.mrb[0].mxu0
    %2633 = vmatprep.mubr.bf16.mxu0 0
    %2634 = vmatmul.mubr.bf16.gmra.mrb[0].mxu0 %v2472
    %v2635 = vpop.f32.mrb[0].mxu0
    %v2636 = vadd.f32 %v2494, %v2635
    %v2637 = vpop.f32.mrb[0].mxu0
    %v2638 = vpop.f32.mrb[0].mxu0
    %v2639 = vadd.f32 %v2494, %v2638
    %v2640 = vpop.f32.mrb[0].mxu0
    %2641 = vdwg.mxu0
    %v2642 = vmax.f32 %v2579, 0.0
    %v2643 = vmax.f32 %v2582, 0.0
    %v2644 = vmax.f32 %v2587, 0.0
    %v2645 = vmax.f32 %v2590, 0.0
    %v2646 = vpack.c.bf16 %v2643, %v2642
    %v2647 = vpack.c.bf16 %v2645, %v2644
    %v2648 = vmax.f32 %v2628, 0.0
    %v2649 = vmax.f32 %v2631, 0.0
    %v2650 = vmax.f32 %v2636, 0.0
    %v2651 = vmax.f32 %v2639, 0.0
    %v2652 = vpack.c.bf16 %v2649, %v2648
    %v2653 = vpack.c.bf16 %v2651, %v2650
    %v2654 = vld [vmem:[#allocation26] sm:$0xf]
    %v2655 = vld [vmem:[#allocation26 + $0x4] sm:$0xf]
    %v2656 = vld [vmem:[#allocation26 + $0x8] sm:$0xf]
    %v2657 = vld [vmem:[#allocation26 + $0xc] sm:$0xf]
    %v2658 = vld [vmem:[#allocation26 + $0x10] sm:$0xf]
    %v2659 = vld [vmem:[#allocation26 + $0x14] sm:$0xf]
    %v2660 = vld [vmem:[#allocation26 + $0x18] sm:$0xf]
    %v2661 = vld [vmem:[#allocation26 + $0x1c] sm:$0xf]
    %v2662 = vld [vmem:[#allocation26 + $0x20] sm:$0xf]
    %v2663 = vld [vmem:[#allocation26 + $0x24] sm:$0xf]
    %v2664 = vld [vmem:[#allocation26 + $0x28] sm:$0xf]
    %v2665 = vld [vmem:[#allocation26 + $0x2c] sm:$0xf]
    %v2666 = vld [vmem:[#allocation26 + $0x30] sm:$0xf]
    %v2667 = vld [vmem:[#allocation26 + $0x34] sm:$0xf]
    %v2668 = vld [vmem:[#allocation26 + $0x38] sm:$0xf]
    %v2669 = vld [vmem:[#allocation26 + $0x3c] sm:$0xf]
    %v2670 = vld [vmem:[#allocation28] sm:$0x1]
    %v2672 = vlaneseq
    %v2673 = vshrl.u32 %v2672, 7
    %v2674 = vsub.s32 0, %v2673
    %v2675 = vrot.slane %v2670, %v2674
    %v2693 = vunpack.c.l.b16 %v2654
    %v2694 = vunpack.c.l.b16 %v2655
    %v2695 = vunpack.c.l.b16 %v2656
    %v2696 = vunpack.c.l.b16 %v2657
    %v2697 = vunpack.c.l.b16 %v2658
    %v2698 = vunpack.c.l.b16 %v2659
    %v2699 = vunpack.c.l.b16 %v2660
    %v2700 = vunpack.c.l.b16 %v2661
    %v2701 = vunpack.c.l.b16 %v2662
    %v2702 = vunpack.c.l.b16 %v2663
    %v2703 = vunpack.c.l.b16 %v2664
    %v2704 = vunpack.c.l.b16 %v2665
    %v2705 = vunpack.c.l.b16 %v2666
    %v2706 = vunpack.c.l.b16 %v2667
    %v2707 = vunpack.c.l.b16 %v2668
    %v2708 = vunpack.c.l.b16 %v2669
    %v2709 = vpack.c.b16 %v2694, %v2693
    %v2710 = vpack.c.b16 %v2696, %v2695
    %v2711 = vpack.c.b16 %v2698, %v2697
    %v2712 = vpack.c.b16 %v2700, %v2699
    %v2713 = vpack.c.b16 %v2702, %v2701
    %v2714 = vpack.c.b16 %v2704, %v2703
    %v2715 = vpack.c.b16 %v2706, %v2705
    %v2716 = vpack.c.b16 %v2708, %v2707
    %2725 = vmatprep.subr.bf16.mxu0 0
    %2726 = vmatpush1.bf16.msra.mxu0 %v2709
    %2727 = vmatprep.subr.bf16.mxu0 0
    %2728 = vmatpush1.bf16.msra.mxu0 %v2710
    %2729 = vmatprep.subr.bf16.mxu0 0
    %2730 = vmatpush1.bf16.msra.mxu0 %v2711
    %2731 = vmatprep.subr.bf16.mxu0 0
    %2732 = vmatpush1.bf16.msra.mxu0 %v2712
    %2733 = vmatprep.subr.bf16.mxu0 0
    %2734 = vmatpush1.bf16.msra.mxu0 %v2713
    %2735 = vmatprep.subr.bf16.mxu0 0
    %2736 = vmatpush1.bf16.msra.mxu0 %v2714
    %2737 = vmatprep.subr.bf16.mxu0 0
    %2738 = vmatpush1.bf16.msra.mxu0 %v2715
    %2739 = vmatprep.subr.bf16.mxu0 0
    %2740 = vmatpush1.bf16.msra.mxu0 %v2716
    %2741 = vmatprep.subr.bf16.mxu0 0
    %2742 = vmatpush1.bf16.msra.mxu0 0
    %2743 = vmatprep.subr.bf16.mxu0 0
    %2744 = vmatpush1.bf16.msra.mxu0 0
    %2745 = vmatprep.subr.bf16.mxu0 0
    %2746 = vmatpush1.bf16.msra.mxu0 0
    %2747 = vmatprep.subr.bf16.mxu0 0
    %2748 = vmatpush1.bf16.msra.mxu0 0
    %2749 = vmatprep.subr.bf16.mxu0 0
    %2750 = vmatpush1.bf16.msra.mxu0 0
    %2751 = vmatprep.subr.bf16.mxu0 0
    %2752 = vmatpush1.bf16.msra.mxu0 0
    %2753 = vmatprep.subr.bf16.mxu0 0
    %2754 = vmatpush1.bf16.msra.mxu0 0
    %2755 = vmatprep.subr.bf16.mxu0 0
    %2756 = vmatpush1.bf16.msra.mxu0 0
    %2757 = vmatprep.mubr.bf16.mxu0 0
    %2758 = vmatmul.mubr.bf16.gmra.mrb[0].mxu0 %v2646
    %v2759 = vpop.f32.mrb[0].mxu0
    %v2760 = vadd.f32 %v2675, %v2759
    %v2761 = vpop.f32.mrb[0].mxu0
    %v2762 = vpop.f32.mrb[0].mxu0
    %v2763 = vadd.f32 %v2675, %v2762
    %v2764 = vpop.f32.mrb[0].mxu0
    %2765 = vmatprep.mubr.bf16.mxu0 0
    %2766 = vmatmul.mubr.bf16.gmra.mrb[0].mxu0 %v2647
    %v2767 = vpop.f32.mrb[0].mxu0
    %v2768 = vadd.f32 %v2675, %v2767
    %v2769 = vpop.f32.mrb[0].mxu0
    %v2770 = vpop.f32.mrb[0].mxu0
    %v2771 = vadd.f32 %v2675, %v2770
    %v2772 = vpop.f32.mrb[0].mxu0
    %2773 = vdwg.mxu0
    %2774 = vmatprep.subr.bf16.mxu0 0
    %2775 = vmatpush1.bf16.msra.mxu0 %v2709
    %2776 = vmatprep.subr.bf16.mxu0 0
    %2777 = vmatpush1.bf16.msra.mxu0 %v2710
    %2778 = vmatprep.subr.bf16.mxu0 0
    %2779 = vmatpush1.bf16.msra.mxu0 %v2711
    %2780 = vmatprep.subr.bf16.mxu0 0
    %2781 = vmatpush1.bf16.msra.mxu0 %v2712
    %2782 = vmatprep.subr.bf16.mxu0 0
    %2783 = vmatpush1.bf16.msra.mxu0 %v2713
    %2784 = vmatprep.subr.bf16.mxu0 0
    %2785 = vmatpush1.bf16.msra.mxu0 %v2714
    %2786 = vmatprep.subr.bf16.mxu0 0
    %2787 = vmatpush1.bf16.msra.mxu0 %v2715
    %2788 = vmatprep.subr.bf16.mxu0 0
    %2789 = vmatpush1.bf16.msra.mxu0 %v2716
    %2790 = vmatprep.subr.bf16.mxu0 0
    %2791 = vmatpush1.bf16.msra.mxu0 0
    %2792 = vmatprep.subr.bf16.mxu0 0
    %2793 = vmatpush1.bf16.msra.mxu0 0
    %2794 = vmatprep.subr.bf16.mxu0 0
    %2795 = vmatpush1.bf16.msra.mxu0 0
    %2796 = vmatprep.subr.bf16.mxu0 0
    %2797 = vmatpush1.bf16.msra.mxu0 0
    %2798 = vmatprep.subr.bf16.mxu0 0
    %2799 = vmatpush1.bf16.msra.mxu0 0
    %2800 = vmatprep.subr.bf16.mxu0 0
    %2801 = vmatpush1.bf16.msra.mxu0 0
    %2802 = vmatprep.subr.bf16.mxu0 0
    %2803 = vmatpush1.bf16.msra.mxu0 0
    %2804 = vmatprep.subr.bf16.mxu0 0
    %2805 = vmatpush1.bf16.msra.mxu0 0
    %2806 = vmatprep.mubr.bf16.mxu0 0
    %2807 = vmatmul.mubr.bf16.gmra.mrb[0].mxu0 %v2652
    %v2808 = vpop.f32.mrb[0].mxu0
    %v2809 = vadd.f32 %v2675, %v2808
    %v2810 = vpop.f32.mrb[0].mxu0
    %v2811 = vpop.f32.mrb[0].mxu0
    %v2812 = vadd.f32 %v2675, %v2811
    %v2813 = vpop.f32.mrb[0].mxu0
    %2814 = vmatprep.mubr.bf16.mxu0 0
    %2815 = vmatmul.mubr.bf16.gmra.mrb[0].mxu0 %v2653
    %v2816 = vpop.f32.mrb[0].mxu0
    %v2817 = vadd.f32 %v2675, %v2816
    %v2818 = vpop.f32.mrb[0].mxu0
    %v2819 = vpop.f32.mrb[0].mxu0
    %v2820 = vadd.f32 %v2675, %v2819
    %v2821 = vpop.f32.mrb[0].mxu0
    %2822 = vdwg.mxu0
    %v2823 = vmax.f32 %v2760, 0.0
    %v2824 = vmax.f32 %v2763, 0.0
    %v2825 = vmax.f32 %v2768, 0.0
    %v2826 = vmax.f32 %v2771, 0.0
    %v2827 = vpack.c.bf16 %v2824, %v2823
    %v2828 = vpack.c.bf16 %v2826, %v2825
    %v2829 = vmax.f32 %v2809, 0.0
    %v2830 = vmax.f32 %v2812, 0.0
    %v2831 = vmax.f32 %v2817, 0.0
    %v2832 = vmax.f32 %v2820, 0.0
    %v2833 = vpack.c.bf16 %v2830, %v2829
    %v2834 = vpack.c.bf16 %v2832, %v2831
    %v2835 = vld [vmem:[%s17] sm:$0xf]
    %v2836 = vld [vmem:[%s17 + $0x4] sm:$0xf]
    %v2837 = vld [vmem:[%s17 + $0x8] sm:$0xf]
    %v2838 = vld [vmem:[%s17 + $0xc] sm:$0xf]
    %v2839 = vld [vmem:[%s17 + $0x10] sm:$0xf]
    %v2840 = vld [vmem:[%s17 + $0x14] sm:$0xf]
    %v2841 = vld [vmem:[%s17 + $0x18] sm:$0xf]
    %v2842 = vld [vmem:[%s17 + $0x1c] sm:$0xf]
    %v2843 = vld [vmem:[%s17 + $0x20] sm:$0xf]
    %v2844 = vld [vmem:[%s17 + $0x24] sm:$0xf]
    %v2845 = vld [vmem:[%s17 + $0x28] sm:$0xf]
    %v2846 = vld [vmem:[%s17 + $0x2c] sm:$0xf]
    %v2847 = vld [vmem:[%s17 + $0x30] sm:$0xf]
    %v2848 = vld [vmem:[%s17 + $0x34] sm:$0xf]
    %v2849 = vld [vmem:[%s17 + $0x38] sm:$0xf]
    %v2850 = vld [vmem:[%s17 + $0x3c] sm:$0xf]
    %v2851 = vld [vmem:[%s18] sm:$0x1]
    %v2853 = vlaneseq
    %v2854 = vshrl.u32 %v2853, 7
    %v2855 = vsub.s32 0, %v2854
    %v2856 = vrot.slane %v2851, %v2855
    %v2874 = vunpack.c.l.b16 %v2835
    %v2875 = vunpack.c.l.b16 %v2836
    %v2876 = vunpack.c.l.b16 %v2837
    %v2877 = vunpack.c.l.b16 %v2838
    %v2878 = vunpack.c.l.b16 %v2839
    %v2879 = vunpack.c.l.b16 %v2840
    %v2880 = vunpack.c.l.b16 %v2841
    %v2881 = vunpack.c.l.b16 %v2842
    %v2882 = vunpack.c.l.b16 %v2843
    %v2883 = vunpack.c.l.b16 %v2844
    %v2884 = vunpack.c.l.b16 %v2845
    %v2885 = vunpack.c.l.b16 %v2846
    %v2886 = vunpack.c.l.b16 %v2847
    %v2887 = vunpack.c.l.b16 %v2848
    %v2888 = vunpack.c.l.b16 %v2849
    %v2889 = vunpack.c.l.b16 %v2850
    %v2890 = vpack.c.b16 %v2875, %v2874
    %v2891 = vpack.c.b16 %v2877, %v2876
    %v2892 = vpack.c.b16 %v2879, %v2878
    %v2893 = vpack.c.b16 %v2881, %v2880
    %v2894 = vpack.c.b16 %v2883, %v2882
    %v2895 = vpack.c.b16 %v2885, %v2884
    %v2896 = vpack.c.b16 %v2887, %v2886
    %v2897 = vpack.c.b16 %v2889, %v2888
    %2906 = vmatprep.subr.bf16.mxu0 0
    %2907 = vmatpush1.bf16.msra.mxu0 %v2890
    %2908 = vmatprep.subr.bf16.mxu0 0
    %2909 = vmatpush1.bf16.msra.mxu0 %v2891
    %2910 = vmatprep.subr.bf16.mxu0 0
    %2911 = vmatpush1.bf16.msra.mxu0 %v2892
    %2912 = vmatprep.subr.bf16.mxu0 0
    %2913 = vmatpush1.bf16.msra.mxu0 %v2893
    %2914 = vmatprep.subr.bf16.mxu0 0
    %2915 = vmatpush1.bf16.msra.mxu0 %v2894
    %2916 = vmatprep.subr.bf16.mxu0 0
    %2917 = vmatpush1.bf16.msra.mxu0 %v2895
    %2918 = vmatprep.subr.bf16.mxu0 0
    %2919 = vmatpush1.bf16.msra.mxu0 %v2896
    %2920 = vmatprep.subr.bf16.mxu0 0
    %2921 = vmatpush1.bf16.msra.mxu0 %v2897
    %2922 = vmatprep.subr.bf16.mxu0 0
    %2923 = vmatpush1.bf16.msra.mxu0 0
    %2924 = vmatprep.subr.bf16.mxu0 0
    %2925 = vmatpush1.bf16.msra.mxu0 0
    %2926 = vmatprep.subr.bf16.mxu0 0
    %2927 = vmatpush1.bf16.msra.mxu0 0
    %2928 = vmatprep.subr.bf16.mxu0 0
    %2929 = vmatpush1.bf16.msra.mxu0 0
    %2930 = vmatprep.subr.bf16.mxu0 0
    %2931 = vmatpush1.bf16.msra.mxu0 0
    %2932 = vmatprep.subr.bf16.mxu0 0
    %2933 = vmatpush1.bf16.msra.mxu0 0
    %2934 = vmatprep.subr.bf16.mxu0 0
    %2935 = vmatpush1.bf16.msra.mxu0 0
    %2936 = vmatprep.subr.bf16.mxu0 0
    %2937 = vmatpush1.bf16.msra.mxu0 0
    %2938 = vmatprep.mubr.bf16.mxu0 0
    %2939 = vmatmul.mubr.bf16.gmra.mrb[0].mxu0 %v2827
    %v2940 = vpop.f32.mrb[0].mxu0
    %v2941 = vadd.f32 %v2856, %v2940
    %v2942 = vpop.f32.mrb[0].mxu0
    %v2943 = vpop.f32.mrb[0].mxu0
    %v2944 = vadd.f32 %v2856, %v2943
    %v2945 = vpop.f32.mrb[0].mxu0
    %2946 = vmatprep.mubr.bf16.mxu0 0
    %2947 = vmatmul.mubr.bf16.gmra.mrb[0].mxu0 %v2828
    %v2948 = vpop.f32.mrb[0].mxu0
    %v2949 = vadd.f32 %v2856, %v2948
    %v2950 = vpop.f32.mrb[0].mxu0
    %v2951 = vpop.f32.mrb[0].mxu0
    %v2952 = vadd.f32 %v2856, %v2951
    %v2953 = vpop.f32.mrb[0].mxu0
    %2954 = vdwg.mxu0
    %2955 = vmatprep.subr.bf16.mxu0 0
    %2956 = vmatpush1.bf16.msra.mxu0 %v2890
    %2957 = vmatprep.subr.bf16.mxu0 0
    %2958 = vmatpush1.bf16.msra.mxu0 %v2891
    %2959 = vmatprep.subr.bf16.mxu0 0
    %2960 = vmatpush1.bf16.msra.mxu0 %v2892
    %2961 = vmatprep.subr.bf16.mxu0 0
    %2962 = vmatpush1.bf16.msra.mxu0 %v2893
    %2963 = vmatprep.subr.bf16.mxu0 0
    %2964 = vmatpush1.bf16.msra.mxu0 %v2894
    %2965 = vmatprep.subr.bf16.mxu0 0
    %2966 = vmatpush1.bf16.msra.mxu0 %v2895
    %2967 = vmatprep.subr.bf16.mxu0 0
    %2968 = vmatpush1.bf16.msra.mxu0 %v2896
    %2969 = vmatprep.subr.bf16.mxu0 0
    %2970 = vmatpush1.bf16.msra.mxu0 %v2897
    %2971 = vmatprep.subr.bf16.mxu0 0
    %2972 = vmatpush1.bf16.msra.mxu0 0
    %2973 = vmatprep.subr.bf16.mxu0 0
    %2974 = vmatpush1.bf16.msra.mxu0 0
    %2975 = vmatprep.subr.bf16.mxu0 0
    %2976 = vmatpush1.bf16.msra.mxu0 0
    %2977 = vmatprep.subr.bf16.mxu0 0
    %2978 = vmatpush1.bf16.msra.mxu0 0
    %2979 = vmatprep.subr.bf16.mxu0 0
    %2980 = vmatpush1.bf16.msra.mxu0 0
    %2981 = vmatprep.subr.bf16.mxu0 0
    %2982 = vmatpush1.bf16.msra.mxu0 0
    %2983 = vmatprep.subr.bf16.mxu0 0
    %2984 = vmatpush1.bf16.msra.mxu0 0
    %2985 = vmatprep.subr.bf16.mxu0 0
    %2986 = vmatpush1.bf16.msra.mxu0 0
    %2987 = vmatprep.mubr.bf16.mxu0 0
    %2988 = vmatmul.mubr.bf16.gmra.mrb[0].mxu0 %v2833
    %v2989 = vpop.f32.mrb[0].mxu0
    %v2990 = vadd.f32 %v2856, %v2989
    %v2991 = vpop.f32.mrb[0].mxu0
    %v2992 = vpop.f32.mrb[0].mxu0
    %v2993 = vadd.f32 %v2856, %v2992
    %v2994 = vpop.f32.mrb[0].mxu0
    %2995 = vmatprep.mubr.bf16.mxu0 0
    %2996 = vmatmul.mubr.bf16.gmra.mrb[0].mxu0 %v2834
    %v2997 = vpop.f32.mrb[0].mxu0
    %v2998 = vadd.f32 %v2856, %v2997
    %v2999 = vpop.f32.mrb[0].mxu0
    %v3000 = vpop.f32.mrb[0].mxu0
    %v3001 = vadd.f32 %v2856, %v3000
    %v3002 = vpop.f32.mrb[0].mxu0
    %3003 = vdwg.mxu0
    %v3004 = vmax.f32 %v2941, 0.0
    %v3005 = vmax.f32 %v2944, 0.0
    %v3006 = vmax.f32 %v2949, 0.0
    %v3007 = vmax.f32 %v2952, 0.0
    %v3008 = vpack.c.bf16 %v3005, %v3004
    %v3009 = vpack.c.bf16 %v3007, %v3006
    %v3010 = vmax.f32 %v2990, 0.0
    %v3011 = vmax.f32 %v2993, 0.0
    %v3012 = vmax.f32 %v2998, 0.0
    %v3013 = vmax.f32 %v3001, 0.0
    %v3014 = vpack.c.bf16 %v3011, %v3010
    %v3015 = vpack.c.bf16 %v3013, %v3012
    %v3016 = vld [vmem:[#allocation29] sm:$0xf]
    %v3017 = vld [vmem:[#allocation29 + $0x4] sm:$0xf]
    %v3018 = vld [vmem:[#allocation29 + $0x8] sm:$0xf]
    %v3019 = vld [vmem:[#allocation29 + $0xc] sm:$0xf]
    %v3020 = vld [vmem:[#allocation29 + $0x10] sm:$0xf]
    %v3021 = vld [vmem:[#allocation29 + $0x14] sm:$0xf]
    %v3022 = vld [vmem:[#allocation29 + $0x18] sm:$0xf]
    %v3023 = vld [vmem:[#allocation29 + $0x1c] sm:$0xf]
    %v3024 = vld [vmem:[#allocation29 + $0x20] sm:$0xf]
    %v3025 = vld [vmem:[#allocation29 + $0x24] sm:$0xf]
    %v3026 = vld [vmem:[#allocation29 + $0x28] sm:$0xf]
    %v3027 = vld [vmem:[#allocation29 + $0x2c] sm:$0xf]
    %v3028 = vld [vmem:[#allocation29 + $0x30] sm:$0xf]
    %v3029 = vld [vmem:[#allocation29 + $0x34] sm:$0xf]
    %v3030 = vld [vmem:[#allocation29 + $0x38] sm:$0xf]
    %v3031 = vld [vmem:[#allocation29 + $0x3c] sm:$0xf]
    %v3032 = vld [vmem:[%s20] sm:$0x1]
    %v3034 = vlaneseq
    %v3035 = vshrl.u32 %v3034, 7
    %v3036 = vsub.s32 0, %v3035
    %v3037 = vrot.slane %v3032, %v3036
    %v3055 = vunpack.c.l.b16 %v3016
    %v3056 = vunpack.c.l.b16 %v3017
    %v3057 = vunpack.c.l.b16 %v3018
    %v3058 = vunpack.c.l.b16 %v3019
    %v3059 = vunpack.c.l.b16 %v3020
    %v3060 = vunpack.c.l.b16 %v3021
    %v3061 = vunpack.c.l.b16 %v3022
    %v3062 = vunpack.c.l.b16 %v3023
    %v3063 = vunpack.c.l.b16 %v3024
    %v3064 = vunpack.c.l.b16 %v3025
    %v3065 = vunpack.c.l.b16 %v3026
    %v3066 = vunpack.c.l.b16 %v3027
    %v3067 = vunpack.c.l.b16 %v3028
    %v3068 = vunpack.c.l.b16 %v3029
    %v3069 = vunpack.c.l.b16 %v3030
    %v3070 = vunpack.c.l.b16 %v3031
    %v3071 = vpack.c.b16 %v3056, %v3055
    %v3072 = vpack.c.b16 %v3058, %v3057
    %v3073 = vpack.c.b16 %v3060, %v3059
    %v3074 = vpack.c.b16 %v3062, %v3061
    %v3075 = vpack.c.b16 %v3064, %v3063
    %v3076 = vpack.c.b16 %v3066, %v3065
    %v3077 = vpack.c.b16 %v3068, %v3067
    %v3078 = vpack.c.b16 %v3070, %v3069
    %3087 = vmatprep.subr.bf16.mxu0 0
    %3088 = vmatpush1.bf16.msra.mxu0 %v3071
    %3089 = vmatprep.subr.bf16.mxu0 0
    %3090 = vmatpush1.bf16.msra.mxu0 %v3072
    %3091 = vmatprep.subr.bf16.mxu0 0
    %3092 = vmatpush1.bf16.msra.mxu0 %v3073
    %3093 = vmatprep.subr.bf16.mxu0 0
    %3094 = vmatpush1.bf16.msra.mxu0 %v3074
    %3095 = vmatprep.subr.bf16.mxu0 0
    %3096 = vmatpush1.bf16.msra.mxu0 %v3075
    %3097 = vmatprep.subr.bf16.mxu0 0
    %3098 = vmatpush1.bf16.msra.mxu0 %v3076
    %3099 = vmatprep.subr.bf16.mxu0 0
    %3100 = vmatpush1.bf16.msra.mxu0 %v3077
    %3101 = vmatprep.subr.bf16.mxu0 0
    %3102 = vmatpush1.bf16.msra.mxu0 %v3078
    %3103 = vmatprep.subr.bf16.mxu0 0
    %3104 = vmatpush1.bf16.msra.mxu0 0
    %3105 = vmatprep.subr.bf16.mxu0 0
    %3106 = vmatpush1.bf16.msra.mxu0 0
    %3107 = vmatprep.subr.bf16.mxu0 0
    %3108 = vmatpush1.bf16.msra.mxu0 0
    %3109 = vmatprep.subr.bf16.mxu0 0
    %3110 = vmatpush1.bf16.msra.mxu0 0
    %3111 = vmatprep.subr.bf16.mxu0 0
    %3112 = vmatpush1.bf16.msra.mxu0 0
    %3113 = vmatprep.subr.bf16.mxu0 0
    %3114 = vmatpush1.bf16.msra.mxu0 0
    %3115 = vmatprep.subr.bf16.mxu0 0
    %3116 = vmatpush1.bf16.msra.mxu0 0
    %3117 = vmatprep.subr.bf16.mxu0 0
    %3118 = vmatpush1.bf16.msra.mxu0 0
    %3119 = vmatprep.mubr.bf16.mxu0 0
    %3120 = vmatmul.mubr.bf16.gmra.mrb[0].mxu0 %v3008
    %v3121 = vpop.f32.mrb[0].mxu0
    %v3122 = vadd.f32 %v3037, %v3121
    %v3123 = vpop.f32.mrb[0].mxu0
    %v3124 = vpop.f32.mrb[0].mxu0
    %v3125 = vadd.f32 %v3037, %v3124
    %v3126 = vpop.f32.mrb[0].mxu0
    %3127 = vmatprep.mubr.bf16.mxu0 0
    %3128 = vmatmul.mubr.bf16.gmra.mrb[0].mxu0 %v3009
    %v3129 = vpop.f32.mrb[0].mxu0
    %v3130 = vadd.f32 %v3037, %v3129
    %v3131 = vpop.f32.mrb[0].mxu0
    %v3132 = vpop.f32.mrb[0].mxu0
    %v3133 = vadd.f32 %v3037, %v3132
    %v3134 = vpop.f32.mrb[0].mxu0
    %3135 = vdwg.mxu0
    %3136 = vmatprep.subr.bf16.mxu0 0
    %3137 = vmatpush1.bf16.msra.mxu0 %v3071
    %3138 = vmatprep.subr.bf16.mxu0 0
    %3139 = vmatpush1.bf16.msra.mxu0 %v3072
    %3140 = vmatprep.subr.bf16.mxu0 0
    %3141 = vmatpush1.bf16.msra.mxu0 %v3073
    %3142 = vmatprep.subr.bf16.mxu0 0
    %3143 = vmatpush1.bf16.msra.mxu0 %v3074
    %3144 = vmatprep.subr.bf16.mxu0 0
    %3145 = vmatpush1.bf16.msra.mxu0 %v3075
    %3146 = vmatprep.subr.bf16.mxu0 0
    %3147 = vmatpush1.bf16.msra.mxu0 %v3076
    %3148 = vmatprep.subr.bf16.mxu0 0
    %3149 = vmatpush1.bf16.msra.mxu0 %v3077
    %3150 = vmatprep.subr.bf16.mxu0 0
    %3151 = vmatpush1.bf16.msra.mxu0 %v3078
    %3152 = vmatprep.subr.bf16.mxu0 0
    %3153 = vmatpush1.bf16.msra.mxu0 0
    %3154 = vmatprep.subr.bf16.mxu0 0
    %3155 = vmatpush1.bf16.msra.mxu0 0
    %3156 = vmatprep.subr.bf16.mxu0 0
    %3157 = vmatpush1.bf16.msra.mxu0 0
    %3158 = vmatprep.subr.bf16.mxu0 0
    %3159 = vmatpush1.bf16.msra.mxu0 0
    %3160 = vmatprep.subr.bf16.mxu0 0
    %3161 = vmatpush1.bf16.msra.mxu0 0
    %3162 = vmatprep.subr.bf16.mxu0 0
    %3163 = vmatpush1.bf16.msra.mxu0 0
    %3164 = vmatprep.subr.bf16.mxu0 0
    %3165 = vmatpush1.bf16.msra.mxu0 0
    %3166 = vmatprep.subr.bf16.mxu0 0
    %3167 = vmatpush1.bf16.msra.mxu0 0
    %3168 = vmatprep.mubr.bf16.mxu0 0
    %3169 = vmatmul.mubr.bf16.gmra.mrb[0].mxu0 %v3014
    %v3170 = vpop.f32.mrb[0].mxu0
    %v3171 = vadd.f32 %v3037, %v3170
    %v3172 = vpop.f32.mrb[0].mxu0
    %v3173 = vpop.f32.mrb[0].mxu0
    %v3174 = vadd.f32 %v3037, %v3173
    %v3175 = vpop.f32.mrb[0].mxu0
    %3176 = vmatprep.mubr.bf16.mxu0 0
    %3177 = vmatmul.mubr.bf16.gmra.mrb[0].mxu0 %v3015
    %v3178 = vpop.f32.mrb[0].mxu0
    %v3179 = vadd.f32 %v3037, %v3178
    %v3180 = vpop.f32.mrb[0].mxu0
    %v3181 = vpop.f32.mrb[0].mxu0
    %v3182 = vadd.f32 %v3037, %v3181
    %v3183 = vpop.f32.mrb[0].mxu0
    %3184 = vdwg.mxu0
    %3185 = vst [vmem:[#allocation31] sm:$0xff] %v3122
    %3186 = vst [vmem:[#allocation31 + $0x8] sm:$0xff] %v3125
    %3187 = vst [vmem:[#allocation31 + $0x10] sm:$0xff] %v3130
    %3188 = vst [vmem:[#allocation31 + $0x18] sm:$0xff] %v3133
    %3189 = vst [vmem:[#allocation31 + $0x20] sm:$0xff] %v3171
    %3190 = vst [vmem:[#allocation31 + $0x28] sm:$0xff] %v3174
    %3191 = vst [vmem:[#allocation31 + $0x30] sm:$0xff] %v3179
    %3192 = vst [vmem:[#allocation31 + $0x38] sm:$0xff] %v3182
    // Predicated region
    $region158: #{tpu_custom_call.1} parent=1 // pred_check
      _
    $region159: #{tpu_custom_call.1} parent=1 // pred_check_branch
      %3194 = sbr.rel (0) target = $region161
    $region160: #{tpu_custom_call.1} parent=1 // pred_region
      %s3196 = ssub.s32 1024, 1024
      %3197 = vsyncadd [#allocation4], %s3196
      %s3198 = sshll.u32 [#allocation31], 4
      %s3199 = int_to_ptr.vmem [resolvable:$true] %s3198
      %3204 = dma.vmem_to_hbm [thread:$0]  %s3199, 1024, %s21, [#allocation4], 128, 128, 8
    $region161: #{tpu_custom_call.1} parent=1 // pred_fallthru
      _
    // Predicated region
    $region162: #{tpu_custom_call.1} parent=1 // pred_check
      _
    $region163: #{tpu_custom_call.1} parent=1 // pred_check_branch
      %3206 = sbr.rel (0) target = $region165
    $region164: #{tpu_custom_call.1} parent=1 // pred_region
      %3207 = dma.done [#allocation4], 1024
    $region165: #{tpu_custom_call.1} parent=1 // pred_fallthru
      _
    %3208 = vsyncpa [#allocation3], 1
    %3209 = vsyncpa [#allocation6], 1
    %3210 = vsyncpa [#allocation9], 1
    %3211 = vsyncpa [#allocation12], 1
    %3212 = vsyncpa [#allocation15], 1
    %3213 = vsyncpa [#allocation18], 1
    %3214 = vsyncpa [#allocation21], 1
    %3215 = vsyncpa [#allocation24], 1
    %3216 = vsyncpa [#allocation27], 1
    %3217 = vsyncpa [#allocation30], 1
    %3218 = vsyncpa [#allocation4], 1

</llo_original>
